<compile_context>
chip_gen: v7x
topology: tpu7x:2x2x1
jax: 0.10.0
libtpu: 0.0.40
codegen_flags: <defaults>
</compile_context>

<pallas_src>
import functools

import jax
import jax.numpy as jnp
from jax.experimental import pallas as pl
from jax.experimental.pallas import tpu as pltpu

NEG_SLOPE = 0.2  # nn.LeakyReLU(negative_slope=0.2)


def _snconv_fused_kernel(x_ref, w_ref, b_ref, o_ref, acc_ref, *, K, stride, act):
    # x_ref  : (1, Hp, Wp, Ci)      f32  padded image (resident across row blocks)
    # w_ref  : (K*K, Ci, Co_pad)    bf16 spectral-normalized weight, tap-major
    # b_ref  : (1, Co_pad)          f32  bias (zero-padded channels)
    # o_ref  : (1, TR, Wo, Co_pad)  f32  output row-block (lane-dense last dim)
    # acc_ref: (TR*Wo, Co_pad)      f32  VMEM accumulator scratch
    _, TR, Wo, Co_pad = o_ref.shape
    Ci = x_ref.shape[3]
    row0 = pl.program_id(1) * (TR * stride)

    acc_ref[...] = jnp.zeros_like(acc_ref)
    for kh in range(K):                       # K*K static taps, unrolled
        for kw in range(K):
            if stride == 1:
                win = x_ref[:, pl.ds(row0 + kh, TR), pl.ds(kw, Wo), :]
            else:
                win = x_ref[:, pl.ds(row0 + kh, TR, stride=stride),
                            pl.ds(kw, Wo, stride=stride), :]
            # (1, TR, Wo, Ci) -> (TR*Wo, Ci); Wo is a multiple of 8 here so the
            # collapse is layout-trivial.
            lhs = win.reshape(TR * Wo, Ci).astype(jnp.bfloat16)
            acc_ref[...] += jnp.dot(lhs, w_ref[kh * K + kw],
                                    preferred_element_type=jnp.float32)

    res = acc_ref[...] + b_ref[...]
    if act:
        res = jnp.where(res > 0, res, NEG_SLOPE * res)
    o_ref[...] = res.reshape(1, TR, Wo, Co_pad).astype(o_ref.dtype)


def spectral_norm_weight(w_orig, u, eps=1e-12):
    """One PyTorch-style power-iteration step; returns w_orig / sigma."""
    co = w_orig.shape[0]
    w_mat = w_orig.reshape(co, -1)
    # F.normalize semantics: divide by max(norm, eps).
    v = w_mat.T @ u
    v = v / jnp.maximum(jnp.linalg.norm(v), eps)
    u_new = w_mat @ v
    u_new = u_new / jnp.maximum(jnp.linalg.norm(u_new), eps)
    sigma = u_new @ (w_mat @ v)
    return w_orig / sigma


def _round_up(x, m):
    return ((x + m - 1) // m) * m


def snconv_forward(x_nchw, w_orig, bias, u, *, kernel, stride, padding,
                   act=True, rows_per_block=None):
    """Equivalent of SNConv.forward(x, act)."""
    w_sn = spectral_norm_weight(w_orig, u)                    # (Co, Ci, K, K)
    Co, Ci, K, _ = w_sn.shape
    N, _, H, W = x_nchw.shape

    Ho = (H + 2 * padding - K) // stride + 1
    Wo = (W + 2 * padding - K) // stride + 1

    # Lane-dense output channels.
    Co_pad = _round_up(Co, 128)
    # TODO(synk): for Co >> 128 (and very large Ci) add Co / contraction grid
    # axes with a pl.when-initialized accumulator instead of one resident block.

    # Tap-major weight (K*K, Ci, Co_pad) in bf16; tap order (kh, kw) matches
    # the in-kernel loop, channel order matches NHWC.
    w_taps = jnp.transpose(w_sn, (2, 3, 1, 0)).reshape(K * K, Ci, Co)
    w_taps = jnp.pad(w_taps, ((0, 0), (0, 0), (0, Co_pad - Co)))
    w_taps = w_taps.astype(jnp.bfloat16)
    b_pad = jnp.pad(bias, (0, Co_pad - Co)).reshape(1, Co_pad).astype(jnp.float32)

    # Output rows per grid step: aim for ~512 GEMM rows per step.
    if rows_per_block is None:
        rows_per_block = min(Ho, max(1, 512 // max(Wo, 1)))
    TR = rows_per_block
    n_rb = -(-Ho // TR)                     # cdiv
    Ho_pad = n_rb * TR

    # Padded NHWC input.  Spatial zero padding covers both the conv padding and
    # the rounded-up output rows, so in-kernel slices never leave the block.
    # TODO(synk): store activations NHWC upstream to drop this transpose.
    Hp = max((Ho_pad - 1) * stride + K, H + 2 * padding)
    Wp = W + 2 * padding
    x_nhwc = jnp.transpose(x_nchw, (0, 2, 3, 1)).astype(jnp.float32)
    x_pad = jnp.pad(x_nhwc, ((0, 0),
                             (padding, Hp - H - padding),
                             (padding, padding),
                             (0, 0)))

    kernel_fn = functools.partial(_snconv_fused_kernel,
                                  K=K, stride=stride, act=act)
    out = pl.pallas_call(
        kernel_fn,
        out_shape=jax.ShapeDtypeStruct((N, Ho_pad, Wo, Co_pad), jnp.float32),
        grid_spec=pltpu.PrefetchScalarGridSpec(
            num_scalar_prefetch=0,
            grid=(N, n_rb),
            in_specs=[
                # Full padded image; index_map ignores the row-block axis so the
                # block stays resident (fetched once per image, reused per row
                # block).
                pl.BlockSpec((1, Hp, Wp, Ci), lambda n, r: (n, 0, 0, 0)),
                # Invariant weight / bias blocks (constant index maps).
                pl.BlockSpec((K * K, Ci, Co_pad), lambda n, r: (0, 0, 0)),
                pl.BlockSpec((1, Co_pad), lambda n, r: (0, 0)),
            ],
            out_specs=pl.BlockSpec((1, TR, Wo, Co_pad),
                                   lambda n, r: (n, r, 0, 0)),
            scratch_shapes=[pltpu.VMEM((TR * Wo, Co_pad), jnp.float32)],
        ),
        compiler_params=pltpu.CompilerParams(
            dimension_semantics=("parallel", "parallel"),
            vmem_limit_bytes=40 * 1024 * 1024),   # fits v7x's 64 MiB VMEM too
    )(x_pad, w_taps, b_pad)

    out = out[:, :Ho, :, :Co]                                 # drop padding
    return jnp.transpose(out, (0, 3, 1, 2))                   # back to NCHW


if __name__ == "__main__":
    key = jax.random.PRNGKey(0)
    k1, k2, k3 = jax.random.split(key, 3)

    # SNConv(in_ch=4, out_ch=8, kernel=3, stride=1, padding=1)
    N, Ci, H, W = 2, 4, 16, 16
    Co, K, stride, pad = 8, 3, 1, 1

    x = jax.random.normal(k1, (N, Ci, H, W), jnp.float32)
    w_orig = jax.random.normal(k2, (Co, Ci, K, K), jnp.float32) * 0.1
    bias = jnp.zeros((Co,), jnp.float32)          # nn.init.constant_(bias, 0)
    u = jax.random.normal(k3, (Co,), jnp.float32)
    u = u / jnp.maximum(jnp.linalg.norm(u), 1e-12)  # spectral_norm's u vector

    y = snconv_forward(x, w_orig, bias, u,
                       kernel=K, stride=stride, padding=pad, act=True)
    y = jax.block_until_ready(y)

    # Plain-JAX f32 reference for the same forward pass.
    w_sn = spectral_norm_weight(w_orig, u)
    y_conv = jax.lax.conv_general_dilated(
        x, w_sn, (stride, stride), [(pad, pad), (pad, pad)],
        dimension_numbers=("NCHW", "OIHW", "NCHW")) + bias[None, :, None, None]
    y_act = jnp.where(y_conv > 0, y_conv, NEG_SLOPE * y_conv)

    assert y.shape == (N, Co, H, W)
    # bf16 MXU operands (f32 accumulation) -> loosened tolerance vs f32 ref.
    err = float(jnp.max(jnp.abs(y - y_act)))
    assert jnp.allclose(y, y_act, atol=5e-2, rtol=5e-2), err

    # Also exercise the act=False path of SNConv.forward.
    y_noact = snconv_forward(x, w_orig, bias, u,
                             kernel=K, stride=stride, padding=pad, act=False)
    y_noact = jax.block_until_ready(y_noact)
    assert jnp.allclose(y_noact, y_conv, atol=5e-2, rtol=5e-2)

    print("KERNEL_OK")
</pallas_src>

<mosaic_0001>
module attributes {stable_mosaic.version = 11 : i64} {
  func.func @_snconv_fused_kernel(%arg0: i32, %arg1: i32, %arg2: memref<1x18x18x4xf32, #tpu.memory_space<vmem>>, %arg3: memref<9x4x128xbf16, #tpu.memory_space<vmem>>, %arg4: memref<1x128xf32, #tpu.memory_space<vmem>>, %arg5: memref<1x16x16x128xf32, #tpu.memory_space<vmem>>, %arg6: memref<256x128xf32, #tpu.memory_space<vmem>>) attributes {dimension_semantics = [#tpu.dimension_semantics<parallel>, #tpu.dimension_semantics<parallel>], iteration_bounds = array<i64: 2, 1>, scalar_prefetch = 0 : i64, scratch_operands = 1 : i64, tpu.core_type = #tpu.core_type<tc>, window_params = [{transform_indices = @transform_0, window_bounds = array<i64: 1, 18, 18, 4>}, {pipeline_mode = #tpu.pipeline_mode<synchronous>, transform_indices = @transform_1, window_bounds = array<i64: 9, 4, 128>}, {pipeline_mode = #tpu.pipeline_mode<synchronous>, transform_indices = @transform_2, window_bounds = array<i64: 1, 128>}, {transform_indices = @transform_3, window_bounds = array<i64: 1, 16, 16, 128>}]} {
    %c16_i32 = arith.constant 16 : i32
    %0 = arith.muli %arg1, %c16_i32 : i32
    %cst = arith.constant 0.000000e+00 : f32
    %1 = vector.broadcast %cst : f32 to vector<256x128xf32>
    %c0 = arith.constant 0 : index
    %c0_0 = arith.constant 0 : index
    %2 = vector.load %arg6[%c0, %c0_0] : memref<256x128xf32, #tpu.memory_space<vmem>>, vector<256x128xf32>
    tpu.vector_store %arg6[%c0, %c0_0], %1 {strides = array<i32>} : memref<256x128xf32, #tpu.memory_space<vmem>>, vector<256x128xf32>,
    %c0_i32 = arith.constant 0 : i32
    %3 = arith.addi %0, %c0_i32 : i32
    %c0_1 = arith.constant 0 : index
    %4 = arith.index_cast %3 : i32 to index
    %c0_2 = arith.constant 0 : index
    %c0_3 = arith.constant 0 : index
    %5 = vector.load %arg2[%c0_1, %4, %c0_2, %c0_3] : memref<1x18x18x4xf32, #tpu.memory_space<vmem>>, vector<1x16x16x4xf32>
    %6 = vector.shape_cast %5 : vector<1x16x16x4xf32> to vector<256x4xf32>
    %7 = arith.truncf %6 : vector<256x4xf32> to vector<256x4xbf16>
    %c0_4 = arith.constant 0 : index
    %c0_5 = arith.constant 0 : index
    %8 = vector.load %arg6[%c0_4, %c0_5] : memref<256x128xf32, #tpu.memory_space<vmem>>, vector<256x128xf32>
    %c0_6 = arith.constant 0 : index
    %c0_7 = arith.constant 0 : index
    %c0_8 = arith.constant 0 : index
    %9 = vector.load %arg3[%c0_6, %c0_7, %c0_8] : memref<9x4x128xbf16, #tpu.memory_space<vmem>>, vector<1x4x128xbf16>
    %10 = vector.shape_cast %9 : vector<1x4x128xbf16> to vector<4x128xbf16>
    %cst_9 = arith.constant dense<0.000000e+00> : vector<256x128xf32>
    %11 = tpu.matmul %7, %10, %cst_9 {dimension_numbers = #tpu.dot_dimension_numbers<[1], [0], [0], [1], [0, 0, 1, 1], [], []>} : vector<256x4xbf16>, vector<4x128xbf16>, vector<256x128xf32> -> vector<256x128xf32>
    %12 = arith.addf %8, %11 : vector<256x128xf32>
    %c0_10 = arith.constant 0 : index
    %c0_11 = arith.constant 0 : index
    %13 = vector.load %arg6[%c0_10, %c0_11] : memref<256x128xf32, #tpu.memory_space<vmem>>, vector<256x128xf32>
    tpu.vector_store %arg6[%c0_10, %c0_11], %12 {strides = array<i32>} : memref<256x128xf32, #tpu.memory_space<vmem>>, vector<256x128xf32>,
    %c0_i32_12 = arith.constant 0 : i32
    %14 = arith.addi %0, %c0_i32_12 : i32
    %c0_13 = arith.constant 0 : index
    %15 = arith.index_cast %14 : i32 to index
    %c1 = arith.constant 1 : index
    %c0_14 = arith.constant 0 : index
    %16 = vector.load %arg2[%c0_13, %15, %c1, %c0_14] : memref<1x18x18x4xf32, #tpu.memory_space<vmem>>, vector<1x16x16x4xf32>
    %17 = vector.shape_cast %16 : vector<1x16x16x4xf32> to vector<256x4xf32>
    %18 = arith.truncf %17 : vector<256x4xf32> to vector<256x4xbf16>
    %c0_15 = arith.constant 0 : index
    %c0_16 = arith.constant 0 : index
    %19 = vector.load %arg6[%c0_15, %c0_16] : memref<256x128xf32, #tpu.memory_space<vmem>>, vector<256x128xf32>
    %c1_17 = arith.constant 1 : index
    %c0_18 = arith.constant 0 : index
    %c0_19 = arith.constant 0 : index
    %20 = vector.load %arg3[%c1_17, %c0_18, %c0_19] : memref<9x4x128xbf16, #tpu.memory_space<vmem>>, vector<1x4x128xbf16>
    %21 = vector.shape_cast %20 : vector<1x4x128xbf16> to vector<4x128xbf16>
    %cst_20 = arith.constant dense<0.000000e+00> : vector<256x128xf32>
    %22 = tpu.matmul %18, %21, %cst_20 {dimension_numbers = #tpu.dot_dimension_numbers<[1], [0], [0], [1], [0, 0, 1, 1], [], []>} : vector<256x4xbf16>, vector<4x128xbf16>, vector<256x128xf32> -> vector<256x128xf32>
    %23 = arith.addf %19, %22 : vector<256x128xf32>
    %c0_21 = arith.constant 0 : index
    %c0_22 = arith.constant 0 : index
    %24 = vector.load %arg6[%c0_21, %c0_22] : memref<256x128xf32, #tpu.memory_space<vmem>>, vector<256x128xf32>
    tpu.vector_store %arg6[%c0_21, %c0_22], %23 {strides = array<i32>} : memref<256x128xf32, #tpu.memory_space<vmem>>, vector<256x128xf32>,
    %c0_i32_23 = arith.constant 0 : i32
    %25 = arith.addi %0, %c0_i32_23 : i32
    %c0_24 = arith.constant 0 : index
    %26 = arith.index_cast %25 : i32 to index
    %c2 = arith.constant 2 : index
    %c0_25 = arith.constant 0 : index
    %27 = vector.load %arg2[%c0_24, %26, %c2, %c0_25] : memref<1x18x18x4xf32, #tpu.memory_space<vmem>>, vector<1x16x16x4xf32>
    %28 = vector.shape_cast %27 : vector<1x16x16x4xf32> to vector<256x4xf32>
    %29 = arith.truncf %28 : vector<256x4xf32> to vector<256x4xbf16>
    %c0_26 = arith.constant 0 : index
    %c0_27 = arith.constant 0 : index
    %30 = vector.load %arg6[%c0_26, %c0_27] : memref<256x128xf32, #tpu.memory_space<vmem>>, vector<256x128xf32>
    %c2_28 = arith.constant 2 : index
    %c0_29 = arith.constant 0 : index
    %c0_30 = arith.constant 0 : index
    %31 = vector.load %arg3[%c2_28, %c0_29, %c0_30] : memref<9x4x128xbf16, #tpu.memory_space<vmem>>, vector<1x4x128xbf16>
    %32 = vector.shape_cast %31 : vector<1x4x128xbf16> to vector<4x128xbf16>
    %cst_31 = arith.constant dense<0.000000e+00> : vector<256x128xf32>
    %33 = tpu.matmul %29, %32, %cst_31 {dimension_numbers = #tpu.dot_dimension_numbers<[1], [0], [0], [1], [0, 0, 1, 1], [], []>} : vector<256x4xbf16>, vector<4x128xbf16>, vector<256x128xf32> -> vector<256x128xf32>
    %34 = arith.addf %30, %33 : vector<256x128xf32>
    %c0_32 = arith.constant 0 : index
    %c0_33 = arith.constant 0 : index
    %35 = vector.load %arg6[%c0_32, %c0_33] : memref<256x128xf32, #tpu.memory_space<vmem>>, vector<256x128xf32>
    tpu.vector_store %arg6[%c0_32, %c0_33], %34 {strides = array<i32>} : memref<256x128xf32, #tpu.memory_space<vmem>>, vector<256x128xf32>,
    %c1_i32 = arith.constant 1 : i32
    %36 = arith.addi %0, %c1_i32 : i32
    %c0_34 = arith.constant 0 : index
    %37 = arith.index_cast %36 : i32 to index
    %c0_35 = arith.constant 0 : index
    %c0_36 = arith.constant 0 : index
    %38 = vector.load %arg2[%c0_34, %37, %c0_35, %c0_36] : memref<1x18x18x4xf32, #tpu.memory_space<vmem>>, vector<1x16x16x4xf32>
    %39 = vector.shape_cast %38 : vector<1x16x16x4xf32> to vector<256x4xf32>
    %40 = arith.truncf %39 : vector<256x4xf32> to vector<256x4xbf16>
    %c0_37 = arith.constant 0 : index
    %c0_38 = arith.constant 0 : index
    %41 = vector.load %arg6[%c0_37, %c0_38] : memref<256x128xf32, #tpu.memory_space<vmem>>, vector<256x128xf32>
    %c3 = arith.constant 3 : index
    %c0_39 = arith.constant 0 : index
    %c0_40 = arith.constant 0 : index
    %42 = vector.load %arg3[%c3, %c0_39, %c0_40] : memref<9x4x128xbf16, #tpu.memory_space<vmem>>, vector<1x4x128xbf16>
    %43 = vector.shape_cast %42 : vector<1x4x128xbf16> to vector<4x128xbf16>
    %cst_41 = arith.constant dense<0.000000e+00> : vector<256x128xf32>
    %44 = tpu.matmul %40, %43, %cst_41 {dimension_numbers = #tpu.dot_dimension_numbers<[1], [0], [0], [1], [0, 0, 1, 1], [], []>} : vector<256x4xbf16>, vector<4x128xbf16>, vector<256x128xf32> -> vector<256x128xf32>
    %45 = arith.addf %41, %44 : vector<256x128xf32>
    %c0_42 = arith.constant 0 : index
    %c0_43 = arith.constant 0 : index
    %46 = vector.load %arg6[%c0_42, %c0_43] : memref<256x128xf32, #tpu.memory_space<vmem>>, vector<256x128xf32>
    tpu.vector_store %arg6[%c0_42, %c0_43], %45 {strides = array<i32>} : memref<256x128xf32, #tpu.memory_space<vmem>>, vector<256x128xf32>,
    %c1_i32_44 = arith.constant 1 : i32
    %47 = arith.addi %0, %c1_i32_44 : i32
    %c0_45 = arith.constant 0 : index
    %48 = arith.index_cast %47 : i32 to index
    %c1_46 = arith.constant 1 : index
    %c0_47 = arith.constant 0 : index
    %49 = vector.load %arg2[%c0_45, %48, %c1_46, %c0_47] : memref<1x18x18x4xf32, #tpu.memory_space<vmem>>, vector<1x16x16x4xf32>
    %50 = vector.shape_cast %49 : vector<1x16x16x4xf32> to vector<256x4xf32>
    %51 = arith.truncf %50 : vector<256x4xf32> to vector<256x4xbf16>
    %c0_48 = arith.constant 0 : index
    %c0_49 = arith.constant 0 : index
    %52 = vector.load %arg6[%c0_48, %c0_49] : memref<256x128xf32, #tpu.memory_space<vmem>>, vector<256x128xf32>
    %c4 = arith.constant 4 : index
    %c0_50 = arith.constant 0 : index
    %c0_51 = arith.constant 0 : index
    %53 = vector.load %arg3[%c4, %c0_50, %c0_51] : memref<9x4x128xbf16, #tpu.memory_space<vmem>>, vector<1x4x128xbf16>
    %54 = vector.shape_cast %53 : vector<1x4x128xbf16> to vector<4x128xbf16>
    %cst_52 = arith.constant dense<0.000000e+00> : vector<256x128xf32>
    %55 = tpu.matmul %51, %54, %cst_52 {dimension_numbers = #tpu.dot_dimension_numbers<[1], [0], [0], [1], [0, 0, 1, 1], [], []>} : vector<256x4xbf16>, vector<4x128xbf16>, vector<256x128xf32> -> vector<256x128xf32>
    %56 = arith.addf %52, %55 : vector<256x128xf32>
    %c0_53 = arith.constant 0 : index
    %c0_54 = arith.constant 0 : index
    %57 = vector.load %arg6[%c0_53, %c0_54] : memref<256x128xf32, #tpu.memory_space<vmem>>, vector<256x128xf32>
    tpu.vector_store %arg6[%c0_53, %c0_54], %56 {strides = array<i32>} : memref<256x128xf32, #tpu.memory_space<vmem>>, vector<256x128xf32>,
    %c1_i32_55 = arith.constant 1 : i32
    %58 = arith.addi %0, %c1_i32_55 : i32
    %c0_56 = arith.constant 0 : index
    %59 = arith.index_cast %58 : i32 to index
    %c2_57 = arith.constant 2 : index
    %c0_58 = arith.constant 0 : index
    %60 = vector.load %arg2[%c0_56, %59, %c2_57, %c0_58] : memref<1x18x18x4xf32, #tpu.memory_space<vmem>>, vector<1x16x16x4xf32>
    %61 = vector.shape_cast %60 : vector<1x16x16x4xf32> to vector<256x4xf32>
    %62 = arith.truncf %61 : vector<256x4xf32> to vector<256x4xbf16>
    %c0_59 = arith.constant 0 : index
    %c0_60 = arith.constant 0 : index
    %63 = vector.load %arg6[%c0_59, %c0_60] : memref<256x128xf32, #tpu.memory_space<vmem>>, vector<256x128xf32>
    %c5 = arith.constant 5 : index
    %c0_61 = arith.constant 0 : index
    %c0_62 = arith.constant 0 : index
    %64 = vector.load %arg3[%c5, %c0_61, %c0_62] : memref<9x4x128xbf16, #tpu.memory_space<vmem>>, vector<1x4x128xbf16>
    %65 = vector.shape_cast %64 : vector<1x4x128xbf16> to vector<4x128xbf16>
    %cst_63 = arith.constant dense<0.000000e+00> : vector<256x128xf32>
    %66 = tpu.matmul %62, %65, %cst_63 {dimension_numbers = #tpu.dot_dimension_numbers<[1], [0], [0], [1], [0, 0, 1, 1], [], []>} : vector<256x4xbf16>, vector<4x128xbf16>, vector<256x128xf32> -> vector<256x128xf32>
    %67 = arith.addf %63, %66 : vector<256x128xf32>
    %c0_64 = arith.constant 0 : index
    %c0_65 = arith.constant 0 : index
    %68 = vector.load %arg6[%c0_64, %c0_65] : memref<256x128xf32, #tpu.memory_space<vmem>>, vector<256x128xf32>
    tpu.vector_store %arg6[%c0_64, %c0_65], %67 {strides = array<i32>} : memref<256x128xf32, #tpu.memory_space<vmem>>, vector<256x128xf32>,
    %c2_i32 = arith.constant 2 : i32
    %69 = arith.addi %0, %c2_i32 : i32
    %c0_66 = arith.constant 0 : index
    %70 = arith.index_cast %69 : i32 to index
    %c0_67 = arith.constant 0 : index
    %c0_68 = arith.constant 0 : index
    %71 = vector.load %arg2[%c0_66, %70, %c0_67, %c0_68] : memref<1x18x18x4xf32, #tpu.memory_space<vmem>>, vector<1x16x16x4xf32>
    %72 = vector.shape_cast %71 : vector<1x16x16x4xf32> to vector<256x4xf32>
    %73 = arith.truncf %72 : vector<256x4xf32> to vector<256x4xbf16>
    %c0_69 = arith.constant 0 : index
    %c0_70 = arith.constant 0 : index
    %74 = vector.load %arg6[%c0_69, %c0_70] : memref<256x128xf32, #tpu.memory_space<vmem>>, vector<256x128xf32>
    %c6 = arith.constant 6 : index
    %c0_71 = arith.constant 0 : index
    %c0_72 = arith.constant 0 : index
    %75 = vector.load %arg3[%c6, %c0_71, %c0_72] : memref<9x4x128xbf16, #tpu.memory_space<vmem>>, vector<1x4x128xbf16>
    %76 = vector.shape_cast %75 : vector<1x4x128xbf16> to vector<4x128xbf16>
    %cst_73 = arith.constant dense<0.000000e+00> : vector<256x128xf32>
    %77 = tpu.matmul %73, %76, %cst_73 {dimension_numbers = #tpu.dot_dimension_numbers<[1], [0], [0], [1], [0, 0, 1, 1], [], []>} : vector<256x4xbf16>, vector<4x128xbf16>, vector<256x128xf32> -> vector<256x128xf32>
    %78 = arith.addf %74, %77 : vector<256x128xf32>
    %c0_74 = arith.constant 0 : index
    %c0_75 = arith.constant 0 : index
    %79 = vector.load %arg6[%c0_74, %c0_75] : memref<256x128xf32, #tpu.memory_space<vmem>>, vector<256x128xf32>
    tpu.vector_store %arg6[%c0_74, %c0_75], %78 {strides = array<i32>} : memref<256x128xf32, #tpu.memory_space<vmem>>, vector<256x128xf32>,
    %c2_i32_76 = arith.constant 2 : i32
    %80 = arith.addi %0, %c2_i32_76 : i32
    %c0_77 = arith.constant 0 : index
    %81 = arith.index_cast %80 : i32 to index
    %c1_78 = arith.constant 1 : index
    %c0_79 = arith.constant 0 : index
    %82 = vector.load %arg2[%c0_77, %81, %c1_78, %c0_79] : memref<1x18x18x4xf32, #tpu.memory_space<vmem>>, vector<1x16x16x4xf32>
    %83 = vector.shape_cast %82 : vector<1x16x16x4xf32> to vector<256x4xf32>
    %84 = arith.truncf %83 : vector<256x4xf32> to vector<256x4xbf16>
    %c0_80 = arith.constant 0 : index
    %c0_81 = arith.constant 0 : index
    %85 = vector.load %arg6[%c0_80, %c0_81] : memref<256x128xf32, #tpu.memory_space<vmem>>, vector<256x128xf32>
    %c7 = arith.constant 7 : index
    %c0_82 = arith.constant 0 : index
    %c0_83 = arith.constant 0 : index
    %86 = vector.load %arg3[%c7, %c0_82, %c0_83] : memref<9x4x128xbf16, #tpu.memory_space<vmem>>, vector<1x4x128xbf16>
    %87 = vector.shape_cast %86 : vector<1x4x128xbf16> to vector<4x128xbf16>
    %cst_84 = arith.constant dense<0.000000e+00> : vector<256x128xf32>
    %88 = tpu.matmul %84, %87, %cst_84 {dimension_numbers = #tpu.dot_dimension_numbers<[1], [0], [0], [1], [0, 0, 1, 1], [], []>} : vector<256x4xbf16>, vector<4x128xbf16>, vector<256x128xf32> -> vector<256x128xf32>
    %89 = arith.addf %85, %88 : vector<256x128xf32>
    %c0_85 = arith.constant 0 : index
    %c0_86 = arith.constant 0 : index
    %90 = vector.load %arg6[%c0_85, %c0_86] : memref<256x128xf32, #tpu.memory_space<vmem>>, vector<256x128xf32>
    tpu.vector_store %arg6[%c0_85, %c0_86], %89 {strides = array<i32>} : memref<256x128xf32, #tpu.memory_space<vmem>>, vector<256x128xf32>,
    %c2_i32_87 = arith.constant 2 : i32
    %91 = arith.addi %0, %c2_i32_87 : i32
    %c0_88 = arith.constant 0 : index
    %92 = arith.index_cast %91 : i32 to index
    %c2_89 = arith.constant 2 : index
    %c0_90 = arith.constant 0 : index
    %93 = vector.load %arg2[%c0_88, %92, %c2_89, %c0_90] : memref<1x18x18x4xf32, #tpu.memory_space<vmem>>, vector<1x16x16x4xf32>
    %94 = vector.shape_cast %93 : vector<1x16x16x4xf32> to vector<256x4xf32>
    %95 = arith.truncf %94 : vector<256x4xf32> to vector<256x4xbf16>
    %c0_91 = arith.constant 0 : index
    %c0_92 = arith.constant 0 : index
    %96 = vector.load %arg6[%c0_91, %c0_92] : memref<256x128xf32, #tpu.memory_space<vmem>>, vector<256x128xf32>
    %c8 = arith.constant 8 : index
    %c0_93 = arith.constant 0 : index
    %c0_94 = arith.constant 0 : index
    %97 = vector.load %arg3[%c8, %c0_93, %c0_94] : memref<9x4x128xbf16, #tpu.memory_space<vmem>>, vector<1x4x128xbf16>
    %98 = vector.shape_cast %97 : vector<1x4x128xbf16> to vector<4x128xbf16>
    %cst_95 = arith.constant dense<0.000000e+00> : vector<256x128xf32>
    %99 = tpu.matmul %95, %98, %cst_95 {dimension_numbers = #tpu.dot_dimension_numbers<[1], [0], [0], [1], [0, 0, 1, 1], [], []>} : vector<256x4xbf16>, vector<4x128xbf16>, vector<256x128xf32> -> vector<256x128xf32>
    %100 = arith.addf %96, %99 : vector<256x128xf32>
    %c0_96 = arith.constant 0 : index
    %c0_97 = arith.constant 0 : index
    %101 = vector.load %arg6[%c0_96, %c0_97] : memref<256x128xf32, #tpu.memory_space<vmem>>, vector<256x128xf32>
    tpu.vector_store %arg6[%c0_96, %c0_97], %100 {strides = array<i32>} : memref<256x128xf32, #tpu.memory_space<vmem>>, vector<256x128xf32>,
    %c0_98 = arith.constant 0 : index
    %c0_99 = arith.constant 0 : index
    %102 = vector.load %arg6[%c0_98, %c0_99] : memref<256x128xf32, #tpu.memory_space<vmem>>, vector<256x128xf32>
    %c0_100 = arith.constant 0 : index
    %c0_101 = arith.constant 0 : index
    %103 = vector.load %arg4[%c0_100, %c0_101] : memref<1x128xf32, #tpu.memory_space<vmem>>, vector<1x128xf32>
    %104 = vector.broadcast %103 : vector<1x128xf32> to vector<256x128xf32>
    %105 = arith.addf %102, %104 : vector<256x128xf32>
    %cst_102 = arith.constant 0.000000e+00 : f32
    %106 = vector.broadcast %cst_102 : f32 to vector<256x128xf32>
    %107 = arith.cmpf ogt, %105, %106 : vector<256x128xf32>
    %cst_103 = arith.constant 2.000000e-01 : f32
    %108 = vector.broadcast %cst_103 : f32 to vector<256x128xf32>
    %109 = arith.mulf %108, %105 : vector<256x128xf32>
    %110 = arith.select %107, %105, %109 : vector<256x128xi1>, vector<256x128xf32>
    %111 = vector.shape_cast %110 : vector<256x128xf32> to vector<1x16x16x128xf32>
    %c0_104 = arith.constant 0 : index
    %c0_105 = arith.constant 0 : index
    %c0_106 = arith.constant 0 : index
    %c0_107 = arith.constant 0 : index
    %112 = vector.load %arg5[%c0_104, %c0_105, %c0_106, %c0_107] : memref<1x16x16x128xf32, #tpu.memory_space<vmem>>, vector<1x16x16x128xf32>
    tpu.vector_store %arg5[%c0_104, %c0_105, %c0_106, %c0_107], %111 {strides = array<i32>} : memref<1x16x16x128xf32, #tpu.memory_space<vmem>>, vector<1x16x16x128xf32>,
    return
  }
  func.func @transform_0(%arg0: i32, %arg1: i32) -> (i32, i32, i32, i32) {
    %c0_i32 = arith.constant 0 : i32
    %c0_i32_0 = arith.constant 0 : i32
    %c0_i32_1 = arith.constant 0 : i32
    %c0_i32_2 = arith.constant 0 : i32
    return %arg0, %c0_i32, %c0_i32_0, %c0_i32_1 : i32, i32, i32, i32
  }
  func.func @transform_1(%arg0: i32, %arg1: i32) -> (i32, i32, i32) {
    %c0_i32 = arith.constant 0 : i32
    %c0_i32_0 = arith.constant 0 : i32
    %c0_i32_1 = arith.constant 0 : i32
    %c0_i32_2 = arith.constant 0 : i32
    return %c0_i32, %c0_i32_0, %c0_i32_1 : i32, i32, i32
  }
  func.func @transform_2(%arg0: i32, %arg1: i32) -> (i32, i32) {
    %c0_i32 = arith.constant 0 : i32
    %c0_i32_0 = arith.constant 0 : i32
    %c0_i32_1 = arith.constant 0 : i32
    return %c0_i32, %c0_i32_0 : i32, i32
  }
  func.func @transform_3(%arg0: i32, %arg1: i32) -> (i32, i32, i32, i32) {
    %c0_i32 = arith.constant 0 : i32
    %c0_i32_0 = arith.constant 0 : i32
    %c0_i32_1 = arith.constant 0 : i32
    return %arg0, %arg1, %c0_i32, %c0_i32_0 : i32, i32, i32, i32
  }
}

</mosaic_0001>

<llo_original>
// kernel: tpu_custom_call.1
$region0: #{tpu_custom_call.1}
  #allocation0 [shape = 'u32[]', space=smem, size = 0x4, offset = 0x4, fixed_abs, tag = 'smem constant byte address 0x4 - core index']
  #allocation1 [shape = 'u32[144,128]{1,0:T(1,128)}', space=vmem, size = 0x12000, scoped, tag = 'internal scratch']
  #allocation2 [shape = 'f32[256,128]{1,0:T(8,128)}', space=vmem, size = 0x20000, scoped, tag = 'scratch operand']
  %s0 = inlined_call_operand.vmem [shape: f32[2,18,18,4], index: 0, kind: input, shape index: {}]
  %s1 = inlined_call_operand.vmem [shape: bf16[9,4,128], index: 1, kind: input, shape index: {}]
  %s2 = inlined_call_operand.vmem [shape: f32[1,128], index: 2, kind: input, shape index: {}]
  %s3 = inlined_call_operand.hbm [shape: f32[2,16,16,128], index: 3, kind: output, shape index: {}]
  %s4 = sld [smem:[#allocation0]]
  $region45: #{tpu_custom_call.1} parent=0
    _
  %s6 = ssub.s32 1, %s4
  %s7 = scalar_select 0, %s6, %s4
  $region1: #{tpu_custom_call.1} parent=0
    #allocation3 [shape = 'u8[262144]{0}', space=vmem, size = 0x40000, scoped, tag = 'output window, operand 0']
    #allocation4 [shape = 's32[2]{0}', space=sflag, size = 0x8, scoped, tag = 'scoped memory for tpu_custom_call.1']
    %8 = vsyncpa [#allocation4], 0
    %s9 = scalar_lea.sflag [#allocation4], 1
    %10 = vsyncpa %s9, 0
    loop: start=0, step=1, limit=4
    $region2: #{tpu_custom_call.1} parent=1 // loop_pre_header
      _
    $region3: #{tpu_custom_call.1} parent=1 // loop_header
      %s12 = sphi 0, %s16
      %p13 = scmp.ge.s32.totalorder %s12, 4
      %s19 = sphi 0, %s31
      %s20 = sphi 0, %s27
      %s21 = sphi 0, %s19
      %s22 = sphi 0, %s20
      %s23 = sphi 0, %s21
      %s24 = sphi 0, %s22
      %s34 = sphi 0, %s36
      %s37 = sphi 0, %s34
      %s38 = sphi 0, %s37
      %s54 = sphi 0, %s38
      %s58 = sphi 0, %s58
      %s60 = sphi 0, %s58
      %s61 = sphi 0, %s60
      %s75 = sphi 0, %s61
      %s79 = sphi 0, %s79
      %s81 = sphi 0, %s79
      %s82 = sphi 0, %s81
      %s96 = sphi 0, %s82
      %s104 = sphi 0, %s106
      %s107 = sphi 0, %s104
      %s108 = sphi 0, %s107
      %s124 = sphi 0, %s108
    $region4: #{tpu_custom_call.1} parent=1 // loop_header_branch
      %15 = sbr.rel (%p13) target = $region8
    $region5: #{tpu_custom_call.1} parent=1 // loop_body
      %s17 = ssub.s32 %s12, 1
      %s18 = ssub.s32 %s12, 2
      %s25 = sadd.s32 1, %s20
      %p26 = scmp.ge.s32.totalorder %s25, 1
      %s27 = scalar_select %p26, 0, %s25
      %s28 = sadd.s32 1, %s19
      %s29 = scalar_select %p26, %s28, %s19
      %p30 = scmp.ge.s32.totalorder %s29, 2
      %s31 = scalar_select %p30, 0, %s29
      %s32 = ssub.s32 %s19, %s31
      %p33 = scmp.eq.s32.totalorder %s32, 0
      %s35 = sadd.s32 %s34, 1
      %s36 = scalar_select %p33, %s34, %s35
      %p39 = pneg %p33
      %p40 = scmp.eq.s32.totalorder %s12, 1
      %p41 = por %p39, %p40
      %p42 = scmp.ne.s32.totalorder %s34, %s37
      %p43 = scmp.eq.s32.totalorder %s12, 0
      %p44 = por %p42, %p43
      %p45 = scmp.ne.s32.totalorder %s34, %s37
      %p46 = scmp.eq.s32.totalorder %s17, 1
      %p47 = por %p45, %p46
      %p48 = scmp.ne.s32.totalorder %s37, %s38
      %p49 = scmp.eq.s32.totalorder %s17, 0
      %p50 = por %p48, %p49
      %p51 = scmp.ne.s32.totalorder %s37, %s38
      %p52 = scmp.eq.s32.totalorder %s18, 1
      %p53 = por %p51, %p52
      %p55 = scmp.ne.s32.totalorder %s38, %s54
      %p56 = scmp.eq.s32.totalorder %s18, 0
      %p57 = por %p55, %p56
      %s59 = sadd.s32 %s58, 1
      %p62 = scmp.eq.s32.totalorder %s12, 1
      %p63 = scmp.ne.s32.totalorder %s58, %s60
      %p64 = scmp.eq.s32.totalorder %s12, 0
      %p65 = por %p63, %p64
      %p66 = scmp.ne.s32.totalorder %s58, %s60
      %p67 = scmp.eq.s32.totalorder %s17, 1
      %p68 = por %p66, %p67
      %p69 = scmp.ne.s32.totalorder %s60, %s61
      %p70 = scmp.eq.s32.totalorder %s17, 0
      %p71 = por %p69, %p70
      %p72 = scmp.ne.s32.totalorder %s60, %s61
      %p73 = scmp.eq.s32.totalorder %s18, 1
      %p74 = por %p72, %p73
      %p76 = scmp.ne.s32.totalorder %s61, %s75
      %p77 = scmp.eq.s32.totalorder %s18, 0
      %p78 = por %p76, %p77
      %s80 = sadd.s32 %s79, 1
      %p83 = scmp.eq.s32.totalorder %s12, 1
      %p84 = scmp.ne.s32.totalorder %s79, %s81
      %p85 = scmp.eq.s32.totalorder %s12, 0
      %p86 = por %p84, %p85
      %p87 = scmp.ne.s32.totalorder %s79, %s81
      %p88 = scmp.eq.s32.totalorder %s17, 1
      %p89 = por %p87, %p88
      %p90 = scmp.ne.s32.totalorder %s81, %s82
      %p91 = scmp.eq.s32.totalorder %s17, 0
      %p92 = por %p90, %p91
      %p93 = scmp.ne.s32.totalorder %s81, %s82
      %p94 = scmp.eq.s32.totalorder %s18, 1
      %p95 = por %p93, %p94
      %p97 = scmp.ne.s32.totalorder %s82, %s96
      %p98 = scmp.eq.s32.totalorder %s18, 0
      %p99 = por %p97, %p98
      %s100 = ssub.s32 %s19, %s31
      %s101 = ssub.s32 %s20, %s27
      %s102 = sor.u32 %s100, %s101
      %p103 = scmp.eq.s32.totalorder %s102, 0
      %s105 = sadd.s32 %s104, 1
      %s106 = scalar_select %p103, %s104, %s105
      %p109 = pneg %p103
      %p110 = scmp.eq.s32.totalorder %s12, 1
      %p111 = por %p109, %p110
      %p112 = scmp.ne.s32.totalorder %s104, %s107
      %p113 = scmp.eq.s32.totalorder %s12, 0
      %p114 = por %p112, %p113
      %p115 = scmp.ne.s32.totalorder %s104, %s107
      %p116 = scmp.eq.s32.totalorder %s17, 1
      %p117 = por %p115, %p116
      %p118 = scmp.ne.s32.totalorder %s107, %s108
      %p119 = scmp.eq.s32.totalorder %s17, 0
      %p120 = por %p118, %p119
      %p121 = scmp.ne.s32.totalorder %s107, %s108
      %p122 = scmp.eq.s32.totalorder %s18, 1
      %p123 = por %p121, %p122
      %p125 = scmp.ne.s32.totalorder %s108, %s124
      %p126 = scmp.eq.s32.totalorder %s18, 0
      %p127 = por %p125, %p126
      %p128 = scmp.le.s32.totalorder 1, %s12
      %p129 = scmp.lt.s32.totalorder %s12, 3
      %p130 = pnand %p128, %p129
      %p131 = pneg %p130
      // Predicated region
      $region9: #{tpu_custom_call.1} parent=5 // pred_check
        _
      $region10: #{tpu_custom_call.1} parent=5 // pred_check_branch
        %133 = sbr.rel (%p130) target = $region12
      $region11: #{tpu_custom_call.1} parent=5 // pred_region
        %s134 = ssub.s32 %s12, 1
        // Predicated region
        $region13: #{tpu_custom_call.1} parent=11 // pred_check
          %p135 = pneg %p71
        $region14: #{tpu_custom_call.1} parent=11 // pred_check_branch
          %137 = sbr.rel (%p135) target = $region16
        $region15: #{tpu_custom_call.1} parent=11 // pred_region
          _
        $region16: #{tpu_custom_call.1} parent=11 // pred_fallthru
          _
        // Predicated region
        $region17: #{tpu_custom_call.1} parent=11 // pred_check
          %p138 = pneg %p92
        $region18: #{tpu_custom_call.1} parent=11 // pred_check_branch
          %140 = sbr.rel (%p138) target = $region20
        $region19: #{tpu_custom_call.1} parent=11 // pred_region
          _
        $region20: #{tpu_custom_call.1} parent=11 // pred_fallthru
          _
      $region12: #{tpu_custom_call.1} parent=5 // pred_fallthru
        _
      %p141 = scmp.lt.s32.totalorder %s12, 2
      // Predicated region
      $region21: #{tpu_custom_call.1} parent=5 // pred_check
        %p142 = pneg %p141
      $region22: #{tpu_custom_call.1} parent=5 // pred_check_branch
        %144 = sbr.rel (%p142) target = $region24
      $region23: #{tpu_custom_call.1} parent=5 // pred_region
        // Predicated region
        $region25: #{tpu_custom_call.1} parent=23 // pred_check
          %p145 = pneg %p44
        $region26: #{tpu_custom_call.1} parent=23 // pred_check_branch
          %147 = sbr.rel (%p145) target = $region28
        $region27: #{tpu_custom_call.1} parent=23 // pred_region
          %p148 = scmp.lt.s32.totalorder %s19, 1
          %s149 = scalar_select %p148, %s19, 1
          %s150 = smul.addr %s149, 54
          %s151 = smul.addr %s150, 8
          %s152 = scalar_lea.vmem %s0, %s151
        $region28: #{tpu_custom_call.1} parent=23 // pred_fallthru
          _
      $region24: #{tpu_custom_call.1} parent=5 // pred_fallthru
        _
      %p153 = scmp.le.s32.totalorder 1, %s12
      %p154 = scmp.lt.s32.totalorder %s12, 3
      %p155 = pnand %p153, %p154
      %p156 = pneg %p155
      // Predicated region
      $region29: #{tpu_custom_call.1} parent=5 // pred_check
        _
      $region30: #{tpu_custom_call.1} parent=5 // pred_check_branch
        %158 = sbr.rel (%p155) target = $region32
      $region31: #{tpu_custom_call.1} parent=5 // pred_region
        %s159 = ssub.s32 %s12, 1
        %p160 = scmp.lt.s32.totalorder %s21, 1
        %s161 = scalar_select %p160, %s21, 1
        %s162 = smul.addr %s161, 54
        %s163 = smul.addr %s162, 8
        %s164 = scalar_lea.vmem %s0, %s163
        %p165 = pneg %p50
        %p166 = pneg %p47
        %p167 = pneg %p71
        %p168 = pneg %p68
        %p169 = pneg %p92
        %p170 = pneg %p89
        %p171 = pneg %p120
        %p172 = pneg %p117
        %s173 = sand.u32 %s107, 1
        %s174 = scalar_lea.sflag [#allocation4], %s173
        %s175 = sand.u32 %s107, 1
        %s176 = smul.addr %s175, 256
        %s177 = scalar_lea.vmem [#allocation3], %s176
        %p178 = scmp.lt.s32.totalorder %s21, 1
        %s179 = scalar_select %p178, %s21, 1
        %s180 = smul.addr %s179, 54
        %s181 = smul.addr %s180, 8
        %s182 = scalar_lea.vmem %s0, %s181
        %s183 = smul.u32 16, %s22
        %s185 = smul.u32 %s22, 16
        %186 = vst [vmem:[#allocation2] sm:$0xff] 0.0
        %187 = vst [vmem:[#allocation2 + $0x8] sm:$0xff] 0.0
        %188 = vst [vmem:[#allocation2 + $0x10] sm:$0xff] 0.0
        %189 = vst [vmem:[#allocation2 + $0x18] sm:$0xff] 0.0
        %190 = vst [vmem:[#allocation2 + $0x20] sm:$0xff] 0.0
        %191 = vst [vmem:[#allocation2 + $0x28] sm:$0xff] 0.0
        %192 = vst [vmem:[#allocation2 + $0x30] sm:$0xff] 0.0
        %193 = vst [vmem:[#allocation2 + $0x38] sm:$0xff] 0.0
        %194 = vst [vmem:[#allocation2 + $0x40] sm:$0xff] 0.0
        %195 = vst [vmem:[#allocation2 + $0x48] sm:$0xff] 0.0
        %196 = vst [vmem:[#allocation2 + $0x50] sm:$0xff] 0.0
        %197 = vst [vmem:[#allocation2 + $0x58] sm:$0xff] 0.0
        %198 = vst [vmem:[#allocation2 + $0x60] sm:$0xff] 0.0
        %199 = vst [vmem:[#allocation2 + $0x68] sm:$0xff] 0.0
        %200 = vst [vmem:[#allocation2 + $0x70] sm:$0xff] 0.0
        %201 = vst [vmem:[#allocation2 + $0x78] sm:$0xff] 0.0
        %202 = vst [vmem:[#allocation2 + $0x80] sm:$0xff] 0.0
        %203 = vst [vmem:[#allocation2 + $0x88] sm:$0xff] 0.0
        %204 = vst [vmem:[#allocation2 + $0x90] sm:$0xff] 0.0
        %205 = vst [vmem:[#allocation2 + $0x98] sm:$0xff] 0.0
        %206 = vst [vmem:[#allocation2 + $0xa0] sm:$0xff] 0.0
        %207 = vst [vmem:[#allocation2 + $0xa8] sm:$0xff] 0.0
        %208 = vst [vmem:[#allocation2 + $0xb0] sm:$0xff] 0.0
        %209 = vst [vmem:[#allocation2 + $0xb8] sm:$0xff] 0.0
        %210 = vst [vmem:[#allocation2 + $0xc0] sm:$0xff] 0.0
        %211 = vst [vmem:[#allocation2 + $0xc8] sm:$0xff] 0.0
        %212 = vst [vmem:[#allocation2 + $0xd0] sm:$0xff] 0.0
        %213 = vst [vmem:[#allocation2 + $0xd8] sm:$0xff] 0.0
        %214 = vst [vmem:[#allocation2 + $0xe0] sm:$0xff] 0.0
        %215 = vst [vmem:[#allocation2 + $0xe8] sm:$0xff] 0.0
        %216 = vst [vmem:[#allocation2 + $0xf0] sm:$0xff] 0.0
        %217 = vst [vmem:[#allocation2 + $0xf8] sm:$0xff] 0.0
        %s218 = smul.u32 %s185, 24
        %s219 = scalar_lea.vmem %s182, %s218
        %v220 = vld [vmem:[%s219] sm:$0xff]
        %v221 = vld [vmem:[%s219 + $0x8] sm:$0xff]
        %v222 = vld [vmem:[%s219 + $0x18] sm:$0xff]
        %v223 = vld [vmem:[%s219 + $0x20] sm:$0xff]
        %v224 = vld [vmem:[%s219 + $0x30] sm:$0xff]
        %v225 = vld [vmem:[%s219 + $0x38] sm:$0xff]
        %v226 = vld [vmem:[%s219 + $0x48] sm:$0xff]
        %v227 = vld [vmem:[%s219 + $0x50] sm:$0xff]
        %v228 = vld [vmem:[%s219 + $0x60] sm:$0xff]
        %v229 = vld [vmem:[%s219 + $0x68] sm:$0xff]
        %v230 = vld [vmem:[%s219 + $0x78] sm:$0xff]
        %v231 = vld [vmem:[%s219 + $0x80] sm:$0xff]
        %v232 = vld [vmem:[%s219 + $0x90] sm:$0xff]
        %v233 = vld [vmem:[%s219 + $0x98] sm:$0xff]
        %v234 = vld [vmem:[%s219 + $0xa8] sm:$0xff]
        %v235 = vld [vmem:[%s219 + $0xb0] sm:$0xff]
        %v236 = vld [vmem:[%s219 + $0xc0] sm:$0xff]
        %v237 = vld [vmem:[%s219 + $0xc8] sm:$0xff]
        %v238 = vld [vmem:[%s219 + $0xd8] sm:$0xff]
        %v239 = vld [vmem:[%s219 + $0xe0] sm:$0xff]
        %v240 = vld [vmem:[%s219 + $0xf0] sm:$0xff]
        %v241 = vld [vmem:[%s219 + $0xf8] sm:$0xff]
        %v242 = vld [vmem:[%s219 + $0x108] sm:$0xff]
        %v243 = vld [vmem:[%s219 + $0x110] sm:$0xff]
        %v244 = vld [vmem:[%s219 + $0x120] sm:$0xff]
        %v245 = vld [vmem:[%s219 + $0x128] sm:$0xff]
        %v246 = vld [vmem:[%s219 + $0x138] sm:$0xff]
        %v247 = vld [vmem:[%s219 + $0x140] sm:$0xff]
        %v248 = vld [vmem:[%s219 + $0x150] sm:$0xff]
        %v249 = vld [vmem:[%s219 + $0x158] sm:$0xff]
        %v250 = vld [vmem:[%s219 + $0x168] sm:$0xff]
        %v251 = vld [vmem:[%s219 + $0x170] sm:$0xff]
        %v252 = vpack.c.bf16 %v221, %v220
        %v253 = vpack.c.bf16 %v223, %v222
        %v254 = vpack.c.bf16 %v225, %v224
        %v255 = vpack.c.bf16 %v227, %v226
        %v256 = vpack.c.bf16 %v229, %v228
        %v257 = vpack.c.bf16 %v231, %v230
        %v258 = vpack.c.bf16 %v233, %v232
        %v259 = vpack.c.bf16 %v235, %v234
        %v260 = vpack.c.bf16 %v237, %v236
        %v261 = vpack.c.bf16 %v239, %v238
        %v262 = vpack.c.bf16 %v241, %v240
        %v263 = vpack.c.bf16 %v243, %v242
        %v264 = vpack.c.bf16 %v245, %v244
        %v265 = vpack.c.bf16 %v247, %v246
        %v266 = vpack.c.bf16 %v249, %v248
        %v267 = vpack.c.bf16 %v251, %v250
        %v268 = vld [vmem:[#allocation2] sm:$0xff]
        %v269 = vld [vmem:[#allocation2 + $0x8] sm:$0xff]
        %v270 = vld [vmem:[#allocation2 + $0x10] sm:$0xff]
        %v271 = vld [vmem:[#allocation2 + $0x18] sm:$0xff]
        %v272 = vld [vmem:[#allocation2 + $0x20] sm:$0xff]
        %v273 = vld [vmem:[#allocation2 + $0x28] sm:$0xff]
        %v274 = vld [vmem:[#allocation2 + $0x30] sm:$0xff]
        %v275 = vld [vmem:[#allocation2 + $0x38] sm:$0xff]
        %v276 = vld [vmem:[#allocation2 + $0x40] sm:$0xff]
        %v277 = vld [vmem:[#allocation2 + $0x48] sm:$0xff]
        %v278 = vld [vmem:[#allocation2 + $0x50] sm:$0xff]
        %v279 = vld [vmem:[#allocation2 + $0x58] sm:$0xff]
        %v280 = vld [vmem:[#allocation2 + $0x60] sm:$0xff]
        %v281 = vld [vmem:[#allocation2 + $0x68] sm:$0xff]
        %v282 = vld [vmem:[#allocation2 + $0x70] sm:$0xff]
        %v283 = vld [vmem:[#allocation2 + $0x78] sm:$0xff]
        %v284 = vld [vmem:[#allocation2 + $0x80] sm:$0xff]
        %v285 = vld [vmem:[#allocation2 + $0x88] sm:$0xff]
        %v286 = vld [vmem:[#allocation2 + $0x90] sm:$0xff]
        %v287 = vld [vmem:[#allocation2 + $0x98] sm:$0xff]
        %v288 = vld [vmem:[#allocation2 + $0xa0] sm:$0xff]
        %v289 = vld [vmem:[#allocation2 + $0xa8] sm:$0xff]
        %v290 = vld [vmem:[#allocation2 + $0xb0] sm:$0xff]
        %v291 = vld [vmem:[#allocation2 + $0xb8] sm:$0xff]
        %v292 = vld [vmem:[#allocation2 + $0xc0] sm:$0xff]
        %v293 = vld [vmem:[#allocation2 + $0xc8] sm:$0xff]
        %v294 = vld [vmem:[#allocation2 + $0xd0] sm:$0xff]
        %v295 = vld [vmem:[#allocation2 + $0xd8] sm:$0xff]
        %v296 = vld [vmem:[#allocation2 + $0xe0] sm:$0xff]
        %v297 = vld [vmem:[#allocation2 + $0xe8] sm:$0xff]
        %v298 = vld [vmem:[#allocation2 + $0xf0] sm:$0xff]
        %v299 = vld [vmem:[#allocation2 + $0xf8] sm:$0xff]
        %v300 = vld [vmem:[%s1] sm:$0x3]
        %vm301 = vcmask 31744
        %v303 = vsel %vm301, %v252, 0
        %v306 = vsel %vm301, %v253, 0
        %v309 = vsel %vm301, %v254, 0
        %v312 = vsel %vm301, %v255, 0
        %v315 = vsel %vm301, %v256, 0
        %v318 = vsel %vm301, %v257, 0
        %v321 = vsel %vm301, %v258, 0
        %v324 = vsel %vm301, %v259, 0
        %v327 = vsel %vm301, %v260, 0
        %v330 = vsel %vm301, %v261, 0
        %v333 = vsel %vm301, %v262, 0
        %v336 = vsel %vm301, %v263, 0
        %v339 = vsel %vm301, %v264, 0
        %v342 = vsel %vm301, %v265, 0
        %v345 = vsel %vm301, %v266, 0
        %v348 = vsel %vm301, %v267, 0
        %vm350 = vcmask 1041408
        %v352 = vsel %vm350, %v300, 0
        %354 = vmatprep.subr.bf16.mxu0 0
        %355 = vmatpush1.bf16.msra.mxu0 %v352
        %356 = vmatprep.subr.bf16.mxu0 0
        %357 = vmatpush1.bf16.msra.mxu0 0
        %358 = vmatprep.subr.bf16.mxu0 0
        %359 = vmatpush1.bf16.msra.mxu0 0
        %360 = vmatprep.subr.bf16.mxu0 0
        %361 = vmatpush1.bf16.msra.mxu0 0
        %362 = vmatprep.subr.bf16.mxu0 0
        %363 = vmatpush1.bf16.msra.mxu0 0
        %364 = vmatprep.subr.bf16.mxu0 0
        %365 = vmatpush1.bf16.msra.mxu0 0
        %366 = vmatprep.subr.bf16.mxu0 0
        %367 = vmatpush1.bf16.msra.mxu0 0
        %368 = vmatprep.subr.bf16.mxu0 0
        %369 = vmatpush1.bf16.msra.mxu0 0
        %370 = vmatprep.subr.bf16.mxu0 0
        %371 = vmatpush1.bf16.msra.mxu0 0
        %372 = vmatprep.subr.bf16.mxu0 0
        %373 = vmatpush1.bf16.msra.mxu0 0
        %374 = vmatprep.subr.bf16.mxu0 0
        %375 = vmatpush1.bf16.msra.mxu0 0
        %376 = vmatprep.subr.bf16.mxu0 0
        %377 = vmatpush1.bf16.msra.mxu0 0
        %378 = vmatprep.subr.bf16.mxu0 0
        %379 = vmatpush1.bf16.msra.mxu0 0
        %380 = vmatprep.subr.bf16.mxu0 0
        %381 = vmatpush1.bf16.msra.mxu0 0
        %382 = vmatprep.subr.bf16.mxu0 0
        %383 = vmatpush1.bf16.msra.mxu0 0
        %384 = vmatprep.subr.bf16.mxu0 0
        %385 = vmatpush1.bf16.msra.mxu0 0
        %386 = vmatprep.mubr.bf16.mxu0 0
        %387 = vmatmul.mubr.bf16.gmra.mrb[0].mxu0 %v303
        %v388 = vpop.f32.mrb[0].mxu0
        %v389 = vadd.f32 0.0, %v388
        %v390 = vpop.f32.mrb[0].mxu0
        %v391 = vpop.f32.mrb[0].mxu0
        %v392 = vadd.f32 0.0, %v391
        %v393 = vpop.f32.mrb[0].mxu0
        %394 = vmatprep.mubr.bf16.mxu0 0
        %395 = vmatmul.mubr.bf16.gmra.mrb[0].mxu0 %v306
        %v396 = vpop.f32.mrb[0].mxu0
        %v397 = vadd.f32 0.0, %v396
        %v398 = vpop.f32.mrb[0].mxu0
        %v399 = vpop.f32.mrb[0].mxu0
        %v400 = vadd.f32 0.0, %v399
        %v401 = vpop.f32.mrb[0].mxu0
        %402 = vmatprep.mubr.bf16.mxu0 0
        %403 = vmatmul.mubr.bf16.gmra.mrb[0].mxu0 %v309
        %v404 = vpop.f32.mrb[0].mxu0
        %v405 = vadd.f32 0.0, %v404
        %v406 = vpop.f32.mrb[0].mxu0
        %v407 = vpop.f32.mrb[0].mxu0
        %v408 = vadd.f32 0.0, %v407
        %v409 = vpop.f32.mrb[0].mxu0
        %410 = vmatprep.mubr.bf16.mxu0 0
        %411 = vmatmul.mubr.bf16.gmra.mrb[0].mxu0 %v312
        %v412 = vpop.f32.mrb[0].mxu0
        %v413 = vadd.f32 0.0, %v412
        %v414 = vpop.f32.mrb[0].mxu0
        %v415 = vpop.f32.mrb[0].mxu0
        %v416 = vadd.f32 0.0, %v415
        %v417 = vpop.f32.mrb[0].mxu0
        %418 = vmatprep.mubr.bf16.mxu0 0
        %419 = vmatmul.mubr.bf16.gmra.mrb[0].mxu0 %v315
        %v420 = vpop.f32.mrb[0].mxu0
        %v421 = vadd.f32 0.0, %v420
        %v422 = vpop.f32.mrb[0].mxu0
        %v423 = vpop.f32.mrb[0].mxu0
        %v424 = vadd.f32 0.0, %v423
        %v425 = vpop.f32.mrb[0].mxu0
        %426 = vmatprep.mubr.bf16.mxu0 0
        %427 = vmatmul.mubr.bf16.gmra.mrb[0].mxu0 %v318
        %v428 = vpop.f32.mrb[0].mxu0
        %v429 = vadd.f32 0.0, %v428
        %v430 = vpop.f32.mrb[0].mxu0
        %v431 = vpop.f32.mrb[0].mxu0
        %v432 = vadd.f32 0.0, %v431
        %v433 = vpop.f32.mrb[0].mxu0
        %434 = vmatprep.mubr.bf16.mxu0 0
        %435 = vmatmul.mubr.bf16.gmra.mrb[0].mxu0 %v321
        %v436 = vpop.f32.mrb[0].mxu0
        %v437 = vadd.f32 0.0, %v436
        %v438 = vpop.f32.mrb[0].mxu0
        %v439 = vpop.f32.mrb[0].mxu0
        %v440 = vadd.f32 0.0, %v439
        %v441 = vpop.f32.mrb[0].mxu0
        %442 = vmatprep.mubr.bf16.mxu0 0
        %443 = vmatmul.mubr.bf16.gmra.mrb[0].mxu0 %v324
        %v444 = vpop.f32.mrb[0].mxu0
        %v445 = vadd.f32 0.0, %v444
        %v446 = vpop.f32.mrb[0].mxu0
        %v447 = vpop.f32.mrb[0].mxu0
        %v448 = vadd.f32 0.0, %v447
        %v449 = vpop.f32.mrb[0].mxu0
        %450 = vmatprep.mubr.bf16.mxu0 0
        %451 = vmatmul.mubr.bf16.gmra.mrb[0].mxu0 %v327
        %v452 = vpop.f32.mrb[0].mxu0
        %v453 = vadd.f32 0.0, %v452
        %v454 = vpop.f32.mrb[0].mxu0
        %v455 = vpop.f32.mrb[0].mxu0
        %v456 = vadd.f32 0.0, %v455
        %v457 = vpop.f32.mrb[0].mxu0
        %458 = vmatprep.mubr.bf16.mxu0 0
        %459 = vmatmul.mubr.bf16.gmra.mrb[0].mxu0 %v330
        %v460 = vpop.f32.mrb[0].mxu0
        %v461 = vadd.f32 0.0, %v460
        %v462 = vpop.f32.mrb[0].mxu0
        %v463 = vpop.f32.mrb[0].mxu0
        %v464 = vadd.f32 0.0, %v463
        %v465 = vpop.f32.mrb[0].mxu0
        %466 = vmatprep.mubr.bf16.mxu0 0
        %467 = vmatmul.mubr.bf16.gmra.mrb[0].mxu0 %v333
        %v468 = vpop.f32.mrb[0].mxu0
        %v469 = vadd.f32 0.0, %v468
        %v470 = vpop.f32.mrb[0].mxu0
        %v471 = vpop.f32.mrb[0].mxu0
        %v472 = vadd.f32 0.0, %v471
        %v473 = vpop.f32.mrb[0].mxu0
        %474 = vmatprep.mubr.bf16.mxu0 0
        %475 = vmatmul.mubr.bf16.gmra.mrb[0].mxu0 %v336
        %v476 = vpop.f32.mrb[0].mxu0
        %v477 = vadd.f32 0.0, %v476
        %v478 = vpop.f32.mrb[0].mxu0
        %v479 = vpop.f32.mrb[0].mxu0
        %v480 = vadd.f32 0.0, %v479
        %v481 = vpop.f32.mrb[0].mxu0
        %482 = vmatprep.mubr.bf16.mxu0 0
        %483 = vmatmul.mubr.bf16.gmra.mrb[0].mxu0 %v339
        %v484 = vpop.f32.mrb[0].mxu0
        %v485 = vadd.f32 0.0, %v484
        %v486 = vpop.f32.mrb[0].mxu0
        %v487 = vpop.f32.mrb[0].mxu0
        %v488 = vadd.f32 0.0, %v487
        %v489 = vpop.f32.mrb[0].mxu0
        %490 = vmatprep.mubr.bf16.mxu0 0
        %491 = vmatmul.mubr.bf16.gmra.mrb[0].mxu0 %v342
        %v492 = vpop.f32.mrb[0].mxu0
        %v493 = vadd.f32 0.0, %v492
        %v494 = vpop.f32.mrb[0].mxu0
        %v495 = vpop.f32.mrb[0].mxu0
        %v496 = vadd.f32 0.0, %v495
        %v497 = vpop.f32.mrb[0].mxu0
        %498 = vmatprep.mubr.bf16.mxu0 0
        %499 = vmatmul.mubr.bf16.gmra.mrb[0].mxu0 %v345
        %v500 = vpop.f32.mrb[0].mxu0
        %v501 = vadd.f32 0.0, %v500
        %v502 = vpop.f32.mrb[0].mxu0
        %v503 = vpop.f32.mrb[0].mxu0
        %v504 = vadd.f32 0.0, %v503
        %v505 = vpop.f32.mrb[0].mxu0
        %506 = vmatprep.mubr.bf16.mxu0 0
        %507 = vmatmul.mubr.bf16.gmra.mrb[0].mxu0 %v348
        %v508 = vpop.f32.mrb[0].mxu0
        %v509 = vadd.f32 0.0, %v508
        %v510 = vpop.f32.mrb[0].mxu0
        %v511 = vpop.f32.mrb[0].mxu0
        %v512 = vadd.f32 0.0, %v511
        %v513 = vpop.f32.mrb[0].mxu0
        %514 = vdwg.mxu0
        %v515 = vadd.f32 %v268, %v389
        %v516 = vadd.f32 %v269, %v392
        %v517 = vadd.f32 %v270, %v397
        %v518 = vadd.f32 %v271, %v400
        %v519 = vadd.f32 %v272, %v405
        %v520 = vadd.f32 %v273, %v408
        %v521 = vadd.f32 %v274, %v413
        %v522 = vadd.f32 %v275, %v416
        %v523 = vadd.f32 %v276, %v421
        %v524 = vadd.f32 %v277, %v424
        %v525 = vadd.f32 %v278, %v429
        %v526 = vadd.f32 %v279, %v432
        %v527 = vadd.f32 %v280, %v437
        %v528 = vadd.f32 %v281, %v440
        %v529 = vadd.f32 %v282, %v445
        %v530 = vadd.f32 %v283, %v448
        %v531 = vadd.f32 %v284, %v453
        %v532 = vadd.f32 %v285, %v456
        %v533 = vadd.f32 %v286, %v461
        %v534 = vadd.f32 %v287, %v464
        %v535 = vadd.f32 %v288, %v469
        %v536 = vadd.f32 %v289, %v472
        %v537 = vadd.f32 %v290, %v477
        %v538 = vadd.f32 %v291, %v480
        %v539 = vadd.f32 %v292, %v485
        %v540 = vadd.f32 %v293, %v488
        %v541 = vadd.f32 %v294, %v493
        %v542 = vadd.f32 %v295, %v496
        %v543 = vadd.f32 %v296, %v501
        %v544 = vadd.f32 %v297, %v504
        %v545 = vadd.f32 %v298, %v509
        %v546 = vadd.f32 %v299, %v512
        %547 = vst [vmem:[#allocation2] sm:$0xff] %v515
        %548 = vst [vmem:[#allocation2 + $0x8] sm:$0xff] %v516
        %549 = vst [vmem:[#allocation2 + $0x10] sm:$0xff] %v517
        %550 = vst [vmem:[#allocation2 + $0x18] sm:$0xff] %v518
        %551 = vst [vmem:[#allocation2 + $0x20] sm:$0xff] %v519
        %552 = vst [vmem:[#allocation2 + $0x28] sm:$0xff] %v520
        %553 = vst [vmem:[#allocation2 + $0x30] sm:$0xff] %v521
        %554 = vst [vmem:[#allocation2 + $0x38] sm:$0xff] %v522
        %555 = vst [vmem:[#allocation2 + $0x40] sm:$0xff] %v523
        %556 = vst [vmem:[#allocation2 + $0x48] sm:$0xff] %v524
        %557 = vst [vmem:[#allocation2 + $0x50] sm:$0xff] %v525
        %558 = vst [vmem:[#allocation2 + $0x58] sm:$0xff] %v526
        %559 = vst [vmem:[#allocation2 + $0x60] sm:$0xff] %v527
        %560 = vst [vmem:[#allocation2 + $0x68] sm:$0xff] %v528
        %561 = vst [vmem:[#allocation2 + $0x70] sm:$0xff] %v529
        %562 = vst [vmem:[#allocation2 + $0x78] sm:$0xff] %v530
        %563 = vst [vmem:[#allocation2 + $0x80] sm:$0xff] %v531
        %564 = vst [vmem:[#allocation2 + $0x88] sm:$0xff] %v532
        %565 = vst [vmem:[#allocation2 + $0x90] sm:$0xff] %v533
        %566 = vst [vmem:[#allocation2 + $0x98] sm:$0xff] %v534
        %567 = vst [vmem:[#allocation2 + $0xa0] sm:$0xff] %v535
        %568 = vst [vmem:[#allocation2 + $0xa8] sm:$0xff] %v536
        %569 = vst [vmem:[#allocation2 + $0xb0] sm:$0xff] %v537
        %570 = vst [vmem:[#allocation2 + $0xb8] sm:$0xff] %v538
        %571 = vst [vmem:[#allocation2 + $0xc0] sm:$0xff] %v539
        %572 = vst [vmem:[#allocation2 + $0xc8] sm:$0xff] %v540
        %573 = vst [vmem:[#allocation2 + $0xd0] sm:$0xff] %v541
        %574 = vst [vmem:[#allocation2 + $0xd8] sm:$0xff] %v542
        %575 = vst [vmem:[#allocation2 + $0xe0] sm:$0xff] %v543
        %576 = vst [vmem:[#allocation2 + $0xe8] sm:$0xff] %v544
        %577 = vst [vmem:[#allocation2 + $0xf0] sm:$0xff] %v545
        %578 = vst [vmem:[#allocation2 + $0xf8] sm:$0xff] %v546
        %v579 = vld [vmem:[%s219 + $0x1] sm:$0xff]
        %v580 = vld [vmem:[%s219 + $0x9] sm:$0xff]
        %v581 = vld [vmem:[%s219 + $0x19] sm:$0xff]
        %v582 = vld [vmem:[%s219 + $0x21] sm:$0xff]
        %v583 = vld [vmem:[%s219 + $0x31] sm:$0xff]
        %v584 = vld [vmem:[%s219 + $0x39] sm:$0xff]
        %v585 = vld [vmem:[%s219 + $0x49] sm:$0xff]
        %v586 = vld [vmem:[%s219 + $0x51] sm:$0xff]
        %v587 = vld [vmem:[%s219 + $0x61] sm:$0xff]
        %v588 = vld [vmem:[%s219 + $0x69] sm:$0xff]
        %v589 = vld [vmem:[%s219 + $0x79] sm:$0xff]
        %v590 = vld [vmem:[%s219 + $0x81] sm:$0xff]
        %v591 = vld [vmem:[%s219 + $0x91] sm:$0xff]
        %v592 = vld [vmem:[%s219 + $0x99] sm:$0xff]
        %v593 = vld [vmem:[%s219 + $0xa9] sm:$0xff]
        %v594 = vld [vmem:[%s219 + $0xb1] sm:$0xff]
        %v595 = vld [vmem:[%s219 + $0xc1] sm:$0xff]
        %v596 = vld [vmem:[%s219 + $0xc9] sm:$0xff]
        %v597 = vld [vmem:[%s219 + $0xd9] sm:$0xff]
        %v598 = vld [vmem:[%s219 + $0xe1] sm:$0xff]
        %v599 = vld [vmem:[%s219 + $0xf1] sm:$0xff]
        %v600 = vld [vmem:[%s219 + $0xf9] sm:$0xff]
        %v601 = vld [vmem:[%s219 + $0x109] sm:$0xff]
        %v602 = vld [vmem:[%s219 + $0x111] sm:$0xff]
        %v603 = vld [vmem:[%s219 + $0x121] sm:$0xff]
        %v604 = vld [vmem:[%s219 + $0x129] sm:$0xff]
        %v605 = vld [vmem:[%s219 + $0x139] sm:$0xff]
        %v606 = vld [vmem:[%s219 + $0x141] sm:$0xff]
        %v607 = vld [vmem:[%s219 + $0x151] sm:$0xff]
        %v608 = vld [vmem:[%s219 + $0x159] sm:$0xff]
        %v609 = vld [vmem:[%s219 + $0x169] sm:$0xff]
        %v610 = vld [vmem:[%s219 + $0x171] sm:$0xff]
        %v611 = vpack.c.bf16 %v580, %v579
        %v612 = vpack.c.bf16 %v582, %v581
        %v613 = vpack.c.bf16 %v584, %v583
        %v614 = vpack.c.bf16 %v586, %v585
        %v615 = vpack.c.bf16 %v588, %v587
        %v616 = vpack.c.bf16 %v590, %v589
        %v617 = vpack.c.bf16 %v592, %v591
        %v618 = vpack.c.bf16 %v594, %v593
        %v619 = vpack.c.bf16 %v596, %v595
        %v620 = vpack.c.bf16 %v598, %v597
        %v621 = vpack.c.bf16 %v600, %v599
        %v622 = vpack.c.bf16 %v602, %v601
        %v623 = vpack.c.bf16 %v604, %v603
        %v624 = vpack.c.bf16 %v606, %v605
        %v625 = vpack.c.bf16 %v608, %v607
        %v626 = vpack.c.bf16 %v610, %v609
        %v627 = vld [vmem:[#allocation2] sm:$0xff]
        %v628 = vld [vmem:[#allocation2 + $0x8] sm:$0xff]
        %v629 = vld [vmem:[#allocation2 + $0x10] sm:$0xff]
        %v630 = vld [vmem:[#allocation2 + $0x18] sm:$0xff]
        %v631 = vld [vmem:[#allocation2 + $0x20] sm:$0xff]
        %v632 = vld [vmem:[#allocation2 + $0x28] sm:$0xff]
        %v633 = vld [vmem:[#allocation2 + $0x30] sm:$0xff]
        %v634 = vld [vmem:[#allocation2 + $0x38] sm:$0xff]
        %v635 = vld [vmem:[#allocation2 + $0x40] sm:$0xff]
        %v636 = vld [vmem:[#allocation2 + $0x48] sm:$0xff]
        %v637 = vld [vmem:[#allocation2 + $0x50] sm:$0xff]
        %v638 = vld [vmem:[#allocation2 + $0x58] sm:$0xff]
        %v639 = vld [vmem:[#allocation2 + $0x60] sm:$0xff]
        %v640 = vld [vmem:[#allocation2 + $0x68] sm:$0xff]
        %v641 = vld [vmem:[#allocation2 + $0x70] sm:$0xff]
        %v642 = vld [vmem:[#allocation2 + $0x78] sm:$0xff]
        %v643 = vld [vmem:[#allocation2 + $0x80] sm:$0xff]
        %v644 = vld [vmem:[#allocation2 + $0x88] sm:$0xff]
        %v645 = vld [vmem:[#allocation2 + $0x90] sm:$0xff]
        %v646 = vld [vmem:[#allocation2 + $0x98] sm:$0xff]
        %v647 = vld [vmem:[#allocation2 + $0xa0] sm:$0xff]
        %v648 = vld [vmem:[#allocation2 + $0xa8] sm:$0xff]
        %v649 = vld [vmem:[#allocation2 + $0xb0] sm:$0xff]
        %v650 = vld [vmem:[#allocation2 + $0xb8] sm:$0xff]
        %v651 = vld [vmem:[#allocation2 + $0xc0] sm:$0xff]
        %v652 = vld [vmem:[#allocation2 + $0xc8] sm:$0xff]
        %v653 = vld [vmem:[#allocation2 + $0xd0] sm:$0xff]
        %v654 = vld [vmem:[#allocation2 + $0xd8] sm:$0xff]
        %v655 = vld [vmem:[#allocation2 + $0xe0] sm:$0xff]
        %v656 = vld [vmem:[#allocation2 + $0xe8] sm:$0xff]
        %v657 = vld [vmem:[#allocation2 + $0xf0] sm:$0xff]
        %v658 = vld [vmem:[#allocation2 + $0xf8] sm:$0xff]
        %s659 = scalar_lea.vmem %s1, 2
        %v660 = vld [vmem:[%s659] sm:$0x3]
        %v662 = vsel %vm301, %v611, 0
        %v665 = vsel %vm301, %v612, 0
        %v668 = vsel %vm301, %v613, 0
        %v671 = vsel %vm301, %v614, 0
        %v674 = vsel %vm301, %v615, 0
        %v677 = vsel %vm301, %v616, 0
        %v680 = vsel %vm301, %v617, 0
        %v683 = vsel %vm301, %v618, 0
        %v686 = vsel %vm301, %v619, 0
        %v689 = vsel %vm301, %v620, 0
        %v692 = vsel %vm301, %v621, 0
        %v695 = vsel %vm301, %v622, 0
        %v698 = vsel %vm301, %v623, 0
        %v701 = vsel %vm301, %v624, 0
        %v704 = vsel %vm301, %v625, 0
        %v707 = vsel %vm301, %v626, 0
        %v710 = vsel %vm350, %v660, 0
        %712 = vmatprep.subr.bf16.mxu0 0
        %713 = vmatpush1.bf16.msra.mxu0 %v710
        %714 = vmatprep.subr.bf16.mxu0 0
        %715 = vmatpush1.bf16.msra.mxu0 0
        %716 = vmatprep.subr.bf16.mxu0 0
        %717 = vmatpush1.bf16.msra.mxu0 0
        %718 = vmatprep.subr.bf16.mxu0 0
        %719 = vmatpush1.bf16.msra.mxu0 0
        %720 = vmatprep.subr.bf16.mxu0 0
        %721 = vmatpush1.bf16.msra.mxu0 0
        %722 = vmatprep.subr.bf16.mxu0 0
        %723 = vmatpush1.bf16.msra.mxu0 0
        %724 = vmatprep.subr.bf16.mxu0 0
        %725 = vmatpush1.bf16.msra.mxu0 0
        %726 = vmatprep.subr.bf16.mxu0 0
        %727 = vmatpush1.bf16.msra.mxu0 0
        %728 = vmatprep.subr.bf16.mxu0 0
        %729 = vmatpush1.bf16.msra.mxu0 0
        %730 = vmatprep.subr.bf16.mxu0 0
        %731 = vmatpush1.bf16.msra.mxu0 0
        %732 = vmatprep.subr.bf16.mxu0 0
        %733 = vmatpush1.bf16.msra.mxu0 0
        %734 = vmatprep.subr.bf16.mxu0 0
        %735 = vmatpush1.bf16.msra.mxu0 0
        %736 = vmatprep.subr.bf16.mxu0 0
        %737 = vmatpush1.bf16.msra.mxu0 0
        %738 = vmatprep.subr.bf16.mxu0 0
        %739 = vmatpush1.bf16.msra.mxu0 0
        %740 = vmatprep.subr.bf16.mxu0 0
        %741 = vmatpush1.bf16.msra.mxu0 0
        %742 = vmatprep.subr.bf16.mxu0 0
        %743 = vmatpush1.bf16.msra.mxu0 0
        %744 = vmatprep.mubr.bf16.mxu0 0
        %745 = vmatmul.mubr.bf16.gmra.mrb[0].mxu0 %v662
        %v746 = vpop.f32.mrb[0].mxu0
        %v747 = vadd.f32 0.0, %v746
        %v748 = vpop.f32.mrb[0].mxu0
        %v749 = vpop.f32.mrb[0].mxu0
        %v750 = vadd.f32 0.0, %v749
        %v751 = vpop.f32.mrb[0].mxu0
        %752 = vmatprep.mubr.bf16.mxu0 0
        %753 = vmatmul.mubr.bf16.gmra.mrb[0].mxu0 %v665
        %v754 = vpop.f32.mrb[0].mxu0
        %v755 = vadd.f32 0.0, %v754
        %v756 = vpop.f32.mrb[0].mxu0
        %v757 = vpop.f32.mrb[0].mxu0
        %v758 = vadd.f32 0.0, %v757
        %v759 = vpop.f32.mrb[0].mxu0
        %760 = vmatprep.mubr.bf16.mxu0 0
        %761 = vmatmul.mubr.bf16.gmra.mrb[0].mxu0 %v668
        %v762 = vpop.f32.mrb[0].mxu0
        %v763 = vadd.f32 0.0, %v762
        %v764 = vpop.f32.mrb[0].mxu0
        %v765 = vpop.f32.mrb[0].mxu0
        %v766 = vadd.f32 0.0, %v765
        %v767 = vpop.f32.mrb[0].mxu0
        %768 = vmatprep.mubr.bf16.mxu0 0
        %769 = vmatmul.mubr.bf16.gmra.mrb[0].mxu0 %v671
        %v770 = vpop.f32.mrb[0].mxu0
        %v771 = vadd.f32 0.0, %v770
        %v772 = vpop.f32.mrb[0].mxu0
        %v773 = vpop.f32.mrb[0].mxu0
        %v774 = vadd.f32 0.0, %v773
        %v775 = vpop.f32.mrb[0].mxu0
        %776 = vmatprep.mubr.bf16.mxu0 0
        %777 = vmatmul.mubr.bf16.gmra.mrb[0].mxu0 %v674
        %v778 = vpop.f32.mrb[0].mxu0
        %v779 = vadd.f32 0.0, %v778
        %v780 = vpop.f32.mrb[0].mxu0
        %v781 = vpop.f32.mrb[0].mxu0
        %v782 = vadd.f32 0.0, %v781
        %v783 = vpop.f32.mrb[0].mxu0
        %784 = vmatprep.mubr.bf16.mxu0 0
        %785 = vmatmul.mubr.bf16.gmra.mrb[0].mxu0 %v677
        %v786 = vpop.f32.mrb[0].mxu0
        %v787 = vadd.f32 0.0, %v786
        %v788 = vpop.f32.mrb[0].mxu0
        %v789 = vpop.f32.mrb[0].mxu0
        %v790 = vadd.f32 0.0, %v789
        %v791 = vpop.f32.mrb[0].mxu0
        %792 = vmatprep.mubr.bf16.mxu0 0
        %793 = vmatmul.mubr.bf16.gmra.mrb[0].mxu0 %v680
        %v794 = vpop.f32.mrb[0].mxu0
        %v795 = vadd.f32 0.0, %v794
        %v796 = vpop.f32.mrb[0].mxu0
        %v797 = vpop.f32.mrb[0].mxu0
        %v798 = vadd.f32 0.0, %v797
        %v799 = vpop.f32.mrb[0].mxu0
        %800 = vmatprep.mubr.bf16.mxu0 0
        %801 = vmatmul.mubr.bf16.gmra.mrb[0].mxu0 %v683
        %v802 = vpop.f32.mrb[0].mxu0
        %v803 = vadd.f32 0.0, %v802
        %v804 = vpop.f32.mrb[0].mxu0
        %v805 = vpop.f32.mrb[0].mxu0
        %v806 = vadd.f32 0.0, %v805
        %v807 = vpop.f32.mrb[0].mxu0
        %808 = vmatprep.mubr.bf16.mxu0 0
        %809 = vmatmul.mubr.bf16.gmra.mrb[0].mxu0 %v686
        %v810 = vpop.f32.mrb[0].mxu0
        %v811 = vadd.f32 0.0, %v810
        %v812 = vpop.f32.mrb[0].mxu0
        %v813 = vpop.f32.mrb[0].mxu0
        %v814 = vadd.f32 0.0, %v813
        %v815 = vpop.f32.mrb[0].mxu0
        %816 = vmatprep.mubr.bf16.mxu0 0
        %817 = vmatmul.mubr.bf16.gmra.mrb[0].mxu0 %v689
        %v818 = vpop.f32.mrb[0].mxu0
        %v819 = vadd.f32 0.0, %v818
        %v820 = vpop.f32.mrb[0].mxu0
        %v821 = vpop.f32.mrb[0].mxu0
        %v822 = vadd.f32 0.0, %v821
        %v823 = vpop.f32.mrb[0].mxu0
        %824 = vmatprep.mubr.bf16.mxu0 0
        %825 = vmatmul.mubr.bf16.gmra.mrb[0].mxu0 %v692
        %v826 = vpop.f32.mrb[0].mxu0
        %v827 = vadd.f32 0.0, %v826
        %v828 = vpop.f32.mrb[0].mxu0
        %v829 = vpop.f32.mrb[0].mxu0
        %v830 = vadd.f32 0.0, %v829
        %v831 = vpop.f32.mrb[0].mxu0
        %832 = vmatprep.mubr.bf16.mxu0 0
        %833 = vmatmul.mubr.bf16.gmra.mrb[0].mxu0 %v695
        %v834 = vpop.f32.mrb[0].mxu0
        %v835 = vadd.f32 0.0, %v834
        %v836 = vpop.f32.mrb[0].mxu0
        %v837 = vpop.f32.mrb[0].mxu0
        %v838 = vadd.f32 0.0, %v837
        %v839 = vpop.f32.mrb[0].mxu0
        %840 = vmatprep.mubr.bf16.mxu0 0
        %841 = vmatmul.mubr.bf16.gmra.mrb[0].mxu0 %v698
        %v842 = vpop.f32.mrb[0].mxu0
        %v843 = vadd.f32 0.0, %v842
        %v844 = vpop.f32.mrb[0].mxu0
        %v845 = vpop.f32.mrb[0].mxu0
        %v846 = vadd.f32 0.0, %v845
        %v847 = vpop.f32.mrb[0].mxu0
        %848 = vmatprep.mubr.bf16.mxu0 0
        %849 = vmatmul.mubr.bf16.gmra.mrb[0].mxu0 %v701
        %v850 = vpop.f32.mrb[0].mxu0
        %v851 = vadd.f32 0.0, %v850
        %v852 = vpop.f32.mrb[0].mxu0
        %v853 = vpop.f32.mrb[0].mxu0
        %v854 = vadd.f32 0.0, %v853
        %v855 = vpop.f32.mrb[0].mxu0
        %856 = vmatprep.mubr.bf16.mxu0 0
        %857 = vmatmul.mubr.bf16.gmra.mrb[0].mxu0 %v704
        %v858 = vpop.f32.mrb[0].mxu0
        %v859 = vadd.f32 0.0, %v858
        %v860 = vpop.f32.mrb[0].mxu0
        %v861 = vpop.f32.mrb[0].mxu0
        %v862 = vadd.f32 0.0, %v861
        %v863 = vpop.f32.mrb[0].mxu0
        %864 = vmatprep.mubr.bf16.mxu0 0
        %865 = vmatmul.mubr.bf16.gmra.mrb[0].mxu0 %v707
        %v866 = vpop.f32.mrb[0].mxu0
        %v867 = vadd.f32 0.0, %v866
        %v868 = vpop.f32.mrb[0].mxu0
        %v869 = vpop.f32.mrb[0].mxu0
        %v870 = vadd.f32 0.0, %v869
        %v871 = vpop.f32.mrb[0].mxu0
        %872 = vdwg.mxu0
        %v873 = vadd.f32 %v627, %v747
        %v874 = vadd.f32 %v628, %v750
        %v875 = vadd.f32 %v629, %v755
        %v876 = vadd.f32 %v630, %v758
        %v877 = vadd.f32 %v631, %v763
        %v878 = vadd.f32 %v632, %v766
        %v879 = vadd.f32 %v633, %v771
        %v880 = vadd.f32 %v634, %v774
        %v881 = vadd.f32 %v635, %v779
        %v882 = vadd.f32 %v636, %v782
        %v883 = vadd.f32 %v637, %v787
        %v884 = vadd.f32 %v638, %v790
        %v885 = vadd.f32 %v639, %v795
        %v886 = vadd.f32 %v640, %v798
        %v887 = vadd.f32 %v641, %v803
        %v888 = vadd.f32 %v642, %v806
        %v889 = vadd.f32 %v643, %v811
        %v890 = vadd.f32 %v644, %v814
        %v891 = vadd.f32 %v645, %v819
        %v892 = vadd.f32 %v646, %v822
        %v893 = vadd.f32 %v647, %v827
        %v894 = vadd.f32 %v648, %v830
        %v895 = vadd.f32 %v649, %v835
        %v896 = vadd.f32 %v650, %v838
        %v897 = vadd.f32 %v651, %v843
        %v898 = vadd.f32 %v652, %v846
        %v899 = vadd.f32 %v653, %v851
        %v900 = vadd.f32 %v654, %v854
        %v901 = vadd.f32 %v655, %v859
        %v902 = vadd.f32 %v656, %v862
        %v903 = vadd.f32 %v657, %v867
        %v904 = vadd.f32 %v658, %v870
        %905 = vst [vmem:[#allocation2] sm:$0xff] %v873
        %906 = vst [vmem:[#allocation2 + $0x8] sm:$0xff] %v874
        %907 = vst [vmem:[#allocation2 + $0x10] sm:$0xff] %v875
        %908 = vst [vmem:[#allocation2 + $0x18] sm:$0xff] %v876
        %909 = vst [vmem:[#allocation2 + $0x20] sm:$0xff] %v877
        %910 = vst [vmem:[#allocation2 + $0x28] sm:$0xff] %v878
        %911 = vst [vmem:[#allocation2 + $0x30] sm:$0xff] %v879
        %912 = vst [vmem:[#allocation2 + $0x38] sm:$0xff] %v880
        %913 = vst [vmem:[#allocation2 + $0x40] sm:$0xff] %v881
        %914 = vst [vmem:[#allocation2 + $0x48] sm:$0xff] %v882
        %915 = vst [vmem:[#allocation2 + $0x50] sm:$0xff] %v883
        %916 = vst [vmem:[#allocation2 + $0x58] sm:$0xff] %v884
        %917 = vst [vmem:[#allocation2 + $0x60] sm:$0xff] %v885
        %918 = vst [vmem:[#allocation2 + $0x68] sm:$0xff] %v886
        %919 = vst [vmem:[#allocation2 + $0x70] sm:$0xff] %v887
        %920 = vst [vmem:[#allocation2 + $0x78] sm:$0xff] %v888
        %921 = vst [vmem:[#allocation2 + $0x80] sm:$0xff] %v889
        %922 = vst [vmem:[#allocation2 + $0x88] sm:$0xff] %v890
        %923 = vst [vmem:[#allocation2 + $0x90] sm:$0xff] %v891
        %924 = vst [vmem:[#allocation2 + $0x98] sm:$0xff] %v892
        %925 = vst [vmem:[#allocation2 + $0xa0] sm:$0xff] %v893
        %926 = vst [vmem:[#allocation2 + $0xa8] sm:$0xff] %v894
        %927 = vst [vmem:[#allocation2 + $0xb0] sm:$0xff] %v895
        %928 = vst [vmem:[#allocation2 + $0xb8] sm:$0xff] %v896
        %929 = vst [vmem:[#allocation2 + $0xc0] sm:$0xff] %v897
        %930 = vst [vmem:[#allocation2 + $0xc8] sm:$0xff] %v898
        %931 = vst [vmem:[#allocation2 + $0xd0] sm:$0xff] %v899
        %932 = vst [vmem:[#allocation2 + $0xd8] sm:$0xff] %v900
        %933 = vst [vmem:[#allocation2 + $0xe0] sm:$0xff] %v901
        %934 = vst [vmem:[#allocation2 + $0xe8] sm:$0xff] %v902
        %935 = vst [vmem:[#allocation2 + $0xf0] sm:$0xff] %v903
        %936 = vst [vmem:[#allocation2 + $0xf8] sm:$0xff] %v904
        %v937 = vld [vmem:[%s219 + $0x2] sm:$0xff]
        %v938 = vld [vmem:[%s219 + $0xa] sm:$0xff]
        %v939 = vld [vmem:[%s219 + $0x1a] sm:$0xff]
        %v940 = vld [vmem:[%s219 + $0x22] sm:$0xff]
        %v941 = vld [vmem:[%s219 + $0x32] sm:$0xff]
        %v942 = vld [vmem:[%s219 + $0x3a] sm:$0xff]
        %v943 = vld [vmem:[%s219 + $0x4a] sm:$0xff]
        %v944 = vld [vmem:[%s219 + $0x52] sm:$0xff]
        %v945 = vld [vmem:[%s219 + $0x62] sm:$0xff]
        %v946 = vld [vmem:[%s219 + $0x6a] sm:$0xff]
        %v947 = vld [vmem:[%s219 + $0x7a] sm:$0xff]
        %v948 = vld [vmem:[%s219 + $0x82] sm:$0xff]
        %v949 = vld [vmem:[%s219 + $0x92] sm:$0xff]
        %v950 = vld [vmem:[%s219 + $0x9a] sm:$0xff]
        %v951 = vld [vmem:[%s219 + $0xaa] sm:$0xff]
        %v952 = vld [vmem:[%s219 + $0xb2] sm:$0xff]
        %v953 = vld [vmem:[%s219 + $0xc2] sm:$0xff]
        %v954 = vld [vmem:[%s219 + $0xca] sm:$0xff]
        %v955 = vld [vmem:[%s219 + $0xda] sm:$0xff]
        %v956 = vld [vmem:[%s219 + $0xe2] sm:$0xff]
        %v957 = vld [vmem:[%s219 + $0xf2] sm:$0xff]
        %v958 = vld [vmem:[%s219 + $0xfa] sm:$0xff]
        %v959 = vld [vmem:[%s219 + $0x10a] sm:$0xff]
        %v960 = vld [vmem:[%s219 + $0x112] sm:$0xff]
        %v961 = vld [vmem:[%s219 + $0x122] sm:$0xff]
        %v962 = vld [vmem:[%s219 + $0x12a] sm:$0xff]
        %v963 = vld [vmem:[%s219 + $0x13a] sm:$0xff]
        %v964 = vld [vmem:[%s219 + $0x142] sm:$0xff]
        %v965 = vld [vmem:[%s219 + $0x152] sm:$0xff]
        %v966 = vld [vmem:[%s219 + $0x15a] sm:$0xff]
        %v967 = vld [vmem:[%s219 + $0x16a] sm:$0xff]
        %v968 = vld [vmem:[%s219 + $0x172] sm:$0xff]
        %v969 = vpack.c.bf16 %v938, %v937
        %v970 = vpack.c.bf16 %v940, %v939
        %v971 = vpack.c.bf16 %v942, %v941
        %v972 = vpack.c.bf16 %v944, %v943
        %v973 = vpack.c.bf16 %v946, %v945
        %v974 = vpack.c.bf16 %v948, %v947
        %v975 = vpack.c.bf16 %v950, %v949
        %v976 = vpack.c.bf16 %v952, %v951
        %v977 = vpack.c.bf16 %v954, %v953
        %v978 = vpack.c.bf16 %v956, %v955
        %v979 = vpack.c.bf16 %v958, %v957
        %v980 = vpack.c.bf16 %v960, %v959
        %v981 = vpack.c.bf16 %v962, %v961
        %v982 = vpack.c.bf16 %v964, %v963
        %v983 = vpack.c.bf16 %v966, %v965
        %v984 = vpack.c.bf16 %v968, %v967
        %v985 = vld [vmem:[#allocation2] sm:$0xff]
        %v986 = vld [vmem:[#allocation2 + $0x8] sm:$0xff]
        %v987 = vld [vmem:[#allocation2 + $0x10] sm:$0xff]
        %v988 = vld [vmem:[#allocation2 + $0x18] sm:$0xff]
        %v989 = vld [vmem:[#allocation2 + $0x20] sm:$0xff]
        %v990 = vld [vmem:[#allocation2 + $0x28] sm:$0xff]
        %v991 = vld [vmem:[#allocation2 + $0x30] sm:$0xff]
        %v992 = vld [vmem:[#allocation2 + $0x38] sm:$0xff]
        %v993 = vld [vmem:[#allocation2 + $0x40] sm:$0xff]
        %v994 = vld [vmem:[#allocation2 + $0x48] sm:$0xff]
        %v995 = vld [vmem:[#allocation2 + $0x50] sm:$0xff]
        %v996 = vld [vmem:[#allocation2 + $0x58] sm:$0xff]
        %v997 = vld [vmem:[#allocation2 + $0x60] sm:$0xff]
        %v998 = vld [vmem:[#allocation2 + $0x68] sm:$0xff]
        %v999 = vld [vmem:[#allocation2 + $0x70] sm:$0xff]
        %v1000 = vld [vmem:[#allocation2 + $0x78] sm:$0xff]
        %v1001 = vld [vmem:[#allocation2 + $0x80] sm:$0xff]
        %v1002 = vld [vmem:[#allocation2 + $0x88] sm:$0xff]
        %v1003 = vld [vmem:[#allocation2 + $0x90] sm:$0xff]
        %v1004 = vld [vmem:[#allocation2 + $0x98] sm:$0xff]
        %v1005 = vld [vmem:[#allocation2 + $0xa0] sm:$0xff]
        %v1006 = vld [vmem:[#allocation2 + $0xa8] sm:$0xff]
        %v1007 = vld [vmem:[#allocation2 + $0xb0] sm:$0xff]
        %v1008 = vld [vmem:[#allocation2 + $0xb8] sm:$0xff]
        %v1009 = vld [vmem:[#allocation2 + $0xc0] sm:$0xff]
        %v1010 = vld [vmem:[#allocation2 + $0xc8] sm:$0xff]
        %v1011 = vld [vmem:[#allocation2 + $0xd0] sm:$0xff]
        %v1012 = vld [vmem:[#allocation2 + $0xd8] sm:$0xff]
        %v1013 = vld [vmem:[#allocation2 + $0xe0] sm:$0xff]
        %v1014 = vld [vmem:[#allocation2 + $0xe8] sm:$0xff]
        %v1015 = vld [vmem:[#allocation2 + $0xf0] sm:$0xff]
        %v1016 = vld [vmem:[#allocation2 + $0xf8] sm:$0xff]
        %s1017 = scalar_lea.vmem %s1, 4
        %v1018 = vld [vmem:[%s1017] sm:$0x3]
        %v1020 = vsel %vm301, %v969, 0
        %v1023 = vsel %vm301, %v970, 0
        %v1026 = vsel %vm301, %v971, 0
        %v1029 = vsel %vm301, %v972, 0
        %v1032 = vsel %vm301, %v973, 0
        %v1035 = vsel %vm301, %v974, 0
        %v1038 = vsel %vm301, %v975, 0
        %v1041 = vsel %vm301, %v976, 0
        %v1044 = vsel %vm301, %v977, 0
        %v1047 = vsel %vm301, %v978, 0
        %v1050 = vsel %vm301, %v979, 0
        %v1053 = vsel %vm301, %v980, 0
        %v1056 = vsel %vm301, %v981, 0
        %v1059 = vsel %vm301, %v982, 0
        %v1062 = vsel %vm301, %v983, 0
        %v1065 = vsel %vm301, %v984, 0
        %v1068 = vsel %vm350, %v1018, 0
        %1070 = vmatprep.subr.bf16.mxu0 0
        %1071 = vmatpush1.bf16.msra.mxu0 %v1068
        %1072 = vmatprep.subr.bf16.mxu0 0
        %1073 = vmatpush1.bf16.msra.mxu0 0
        %1074 = vmatprep.subr.bf16.mxu0 0
        %1075 = vmatpush1.bf16.msra.mxu0 0
        %1076 = vmatprep.subr.bf16.mxu0 0
        %1077 = vmatpush1.bf16.msra.mxu0 0
        %1078 = vmatprep.subr.bf16.mxu0 0
        %1079 = vmatpush1.bf16.msra.mxu0 0
        %1080 = vmatprep.subr.bf16.mxu0 0
        %1081 = vmatpush1.bf16.msra.mxu0 0
        %1082 = vmatprep.subr.bf16.mxu0 0
        %1083 = vmatpush1.bf16.msra.mxu0 0
        %1084 = vmatprep.subr.bf16.mxu0 0
        %1085 = vmatpush1.bf16.msra.mxu0 0
        %1086 = vmatprep.subr.bf16.mxu0 0
        %1087 = vmatpush1.bf16.msra.mxu0 0
        %1088 = vmatprep.subr.bf16.mxu0 0
        %1089 = vmatpush1.bf16.msra.mxu0 0
        %1090 = vmatprep.subr.bf16.mxu0 0
        %1091 = vmatpush1.bf16.msra.mxu0 0
        %1092 = vmatprep.subr.bf16.mxu0 0
        %1093 = vmatpush1.bf16.msra.mxu0 0
        %1094 = vmatprep.subr.bf16.mxu0 0
        %1095 = vmatpush1.bf16.msra.mxu0 0
        %1096 = vmatprep.subr.bf16.mxu0 0
        %1097 = vmatpush1.bf16.msra.mxu0 0
        %1098 = vmatprep.subr.bf16.mxu0 0
        %1099 = vmatpush1.bf16.msra.mxu0 0
        %1100 = vmatprep.subr.bf16.mxu0 0
        %1101 = vmatpush1.bf16.msra.mxu0 0
        %1102 = vmatprep.mubr.bf16.mxu0 0
        %1103 = vmatmul.mubr.bf16.gmra.mrb[0].mxu0 %v1020
        %v1104 = vpop.f32.mrb[0].mxu0
        %v1105 = vadd.f32 0.0, %v1104
        %v1106 = vpop.f32.mrb[0].mxu0
        %v1107 = vpop.f32.mrb[0].mxu0
        %v1108 = vadd.f32 0.0, %v1107
        %v1109 = vpop.f32.mrb[0].mxu0
        %1110 = vmatprep.mubr.bf16.mxu0 0
        %1111 = vmatmul.mubr.bf16.gmra.mrb[0].mxu0 %v1023
        %v1112 = vpop.f32.mrb[0].mxu0
        %v1113 = vadd.f32 0.0, %v1112
        %v1114 = vpop.f32.mrb[0].mxu0
        %v1115 = vpop.f32.mrb[0].mxu0
        %v1116 = vadd.f32 0.0, %v1115
        %v1117 = vpop.f32.mrb[0].mxu0
        %1118 = vmatprep.mubr.bf16.mxu0 0
        %1119 = vmatmul.mubr.bf16.gmra.mrb[0].mxu0 %v1026
        %v1120 = vpop.f32.mrb[0].mxu0
        %v1121 = vadd.f32 0.0, %v1120
        %v1122 = vpop.f32.mrb[0].mxu0
        %v1123 = vpop.f32.mrb[0].mxu0
        %v1124 = vadd.f32 0.0, %v1123
        %v1125 = vpop.f32.mrb[0].mxu0
        %1126 = vmatprep.mubr.bf16.mxu0 0
        %1127 = vmatmul.mubr.bf16.gmra.mrb[0].mxu0 %v1029
        %v1128 = vpop.f32.mrb[0].mxu0
        %v1129 = vadd.f32 0.0, %v1128
        %v1130 = vpop.f32.mrb[0].mxu0
        %v1131 = vpop.f32.mrb[0].mxu0
        %v1132 = vadd.f32 0.0, %v1131
        %v1133 = vpop.f32.mrb[0].mxu0
        %1134 = vmatprep.mubr.bf16.mxu0 0
        %1135 = vmatmul.mubr.bf16.gmra.mrb[0].mxu0 %v1032
        %v1136 = vpop.f32.mrb[0].mxu0
        %v1137 = vadd.f32 0.0, %v1136
        %v1138 = vpop.f32.mrb[0].mxu0
        %v1139 = vpop.f32.mrb[0].mxu0
        %v1140 = vadd.f32 0.0, %v1139
        %v1141 = vpop.f32.mrb[0].mxu0
        %1142 = vmatprep.mubr.bf16.mxu0 0
        %1143 = vmatmul.mubr.bf16.gmra.mrb[0].mxu0 %v1035
        %v1144 = vpop.f32.mrb[0].mxu0
        %v1145 = vadd.f32 0.0, %v1144
        %v1146 = vpop.f32.mrb[0].mxu0
        %v1147 = vpop.f32.mrb[0].mxu0
        %v1148 = vadd.f32 0.0, %v1147
        %v1149 = vpop.f32.mrb[0].mxu0
        %1150 = vmatprep.mubr.bf16.mxu0 0
        %1151 = vmatmul.mubr.bf16.gmra.mrb[0].mxu0 %v1038
        %v1152 = vpop.f32.mrb[0].mxu0
        %v1153 = vadd.f32 0.0, %v1152
        %v1154 = vpop.f32.mrb[0].mxu0
        %v1155 = vpop.f32.mrb[0].mxu0
        %v1156 = vadd.f32 0.0, %v1155
        %v1157 = vpop.f32.mrb[0].mxu0
        %1158 = vmatprep.mubr.bf16.mxu0 0
        %1159 = vmatmul.mubr.bf16.gmra.mrb[0].mxu0 %v1041
        %v1160 = vpop.f32.mrb[0].mxu0
        %v1161 = vadd.f32 0.0, %v1160
        %v1162 = vpop.f32.mrb[0].mxu0
        %v1163 = vpop.f32.mrb[0].mxu0
        %v1164 = vadd.f32 0.0, %v1163
        %v1165 = vpop.f32.mrb[0].mxu0
        %1166 = vmatprep.mubr.bf16.mxu0 0
        %1167 = vmatmul.mubr.bf16.gmra.mrb[0].mxu0 %v1044
        %v1168 = vpop.f32.mrb[0].mxu0
        %v1169 = vadd.f32 0.0, %v1168
        %v1170 = vpop.f32.mrb[0].mxu0
        %v1171 = vpop.f32.mrb[0].mxu0
        %v1172 = vadd.f32 0.0, %v1171
        %v1173 = vpop.f32.mrb[0].mxu0
        %1174 = vmatprep.mubr.bf16.mxu0 0
        %1175 = vmatmul.mubr.bf16.gmra.mrb[0].mxu0 %v1047
        %v1176 = vpop.f32.mrb[0].mxu0
        %v1177 = vadd.f32 0.0, %v1176
        %v1178 = vpop.f32.mrb[0].mxu0
        %v1179 = vpop.f32.mrb[0].mxu0
        %v1180 = vadd.f32 0.0, %v1179
        %v1181 = vpop.f32.mrb[0].mxu0
        %1182 = vmatprep.mubr.bf16.mxu0 0
        %1183 = vmatmul.mubr.bf16.gmra.mrb[0].mxu0 %v1050
        %v1184 = vpop.f32.mrb[0].mxu0
        %v1185 = vadd.f32 0.0, %v1184
        %v1186 = vpop.f32.mrb[0].mxu0
        %v1187 = vpop.f32.mrb[0].mxu0
        %v1188 = vadd.f32 0.0, %v1187
        %v1189 = vpop.f32.mrb[0].mxu0
        %1190 = vmatprep.mubr.bf16.mxu0 0
        %1191 = vmatmul.mubr.bf16.gmra.mrb[0].mxu0 %v1053
        %v1192 = vpop.f32.mrb[0].mxu0
        %v1193 = vadd.f32 0.0, %v1192
        %v1194 = vpop.f32.mrb[0].mxu0
        %v1195 = vpop.f32.mrb[0].mxu0
        %v1196 = vadd.f32 0.0, %v1195
        %v1197 = vpop.f32.mrb[0].mxu0
        %1198 = vmatprep.mubr.bf16.mxu0 0
        %1199 = vmatmul.mubr.bf16.gmra.mrb[0].mxu0 %v1056
        %v1200 = vpop.f32.mrb[0].mxu0
        %v1201 = vadd.f32 0.0, %v1200
        %v1202 = vpop.f32.mrb[0].mxu0
        %v1203 = vpop.f32.mrb[0].mxu0
        %v1204 = vadd.f32 0.0, %v1203
        %v1205 = vpop.f32.mrb[0].mxu0
        %1206 = vmatprep.mubr.bf16.mxu0 0
        %1207 = vmatmul.mubr.bf16.gmra.mrb[0].mxu0 %v1059
        %v1208 = vpop.f32.mrb[0].mxu0
        %v1209 = vadd.f32 0.0, %v1208
        %v1210 = vpop.f32.mrb[0].mxu0
        %v1211 = vpop.f32.mrb[0].mxu0
        %v1212 = vadd.f32 0.0, %v1211
        %v1213 = vpop.f32.mrb[0].mxu0
        %1214 = vmatprep.mubr.bf16.mxu0 0
        %1215 = vmatmul.mubr.bf16.gmra.mrb[0].mxu0 %v1062
        %v1216 = vpop.f32.mrb[0].mxu0
        %v1217 = vadd.f32 0.0, %v1216
        %v1218 = vpop.f32.mrb[0].mxu0
        %v1219 = vpop.f32.mrb[0].mxu0
        %v1220 = vadd.f32 0.0, %v1219
        %v1221 = vpop.f32.mrb[0].mxu0
        %1222 = vmatprep.mubr.bf16.mxu0 0
        %1223 = vmatmul.mubr.bf16.gmra.mrb[0].mxu0 %v1065
        %v1224 = vpop.f32.mrb[0].mxu0
        %v1225 = vadd.f32 0.0, %v1224
        %v1226 = vpop.f32.mrb[0].mxu0
        %v1227 = vpop.f32.mrb[0].mxu0
        %v1228 = vadd.f32 0.0, %v1227
        %v1229 = vpop.f32.mrb[0].mxu0
        %1230 = vdwg.mxu0
        %v1231 = vadd.f32 %v985, %v1105
        %v1232 = vadd.f32 %v986, %v1108
        %v1233 = vadd.f32 %v987, %v1113
        %v1234 = vadd.f32 %v988, %v1116
        %v1235 = vadd.f32 %v989, %v1121
        %v1236 = vadd.f32 %v990, %v1124
        %v1237 = vadd.f32 %v991, %v1129
        %v1238 = vadd.f32 %v992, %v1132
        %v1239 = vadd.f32 %v993, %v1137
        %v1240 = vadd.f32 %v994, %v1140
        %v1241 = vadd.f32 %v995, %v1145
        %v1242 = vadd.f32 %v996, %v1148
        %v1243 = vadd.f32 %v997, %v1153
        %v1244 = vadd.f32 %v998, %v1156
        %v1245 = vadd.f32 %v999, %v1161
        %v1246 = vadd.f32 %v1000, %v1164
        %v1247 = vadd.f32 %v1001, %v1169
        %v1248 = vadd.f32 %v1002, %v1172
        %v1249 = vadd.f32 %v1003, %v1177
        %v1250 = vadd.f32 %v1004, %v1180
        %v1251 = vadd.f32 %v1005, %v1185
        %v1252 = vadd.f32 %v1006, %v1188
        %v1253 = vadd.f32 %v1007, %v1193
        %v1254 = vadd.f32 %v1008, %v1196
        %v1255 = vadd.f32 %v1009, %v1201
        %v1256 = vadd.f32 %v1010, %v1204
        %v1257 = vadd.f32 %v1011, %v1209
        %v1258 = vadd.f32 %v1012, %v1212
        %v1259 = vadd.f32 %v1013, %v1217
        %v1260 = vadd.f32 %v1014, %v1220
        %v1261 = vadd.f32 %v1015, %v1225
        %v1262 = vadd.f32 %v1016, %v1228
        %1263 = vst [vmem:[#allocation2] sm:$0xff] %v1231
        %1264 = vst [vmem:[#allocation2 + $0x8] sm:$0xff] %v1232
        %1265 = vst [vmem:[#allocation2 + $0x10] sm:$0xff] %v1233
        %1266 = vst [vmem:[#allocation2 + $0x18] sm:$0xff] %v1234
        %1267 = vst [vmem:[#allocation2 + $0x20] sm:$0xff] %v1235
        %1268 = vst [vmem:[#allocation2 + $0x28] sm:$0xff] %v1236
        %1269 = vst [vmem:[#allocation2 + $0x30] sm:$0xff] %v1237
        %1270 = vst [vmem:[#allocation2 + $0x38] sm:$0xff] %v1238
        %1271 = vst [vmem:[#allocation2 + $0x40] sm:$0xff] %v1239
        %1272 = vst [vmem:[#allocation2 + $0x48] sm:$0xff] %v1240
        %1273 = vst [vmem:[#allocation2 + $0x50] sm:$0xff] %v1241
        %1274 = vst [vmem:[#allocation2 + $0x58] sm:$0xff] %v1242
        %1275 = vst [vmem:[#allocation2 + $0x60] sm:$0xff] %v1243
        %1276 = vst [vmem:[#allocation2 + $0x68] sm:$0xff] %v1244
        %1277 = vst [vmem:[#allocation2 + $0x70] sm:$0xff] %v1245
        %1278 = vst [vmem:[#allocation2 + $0x78] sm:$0xff] %v1246
        %1279 = vst [vmem:[#allocation2 + $0x80] sm:$0xff] %v1247
        %1280 = vst [vmem:[#allocation2 + $0x88] sm:$0xff] %v1248
        %1281 = vst [vmem:[#allocation2 + $0x90] sm:$0xff] %v1249
        %1282 = vst [vmem:[#allocation2 + $0x98] sm:$0xff] %v1250
        %1283 = vst [vmem:[#allocation2 + $0xa0] sm:$0xff] %v1251
        %1284 = vst [vmem:[#allocation2 + $0xa8] sm:$0xff] %v1252
        %1285 = vst [vmem:[#allocation2 + $0xb0] sm:$0xff] %v1253
        %1286 = vst [vmem:[#allocation2 + $0xb8] sm:$0xff] %v1254
        %1287 = vst [vmem:[#allocation2 + $0xc0] sm:$0xff] %v1255
        %1288 = vst [vmem:[#allocation2 + $0xc8] sm:$0xff] %v1256
        %1289 = vst [vmem:[#allocation2 + $0xd0] sm:$0xff] %v1257
        %1290 = vst [vmem:[#allocation2 + $0xd8] sm:$0xff] %v1258
        %1291 = vst [vmem:[#allocation2 + $0xe0] sm:$0xff] %v1259
        %1292 = vst [vmem:[#allocation2 + $0xe8] sm:$0xff] %v1260
        %1293 = vst [vmem:[#allocation2 + $0xf0] sm:$0xff] %v1261
        %1294 = vst [vmem:[#allocation2 + $0xf8] sm:$0xff] %v1262
        %s1295 = sadd.s32 %s185, 1
        %s1296 = smul.u32 %s1295, 24
        %s1297 = scalar_lea.vmem %s182, %s1296
        %v1298 = vld [vmem:[%s1297] sm:$0xff]
        %v1299 = vld [vmem:[%s1297 + $0x8] sm:$0xff]
        %v1300 = vld [vmem:[%s1297 + $0x18] sm:$0xff]
        %v1301 = vld [vmem:[%s1297 + $0x20] sm:$0xff]
        %v1302 = vld [vmem:[%s1297 + $0x30] sm:$0xff]
        %v1303 = vld [vmem:[%s1297 + $0x38] sm:$0xff]
        %v1304 = vld [vmem:[%s1297 + $0x48] sm:$0xff]
        %v1305 = vld [vmem:[%s1297 + $0x50] sm:$0xff]
        %v1306 = vld [vmem:[%s1297 + $0x60] sm:$0xff]
        %v1307 = vld [vmem:[%s1297 + $0x68] sm:$0xff]
        %v1308 = vld [vmem:[%s1297 + $0x78] sm:$0xff]
        %v1309 = vld [vmem:[%s1297 + $0x80] sm:$0xff]
        %v1310 = vld [vmem:[%s1297 + $0x90] sm:$0xff]
        %v1311 = vld [vmem:[%s1297 + $0x98] sm:$0xff]
        %v1312 = vld [vmem:[%s1297 + $0xa8] sm:$0xff]
        %v1313 = vld [vmem:[%s1297 + $0xb0] sm:$0xff]
        %v1314 = vld [vmem:[%s1297 + $0xc0] sm:$0xff]
        %v1315 = vld [vmem:[%s1297 + $0xc8] sm:$0xff]
        %v1316 = vld [vmem:[%s1297 + $0xd8] sm:$0xff]
        %v1317 = vld [vmem:[%s1297 + $0xe0] sm:$0xff]
        %v1318 = vld [vmem:[%s1297 + $0xf0] sm:$0xff]
        %v1319 = vld [vmem:[%s1297 + $0xf8] sm:$0xff]
        %v1320 = vld [vmem:[%s1297 + $0x108] sm:$0xff]
        %v1321 = vld [vmem:[%s1297 + $0x110] sm:$0xff]
        %v1322 = vld [vmem:[%s1297 + $0x120] sm:$0xff]
        %v1323 = vld [vmem:[%s1297 + $0x128] sm:$0xff]
        %v1324 = vld [vmem:[%s1297 + $0x138] sm:$0xff]
        %v1325 = vld [vmem:[%s1297 + $0x140] sm:$0xff]
        %v1326 = vld [vmem:[%s1297 + $0x150] sm:$0xff]
        %v1327 = vld [vmem:[%s1297 + $0x158] sm:$0xff]
        %v1328 = vld [vmem:[%s1297 + $0x168] sm:$0xff]
        %v1329 = vld [vmem:[%s1297 + $0x170] sm:$0xff]
        %v1330 = vpack.c.bf16 %v1299, %v1298
        %v1331 = vpack.c.bf16 %v1301, %v1300
        %v1332 = vpack.c.bf16 %v1303, %v1302
        %v1333 = vpack.c.bf16 %v1305, %v1304
        %v1334 = vpack.c.bf16 %v1307, %v1306
        %v1335 = vpack.c.bf16 %v1309, %v1308
        %v1336 = vpack.c.bf16 %v1311, %v1310
        %v1337 = vpack.c.bf16 %v1313, %v1312
        %v1338 = vpack.c.bf16 %v1315, %v1314
        %v1339 = vpack.c.bf16 %v1317, %v1316
        %v1340 = vpack.c.bf16 %v1319, %v1318
        %v1341 = vpack.c.bf16 %v1321, %v1320
        %v1342 = vpack.c.bf16 %v1323, %v1322
        %v1343 = vpack.c.bf16 %v1325, %v1324
        %v1344 = vpack.c.bf16 %v1327, %v1326
        %v1345 = vpack.c.bf16 %v1329, %v1328
        %v1346 = vld [vmem:[#allocation2] sm:$0xff]
        %v1347 = vld [vmem:[#allocation2 + $0x8] sm:$0xff]
        %v1348 = vld [vmem:[#allocation2 + $0x10] sm:$0xff]
        %v1349 = vld [vmem:[#allocation2 + $0x18] sm:$0xff]
        %v1350 = vld [vmem:[#allocation2 + $0x20] sm:$0xff]
        %v1351 = vld [vmem:[#allocation2 + $0x28] sm:$0xff]
        %v1352 = vld [vmem:[#allocation2 + $0x30] sm:$0xff]
        %v1353 = vld [vmem:[#allocation2 + $0x38] sm:$0xff]
        %v1354 = vld [vmem:[#allocation2 + $0x40] sm:$0xff]
        %v1355 = vld [vmem:[#allocation2 + $0x48] sm:$0xff]
        %v1356 = vld [vmem:[#allocation2 + $0x50] sm:$0xff]
        %v1357 = vld [vmem:[#allocation2 + $0x58] sm:$0xff]
        %v1358 = vld [vmem:[#allocation2 + $0x60] sm:$0xff]
        %v1359 = vld [vmem:[#allocation2 + $0x68] sm:$0xff]
        %v1360 = vld [vmem:[#allocation2 + $0x70] sm:$0xff]
        %v1361 = vld [vmem:[#allocation2 + $0x78] sm:$0xff]
        %v1362 = vld [vmem:[#allocation2 + $0x80] sm:$0xff]
        %v1363 = vld [vmem:[#allocation2 + $0x88] sm:$0xff]
        %v1364 = vld [vmem:[#allocation2 + $0x90] sm:$0xff]
        %v1365 = vld [vmem:[#allocation2 + $0x98] sm:$0xff]
        %v1366 = vld [vmem:[#allocation2 + $0xa0] sm:$0xff]
        %v1367 = vld [vmem:[#allocation2 + $0xa8] sm:$0xff]
        %v1368 = vld [vmem:[#allocation2 + $0xb0] sm:$0xff]
        %v1369 = vld [vmem:[#allocation2 + $0xb8] sm:$0xff]
        %v1370 = vld [vmem:[#allocation2 + $0xc0] sm:$0xff]
        %v1371 = vld [vmem:[#allocation2 + $0xc8] sm:$0xff]
        %v1372 = vld [vmem:[#allocation2 + $0xd0] sm:$0xff]
        %v1373 = vld [vmem:[#allocation2 + $0xd8] sm:$0xff]
        %v1374 = vld [vmem:[#allocation2 + $0xe0] sm:$0xff]
        %v1375 = vld [vmem:[#allocation2 + $0xe8] sm:$0xff]
        %v1376 = vld [vmem:[#allocation2 + $0xf0] sm:$0xff]
        %v1377 = vld [vmem:[#allocation2 + $0xf8] sm:$0xff]
        %s1378 = scalar_lea.vmem %s1, 6
        %v1379 = vld [vmem:[%s1378] sm:$0x3]
        %v1381 = vsel %vm301, %v1330, 0
        %v1384 = vsel %vm301, %v1331, 0
        %v1387 = vsel %vm301, %v1332, 0
        %v1390 = vsel %vm301, %v1333, 0
        %v1393 = vsel %vm301, %v1334, 0
        %v1396 = vsel %vm301, %v1335, 0
        %v1399 = vsel %vm301, %v1336, 0
        %v1402 = vsel %vm301, %v1337, 0
        %v1405 = vsel %vm301, %v1338, 0
        %v1408 = vsel %vm301, %v1339, 0
        %v1411 = vsel %vm301, %v1340, 0
        %v1414 = vsel %vm301, %v1341, 0
        %v1417 = vsel %vm301, %v1342, 0
        %v1420 = vsel %vm301, %v1343, 0
        %v1423 = vsel %vm301, %v1344, 0
        %v1426 = vsel %vm301, %v1345, 0
        %v1429 = vsel %vm350, %v1379, 0
        %1431 = vmatprep.subr.bf16.mxu0 0
        %1432 = vmatpush1.bf16.msra.mxu0 %v1429
        %1433 = vmatprep.subr.bf16.mxu0 0
        %1434 = vmatpush1.bf16.msra.mxu0 0
        %1435 = vmatprep.subr.bf16.mxu0 0
        %1436 = vmatpush1.bf16.msra.mxu0 0
        %1437 = vmatprep.subr.bf16.mxu0 0
        %1438 = vmatpush1.bf16.msra.mxu0 0
        %1439 = vmatprep.subr.bf16.mxu0 0
        %1440 = vmatpush1.bf16.msra.mxu0 0
        %1441 = vmatprep.subr.bf16.mxu0 0
        %1442 = vmatpush1.bf16.msra.mxu0 0
        %1443 = vmatprep.subr.bf16.mxu0 0
        %1444 = vmatpush1.bf16.msra.mxu0 0
        %1445 = vmatprep.subr.bf16.mxu0 0
        %1446 = vmatpush1.bf16.msra.mxu0 0
        %1447 = vmatprep.subr.bf16.mxu0 0
        %1448 = vmatpush1.bf16.msra.mxu0 0
        %1449 = vmatprep.subr.bf16.mxu0 0
        %1450 = vmatpush1.bf16.msra.mxu0 0
        %1451 = vmatprep.subr.bf16.mxu0 0
        %1452 = vmatpush1.bf16.msra.mxu0 0
        %1453 = vmatprep.subr.bf16.mxu0 0
        %1454 = vmatpush1.bf16.msra.mxu0 0
        %1455 = vmatprep.subr.bf16.mxu0 0
        %1456 = vmatpush1.bf16.msra.mxu0 0
        %1457 = vmatprep.subr.bf16.mxu0 0
        %1458 = vmatpush1.bf16.msra.mxu0 0
        %1459 = vmatprep.subr.bf16.mxu0 0
        %1460 = vmatpush1.bf16.msra.mxu0 0
        %1461 = vmatprep.subr.bf16.mxu0 0
        %1462 = vmatpush1.bf16.msra.mxu0 0
        %1463 = vmatprep.mubr.bf16.mxu0 0
        %1464 = vmatmul.mubr.bf16.gmra.mrb[0].mxu0 %v1381
        %v1465 = vpop.f32.mrb[0].mxu0
        %v1466 = vadd.f32 0.0, %v1465
        %v1467 = vpop.f32.mrb[0].mxu0
        %v1468 = vpop.f32.mrb[0].mxu0
        %v1469 = vadd.f32 0.0, %v1468
        %v1470 = vpop.f32.mrb[0].mxu0
        %1471 = vmatprep.mubr.bf16.mxu0 0
        %1472 = vmatmul.mubr.bf16.gmra.mrb[0].mxu0 %v1384
        %v1473 = vpop.f32.mrb[0].mxu0
        %v1474 = vadd.f32 0.0, %v1473
        %v1475 = vpop.f32.mrb[0].mxu0
        %v1476 = vpop.f32.mrb[0].mxu0
        %v1477 = vadd.f32 0.0, %v1476
        %v1478 = vpop.f32.mrb[0].mxu0
        %1479 = vmatprep.mubr.bf16.mxu0 0
        %1480 = vmatmul.mubr.bf16.gmra.mrb[0].mxu0 %v1387
        %v1481 = vpop.f32.mrb[0].mxu0
        %v1482 = vadd.f32 0.0, %v1481
        %v1483 = vpop.f32.mrb[0].mxu0
        %v1484 = vpop.f32.mrb[0].mxu0
        %v1485 = vadd.f32 0.0, %v1484
        %v1486 = vpop.f32.mrb[0].mxu0
        %1487 = vmatprep.mubr.bf16.mxu0 0
        %1488 = vmatmul.mubr.bf16.gmra.mrb[0].mxu0 %v1390
        %v1489 = vpop.f32.mrb[0].mxu0
        %v1490 = vadd.f32 0.0, %v1489
        %v1491 = vpop.f32.mrb[0].mxu0
        %v1492 = vpop.f32.mrb[0].mxu0
        %v1493 = vadd.f32 0.0, %v1492
        %v1494 = vpop.f32.mrb[0].mxu0
        %1495 = vmatprep.mubr.bf16.mxu0 0
        %1496 = vmatmul.mubr.bf16.gmra.mrb[0].mxu0 %v1393
        %v1497 = vpop.f32.mrb[0].mxu0
        %v1498 = vadd.f32 0.0, %v1497
        %v1499 = vpop.f32.mrb[0].mxu0
        %v1500 = vpop.f32.mrb[0].mxu0
        %v1501 = vadd.f32 0.0, %v1500
        %v1502 = vpop.f32.mrb[0].mxu0
        %1503 = vmatprep.mubr.bf16.mxu0 0
        %1504 = vmatmul.mubr.bf16.gmra.mrb[0].mxu0 %v1396
        %v1505 = vpop.f32.mrb[0].mxu0
        %v1506 = vadd.f32 0.0, %v1505
        %v1507 = vpop.f32.mrb[0].mxu0
        %v1508 = vpop.f32.mrb[0].mxu0
        %v1509 = vadd.f32 0.0, %v1508
        %v1510 = vpop.f32.mrb[0].mxu0
        %1511 = vmatprep.mubr.bf16.mxu0 0
        %1512 = vmatmul.mubr.bf16.gmra.mrb[0].mxu0 %v1399
        %v1513 = vpop.f32.mrb[0].mxu0
        %v1514 = vadd.f32 0.0, %v1513
        %v1515 = vpop.f32.mrb[0].mxu0
        %v1516 = vpop.f32.mrb[0].mxu0
        %v1517 = vadd.f32 0.0, %v1516
        %v1518 = vpop.f32.mrb[0].mxu0
        %1519 = vmatprep.mubr.bf16.mxu0 0
        %1520 = vmatmul.mubr.bf16.gmra.mrb[0].mxu0 %v1402
        %v1521 = vpop.f32.mrb[0].mxu0
        %v1522 = vadd.f32 0.0, %v1521
        %v1523 = vpop.f32.mrb[0].mxu0
        %v1524 = vpop.f32.mrb[0].mxu0
        %v1525 = vadd.f32 0.0, %v1524
        %v1526 = vpop.f32.mrb[0].mxu0
        %1527 = vmatprep.mubr.bf16.mxu0 0
        %1528 = vmatmul.mubr.bf16.gmra.mrb[0].mxu0 %v1405
        %v1529 = vpop.f32.mrb[0].mxu0
        %v1530 = vadd.f32 0.0, %v1529
        %v1531 = vpop.f32.mrb[0].mxu0
        %v1532 = vpop.f32.mrb[0].mxu0
        %v1533 = vadd.f32 0.0, %v1532
        %v1534 = vpop.f32.mrb[0].mxu0
        %1535 = vmatprep.mubr.bf16.mxu0 0
        %1536 = vmatmul.mubr.bf16.gmra.mrb[0].mxu0 %v1408
        %v1537 = vpop.f32.mrb[0].mxu0
        %v1538 = vadd.f32 0.0, %v1537
        %v1539 = vpop.f32.mrb[0].mxu0
        %v1540 = vpop.f32.mrb[0].mxu0
        %v1541 = vadd.f32 0.0, %v1540
        %v1542 = vpop.f32.mrb[0].mxu0
        %1543 = vmatprep.mubr.bf16.mxu0 0
        %1544 = vmatmul.mubr.bf16.gmra.mrb[0].mxu0 %v1411
        %v1545 = vpop.f32.mrb[0].mxu0
        %v1546 = vadd.f32 0.0, %v1545
        %v1547 = vpop.f32.mrb[0].mxu0
        %v1548 = vpop.f32.mrb[0].mxu0
        %v1549 = vadd.f32 0.0, %v1548
        %v1550 = vpop.f32.mrb[0].mxu0
        %1551 = vmatprep.mubr.bf16.mxu0 0
        %1552 = vmatmul.mubr.bf16.gmra.mrb[0].mxu0 %v1414
        %v1553 = vpop.f32.mrb[0].mxu0
        %v1554 = vadd.f32 0.0, %v1553
        %v1555 = vpop.f32.mrb[0].mxu0
        %v1556 = vpop.f32.mrb[0].mxu0
        %v1557 = vadd.f32 0.0, %v1556
        %v1558 = vpop.f32.mrb[0].mxu0
        %1559 = vmatprep.mubr.bf16.mxu0 0
        %1560 = vmatmul.mubr.bf16.gmra.mrb[0].mxu0 %v1417
        %v1561 = vpop.f32.mrb[0].mxu0
        %v1562 = vadd.f32 0.0, %v1561
        %v1563 = vpop.f32.mrb[0].mxu0
        %v1564 = vpop.f32.mrb[0].mxu0
        %v1565 = vadd.f32 0.0, %v1564
        %v1566 = vpop.f32.mrb[0].mxu0
        %1567 = vmatprep.mubr.bf16.mxu0 0
        %1568 = vmatmul.mubr.bf16.gmra.mrb[0].mxu0 %v1420
        %v1569 = vpop.f32.mrb[0].mxu0
        %v1570 = vadd.f32 0.0, %v1569
        %v1571 = vpop.f32.mrb[0].mxu0
        %v1572 = vpop.f32.mrb[0].mxu0
        %v1573 = vadd.f32 0.0, %v1572
        %v1574 = vpop.f32.mrb[0].mxu0
        %1575 = vmatprep.mubr.bf16.mxu0 0
        %1576 = vmatmul.mubr.bf16.gmra.mrb[0].mxu0 %v1423
        %v1577 = vpop.f32.mrb[0].mxu0
        %v1578 = vadd.f32 0.0, %v1577
        %v1579 = vpop.f32.mrb[0].mxu0
        %v1580 = vpop.f32.mrb[0].mxu0
        %v1581 = vadd.f32 0.0, %v1580
        %v1582 = vpop.f32.mrb[0].mxu0
        %1583 = vmatprep.mubr.bf16.mxu0 0
        %1584 = vmatmul.mubr.bf16.gmra.mrb[0].mxu0 %v1426
        %v1585 = vpop.f32.mrb[0].mxu0
        %v1586 = vadd.f32 0.0, %v1585
        %v1587 = vpop.f32.mrb[0].mxu0
        %v1588 = vpop.f32.mrb[0].mxu0
        %v1589 = vadd.f32 0.0, %v1588
        %v1590 = vpop.f32.mrb[0].mxu0
        %1591 = vdwg.mxu0
        %v1592 = vadd.f32 %v1346, %v1466
        %v1593 = vadd.f32 %v1347, %v1469
        %v1594 = vadd.f32 %v1348, %v1474
        %v1595 = vadd.f32 %v1349, %v1477
        %v1596 = vadd.f32 %v1350, %v1482
        %v1597 = vadd.f32 %v1351, %v1485
        %v1598 = vadd.f32 %v1352, %v1490
        %v1599 = vadd.f32 %v1353, %v1493
        %v1600 = vadd.f32 %v1354, %v1498
        %v1601 = vadd.f32 %v1355, %v1501
        %v1602 = vadd.f32 %v1356, %v1506
        %v1603 = vadd.f32 %v1357, %v1509
        %v1604 = vadd.f32 %v1358, %v1514
        %v1605 = vadd.f32 %v1359, %v1517
        %v1606 = vadd.f32 %v1360, %v1522
        %v1607 = vadd.f32 %v1361, %v1525
        %v1608 = vadd.f32 %v1362, %v1530
        %v1609 = vadd.f32 %v1363, %v1533
        %v1610 = vadd.f32 %v1364, %v1538
        %v1611 = vadd.f32 %v1365, %v1541
        %v1612 = vadd.f32 %v1366, %v1546
        %v1613 = vadd.f32 %v1367, %v1549
        %v1614 = vadd.f32 %v1368, %v1554
        %v1615 = vadd.f32 %v1369, %v1557
        %v1616 = vadd.f32 %v1370, %v1562
        %v1617 = vadd.f32 %v1371, %v1565
        %v1618 = vadd.f32 %v1372, %v1570
        %v1619 = vadd.f32 %v1373, %v1573
        %v1620 = vadd.f32 %v1374, %v1578
        %v1621 = vadd.f32 %v1375, %v1581
        %v1622 = vadd.f32 %v1376, %v1586
        %v1623 = vadd.f32 %v1377, %v1589
        %1624 = vst [vmem:[#allocation2] sm:$0xff] %v1592
        %1625 = vst [vmem:[#allocation2 + $0x8] sm:$0xff] %v1593
        %1626 = vst [vmem:[#allocation2 + $0x10] sm:$0xff] %v1594
        %1627 = vst [vmem:[#allocation2 + $0x18] sm:$0xff] %v1595
        %1628 = vst [vmem:[#allocation2 + $0x20] sm:$0xff] %v1596
        %1629 = vst [vmem:[#allocation2 + $0x28] sm:$0xff] %v1597
        %1630 = vst [vmem:[#allocation2 + $0x30] sm:$0xff] %v1598
        %1631 = vst [vmem:[#allocation2 + $0x38] sm:$0xff] %v1599
        %1632 = vst [vmem:[#allocation2 + $0x40] sm:$0xff] %v1600
        %1633 = vst [vmem:[#allocation2 + $0x48] sm:$0xff] %v1601
        %1634 = vst [vmem:[#allocation2 + $0x50] sm:$0xff] %v1602
        %1635 = vst [vmem:[#allocation2 + $0x58] sm:$0xff] %v1603
        %1636 = vst [vmem:[#allocation2 + $0x60] sm:$0xff] %v1604
        %1637 = vst [vmem:[#allocation2 + $0x68] sm:$0xff] %v1605
        %1638 = vst [vmem:[#allocation2 + $0x70] sm:$0xff] %v1606
        %1639 = vst [vmem:[#allocation2 + $0x78] sm:$0xff] %v1607
        %1640 = vst [vmem:[#allocation2 + $0x80] sm:$0xff] %v1608
        %1641 = vst [vmem:[#allocation2 + $0x88] sm:$0xff] %v1609
        %1642 = vst [vmem:[#allocation2 + $0x90] sm:$0xff] %v1610
        %1643 = vst [vmem:[#allocation2 + $0x98] sm:$0xff] %v1611
        %1644 = vst [vmem:[#allocation2 + $0xa0] sm:$0xff] %v1612
        %1645 = vst [vmem:[#allocation2 + $0xa8] sm:$0xff] %v1613
        %1646 = vst [vmem:[#allocation2 + $0xb0] sm:$0xff] %v1614
        %1647 = vst [vmem:[#allocation2 + $0xb8] sm:$0xff] %v1615
        %1648 = vst [vmem:[#allocation2 + $0xc0] sm:$0xff] %v1616
        %1649 = vst [vmem:[#allocation2 + $0xc8] sm:$0xff] %v1617
        %1650 = vst [vmem:[#allocation2 + $0xd0] sm:$0xff] %v1618
        %1651 = vst [vmem:[#allocation2 + $0xd8] sm:$0xff] %v1619
        %1652 = vst [vmem:[#allocation2 + $0xe0] sm:$0xff] %v1620
        %1653 = vst [vmem:[#allocation2 + $0xe8] sm:$0xff] %v1621
        %1654 = vst [vmem:[#allocation2 + $0xf0] sm:$0xff] %v1622
        %1655 = vst [vmem:[#allocation2 + $0xf8] sm:$0xff] %v1623
        %v1656 = vld [vmem:[%s1297 + $0x1] sm:$0xff]
        %v1657 = vld [vmem:[%s1297 + $0x9] sm:$0xff]
        %v1658 = vld [vmem:[%s1297 + $0x19] sm:$0xff]
        %v1659 = vld [vmem:[%s1297 + $0x21] sm:$0xff]
        %v1660 = vld [vmem:[%s1297 + $0x31] sm:$0xff]
        %v1661 = vld [vmem:[%s1297 + $0x39] sm:$0xff]
        %v1662 = vld [vmem:[%s1297 + $0x49] sm:$0xff]
        %v1663 = vld [vmem:[%s1297 + $0x51] sm:$0xff]
        %v1664 = vld [vmem:[%s1297 + $0x61] sm:$0xff]
        %v1665 = vld [vmem:[%s1297 + $0x69] sm:$0xff]
        %v1666 = vld [vmem:[%s1297 + $0x79] sm:$0xff]
        %v1667 = vld [vmem:[%s1297 + $0x81] sm:$0xff]
        %v1668 = vld [vmem:[%s1297 + $0x91] sm:$0xff]
        %v1669 = vld [vmem:[%s1297 + $0x99] sm:$0xff]
        %v1670 = vld [vmem:[%s1297 + $0xa9] sm:$0xff]
        %v1671 = vld [vmem:[%s1297 + $0xb1] sm:$0xff]
        %v1672 = vld [vmem:[%s1297 + $0xc1] sm:$0xff]
        %v1673 = vld [vmem:[%s1297 + $0xc9] sm:$0xff]
        %v1674 = vld [vmem:[%s1297 + $0xd9] sm:$0xff]
        %v1675 = vld [vmem:[%s1297 + $0xe1] sm:$0xff]
        %v1676 = vld [vmem:[%s1297 + $0xf1] sm:$0xff]
        %v1677 = vld [vmem:[%s1297 + $0xf9] sm:$0xff]
        %v1678 = vld [vmem:[%s1297 + $0x109] sm:$0xff]
        %v1679 = vld [vmem:[%s1297 + $0x111] sm:$0xff]
        %v1680 = vld [vmem:[%s1297 + $0x121] sm:$0xff]
        %v1681 = vld [vmem:[%s1297 + $0x129] sm:$0xff]
        %v1682 = vld [vmem:[%s1297 + $0x139] sm:$0xff]
        %v1683 = vld [vmem:[%s1297 + $0x141] sm:$0xff]
        %v1684 = vld [vmem:[%s1297 + $0x151] sm:$0xff]
        %v1685 = vld [vmem:[%s1297 + $0x159] sm:$0xff]
        %v1686 = vld [vmem:[%s1297 + $0x169] sm:$0xff]
        %v1687 = vld [vmem:[%s1297 + $0x171] sm:$0xff]
        %v1688 = vpack.c.bf16 %v1657, %v1656
        %v1689 = vpack.c.bf16 %v1659, %v1658
        %v1690 = vpack.c.bf16 %v1661, %v1660
        %v1691 = vpack.c.bf16 %v1663, %v1662
        %v1692 = vpack.c.bf16 %v1665, %v1664
        %v1693 = vpack.c.bf16 %v1667, %v1666
        %v1694 = vpack.c.bf16 %v1669, %v1668
        %v1695 = vpack.c.bf16 %v1671, %v1670
        %v1696 = vpack.c.bf16 %v1673, %v1672
        %v1697 = vpack.c.bf16 %v1675, %v1674
        %v1698 = vpack.c.bf16 %v1677, %v1676
        %v1699 = vpack.c.bf16 %v1679, %v1678
        %v1700 = vpack.c.bf16 %v1681, %v1680
        %v1701 = vpack.c.bf16 %v1683, %v1682
        %v1702 = vpack.c.bf16 %v1685, %v1684
        %v1703 = vpack.c.bf16 %v1687, %v1686
        %v1704 = vld [vmem:[#allocation2] sm:$0xff]
        %v1705 = vld [vmem:[#allocation2 + $0x8] sm:$0xff]
        %v1706 = vld [vmem:[#allocation2 + $0x10] sm:$0xff]
        %v1707 = vld [vmem:[#allocation2 + $0x18] sm:$0xff]
        %v1708 = vld [vmem:[#allocation2 + $0x20] sm:$0xff]
        %v1709 = vld [vmem:[#allocation2 + $0x28] sm:$0xff]
        %v1710 = vld [vmem:[#allocation2 + $0x30] sm:$0xff]
        %v1711 = vld [vmem:[#allocation2 + $0x38] sm:$0xff]
        %v1712 = vld [vmem:[#allocation2 + $0x40] sm:$0xff]
        %v1713 = vld [vmem:[#allocation2 + $0x48] sm:$0xff]
        %v1714 = vld [vmem:[#allocation2 + $0x50] sm:$0xff]
        %v1715 = vld [vmem:[#allocation2 + $0x58] sm:$0xff]
        %v1716 = vld [vmem:[#allocation2 + $0x60] sm:$0xff]
        %v1717 = vld [vmem:[#allocation2 + $0x68] sm:$0xff]
        %v1718 = vld [vmem:[#allocation2 + $0x70] sm:$0xff]
        %v1719 = vld [vmem:[#allocation2 + $0x78] sm:$0xff]
        %v1720 = vld [vmem:[#allocation2 + $0x80] sm:$0xff]
        %v1721 = vld [vmem:[#allocation2 + $0x88] sm:$0xff]
        %v1722 = vld [vmem:[#allocation2 + $0x90] sm:$0xff]
        %v1723 = vld [vmem:[#allocation2 + $0x98] sm:$0xff]
        %v1724 = vld [vmem:[#allocation2 + $0xa0] sm:$0xff]
        %v1725 = vld [vmem:[#allocation2 + $0xa8] sm:$0xff]
        %v1726 = vld [vmem:[#allocation2 + $0xb0] sm:$0xff]
        %v1727 = vld [vmem:[#allocation2 + $0xb8] sm:$0xff]
        %v1728 = vld [vmem:[#allocation2 + $0xc0] sm:$0xff]
        %v1729 = vld [vmem:[#allocation2 + $0xc8] sm:$0xff]
        %v1730 = vld [vmem:[#allocation2 + $0xd0] sm:$0xff]
        %v1731 = vld [vmem:[#allocation2 + $0xd8] sm:$0xff]
        %v1732 = vld [vmem:[#allocation2 + $0xe0] sm:$0xff]
        %v1733 = vld [vmem:[#allocation2 + $0xe8] sm:$0xff]
        %v1734 = vld [vmem:[#allocation2 + $0xf0] sm:$0xff]
        %v1735 = vld [vmem:[#allocation2 + $0xf8] sm:$0xff]
        %s1736 = scalar_lea.vmem %s1, 8
        %v1737 = vld [vmem:[%s1736] sm:$0x3]
        %v1739 = vsel %vm301, %v1688, 0
        %v1742 = vsel %vm301, %v1689, 0
        %v1745 = vsel %vm301, %v1690, 0
        %v1748 = vsel %vm301, %v1691, 0
        %v1751 = vsel %vm301, %v1692, 0
        %v1754 = vsel %vm301, %v1693, 0
        %v1757 = vsel %vm301, %v1694, 0
        %v1760 = vsel %vm301, %v1695, 0
        %v1763 = vsel %vm301, %v1696, 0
        %v1766 = vsel %vm301, %v1697, 0
        %v1769 = vsel %vm301, %v1698, 0
        %v1772 = vsel %vm301, %v1699, 0
        %v1775 = vsel %vm301, %v1700, 0
        %v1778 = vsel %vm301, %v1701, 0
        %v1781 = vsel %vm301, %v1702, 0
        %v1784 = vsel %vm301, %v1703, 0
        %v1787 = vsel %vm350, %v1737, 0
        %1789 = vmatprep.subr.bf16.mxu0 0
        %1790 = vmatpush1.bf16.msra.mxu0 %v1787
        %1791 = vmatprep.subr.bf16.mxu0 0
        %1792 = vmatpush1.bf16.msra.mxu0 0
        %1793 = vmatprep.subr.bf16.mxu0 0
        %1794 = vmatpush1.bf16.msra.mxu0 0
        %1795 = vmatprep.subr.bf16.mxu0 0
        %1796 = vmatpush1.bf16.msra.mxu0 0
        %1797 = vmatprep.subr.bf16.mxu0 0
        %1798 = vmatpush1.bf16.msra.mxu0 0
        %1799 = vmatprep.subr.bf16.mxu0 0
        %1800 = vmatpush1.bf16.msra.mxu0 0
        %1801 = vmatprep.subr.bf16.mxu0 0
        %1802 = vmatpush1.bf16.msra.mxu0 0
        %1803 = vmatprep.subr.bf16.mxu0 0
        %1804 = vmatpush1.bf16.msra.mxu0 0
        %1805 = vmatprep.subr.bf16.mxu0 0
        %1806 = vmatpush1.bf16.msra.mxu0 0
        %1807 = vmatprep.subr.bf16.mxu0 0
        %1808 = vmatpush1.bf16.msra.mxu0 0
        %1809 = vmatprep.subr.bf16.mxu0 0
        %1810 = vmatpush1.bf16.msra.mxu0 0
        %1811 = vmatprep.subr.bf16.mxu0 0
        %1812 = vmatpush1.bf16.msra.mxu0 0
        %1813 = vmatprep.subr.bf16.mxu0 0
        %1814 = vmatpush1.bf16.msra.mxu0 0
        %1815 = vmatprep.subr.bf16.mxu0 0
        %1816 = vmatpush1.bf16.msra.mxu0 0
        %1817 = vmatprep.subr.bf16.mxu0 0
        %1818 = vmatpush1.bf16.msra.mxu0 0
        %1819 = vmatprep.subr.bf16.mxu0 0
        %1820 = vmatpush1.bf16.msra.mxu0 0
        %1821 = vmatprep.mubr.bf16.mxu0 0
        %1822 = vmatmul.mubr.bf16.gmra.mrb[0].mxu0 %v1739
        %v1823 = vpop.f32.mrb[0].mxu0
        %v1824 = vadd.f32 0.0, %v1823
        %v1825 = vpop.f32.mrb[0].mxu0
        %v1826 = vpop.f32.mrb[0].mxu0
        %v1827 = vadd.f32 0.0, %v1826
        %v1828 = vpop.f32.mrb[0].mxu0
        %1829 = vmatprep.mubr.bf16.mxu0 0
        %1830 = vmatmul.mubr.bf16.gmra.mrb[0].mxu0 %v1742
        %v1831 = vpop.f32.mrb[0].mxu0
        %v1832 = vadd.f32 0.0, %v1831
        %v1833 = vpop.f32.mrb[0].mxu0
        %v1834 = vpop.f32.mrb[0].mxu0
        %v1835 = vadd.f32 0.0, %v1834
        %v1836 = vpop.f32.mrb[0].mxu0
        %1837 = vmatprep.mubr.bf16.mxu0 0
        %1838 = vmatmul.mubr.bf16.gmra.mrb[0].mxu0 %v1745
        %v1839 = vpop.f32.mrb[0].mxu0
        %v1840 = vadd.f32 0.0, %v1839
        %v1841 = vpop.f32.mrb[0].mxu0
        %v1842 = vpop.f32.mrb[0].mxu0
        %v1843 = vadd.f32 0.0, %v1842
        %v1844 = vpop.f32.mrb[0].mxu0
        %1845 = vmatprep.mubr.bf16.mxu0 0
        %1846 = vmatmul.mubr.bf16.gmra.mrb[0].mxu0 %v1748
        %v1847 = vpop.f32.mrb[0].mxu0
        %v1848 = vadd.f32 0.0, %v1847
        %v1849 = vpop.f32.mrb[0].mxu0
        %v1850 = vpop.f32.mrb[0].mxu0
        %v1851 = vadd.f32 0.0, %v1850
        %v1852 = vpop.f32.mrb[0].mxu0
        %1853 = vmatprep.mubr.bf16.mxu0 0
        %1854 = vmatmul.mubr.bf16.gmra.mrb[0].mxu0 %v1751
        %v1855 = vpop.f32.mrb[0].mxu0
        %v1856 = vadd.f32 0.0, %v1855
        %v1857 = vpop.f32.mrb[0].mxu0
        %v1858 = vpop.f32.mrb[0].mxu0
        %v1859 = vadd.f32 0.0, %v1858
        %v1860 = vpop.f32.mrb[0].mxu0
        %1861 = vmatprep.mubr.bf16.mxu0 0
        %1862 = vmatmul.mubr.bf16.gmra.mrb[0].mxu0 %v1754
        %v1863 = vpop.f32.mrb[0].mxu0
        %v1864 = vadd.f32 0.0, %v1863
        %v1865 = vpop.f32.mrb[0].mxu0
        %v1866 = vpop.f32.mrb[0].mxu0
        %v1867 = vadd.f32 0.0, %v1866
        %v1868 = vpop.f32.mrb[0].mxu0
        %1869 = vmatprep.mubr.bf16.mxu0 0
        %1870 = vmatmul.mubr.bf16.gmra.mrb[0].mxu0 %v1757
        %v1871 = vpop.f32.mrb[0].mxu0
        %v1872 = vadd.f32 0.0, %v1871
        %v1873 = vpop.f32.mrb[0].mxu0
        %v1874 = vpop.f32.mrb[0].mxu0
        %v1875 = vadd.f32 0.0, %v1874
        %v1876 = vpop.f32.mrb[0].mxu0
        %1877 = vmatprep.mubr.bf16.mxu0 0
        %1878 = vmatmul.mubr.bf16.gmra.mrb[0].mxu0 %v1760
        %v1879 = vpop.f32.mrb[0].mxu0
        %v1880 = vadd.f32 0.0, %v1879
        %v1881 = vpop.f32.mrb[0].mxu0
        %v1882 = vpop.f32.mrb[0].mxu0
        %v1883 = vadd.f32 0.0, %v1882
        %v1884 = vpop.f32.mrb[0].mxu0
        %1885 = vmatprep.mubr.bf16.mxu0 0
        %1886 = vmatmul.mubr.bf16.gmra.mrb[0].mxu0 %v1763
        %v1887 = vpop.f32.mrb[0].mxu0
        %v1888 = vadd.f32 0.0, %v1887
        %v1889 = vpop.f32.mrb[0].mxu0
        %v1890 = vpop.f32.mrb[0].mxu0
        %v1891 = vadd.f32 0.0, %v1890
        %v1892 = vpop.f32.mrb[0].mxu0
        %1893 = vmatprep.mubr.bf16.mxu0 0
        %1894 = vmatmul.mubr.bf16.gmra.mrb[0].mxu0 %v1766
        %v1895 = vpop.f32.mrb[0].mxu0
        %v1896 = vadd.f32 0.0, %v1895
        %v1897 = vpop.f32.mrb[0].mxu0
        %v1898 = vpop.f32.mrb[0].mxu0
        %v1899 = vadd.f32 0.0, %v1898
        %v1900 = vpop.f32.mrb[0].mxu0
        %1901 = vmatprep.mubr.bf16.mxu0 0
        %1902 = vmatmul.mubr.bf16.gmra.mrb[0].mxu0 %v1769
        %v1903 = vpop.f32.mrb[0].mxu0
        %v1904 = vadd.f32 0.0, %v1903
        %v1905 = vpop.f32.mrb[0].mxu0
        %v1906 = vpop.f32.mrb[0].mxu0
        %v1907 = vadd.f32 0.0, %v1906
        %v1908 = vpop.f32.mrb[0].mxu0
        %1909 = vmatprep.mubr.bf16.mxu0 0
        %1910 = vmatmul.mubr.bf16.gmra.mrb[0].mxu0 %v1772
        %v1911 = vpop.f32.mrb[0].mxu0
        %v1912 = vadd.f32 0.0, %v1911
        %v1913 = vpop.f32.mrb[0].mxu0
        %v1914 = vpop.f32.mrb[0].mxu0
        %v1915 = vadd.f32 0.0, %v1914
        %v1916 = vpop.f32.mrb[0].mxu0
        %1917 = vmatprep.mubr.bf16.mxu0 0
        %1918 = vmatmul.mubr.bf16.gmra.mrb[0].mxu0 %v1775
        %v1919 = vpop.f32.mrb[0].mxu0
        %v1920 = vadd.f32 0.0, %v1919
        %v1921 = vpop.f32.mrb[0].mxu0
        %v1922 = vpop.f32.mrb[0].mxu0
        %v1923 = vadd.f32 0.0, %v1922
        %v1924 = vpop.f32.mrb[0].mxu0
        %1925 = vmatprep.mubr.bf16.mxu0 0
        %1926 = vmatmul.mubr.bf16.gmra.mrb[0].mxu0 %v1778
        %v1927 = vpop.f32.mrb[0].mxu0
        %v1928 = vadd.f32 0.0, %v1927
        %v1929 = vpop.f32.mrb[0].mxu0
        %v1930 = vpop.f32.mrb[0].mxu0
        %v1931 = vadd.f32 0.0, %v1930
        %v1932 = vpop.f32.mrb[0].mxu0
        %1933 = vmatprep.mubr.bf16.mxu0 0
        %1934 = vmatmul.mubr.bf16.gmra.mrb[0].mxu0 %v1781
        %v1935 = vpop.f32.mrb[0].mxu0
        %v1936 = vadd.f32 0.0, %v1935
        %v1937 = vpop.f32.mrb[0].mxu0
        %v1938 = vpop.f32.mrb[0].mxu0
        %v1939 = vadd.f32 0.0, %v1938
        %v1940 = vpop.f32.mrb[0].mxu0
        %1941 = vmatprep.mubr.bf16.mxu0 0
        %1942 = vmatmul.mubr.bf16.gmra.mrb[0].mxu0 %v1784
        %v1943 = vpop.f32.mrb[0].mxu0
        %v1944 = vadd.f32 0.0, %v1943
        %v1945 = vpop.f32.mrb[0].mxu0
        %v1946 = vpop.f32.mrb[0].mxu0
        %v1947 = vadd.f32 0.0, %v1946
        %v1948 = vpop.f32.mrb[0].mxu0
        %1949 = vdwg.mxu0
        %v1950 = vadd.f32 %v1704, %v1824
        %v1951 = vadd.f32 %v1705, %v1827
        %v1952 = vadd.f32 %v1706, %v1832
        %v1953 = vadd.f32 %v1707, %v1835
        %v1954 = vadd.f32 %v1708, %v1840
        %v1955 = vadd.f32 %v1709, %v1843
        %v1956 = vadd.f32 %v1710, %v1848
        %v1957 = vadd.f32 %v1711, %v1851
        %v1958 = vadd.f32 %v1712, %v1856
        %v1959 = vadd.f32 %v1713, %v1859
        %v1960 = vadd.f32 %v1714, %v1864
        %v1961 = vadd.f32 %v1715, %v1867
        %v1962 = vadd.f32 %v1716, %v1872
        %v1963 = vadd.f32 %v1717, %v1875
        %v1964 = vadd.f32 %v1718, %v1880
        %v1965 = vadd.f32 %v1719, %v1883
        %v1966 = vadd.f32 %v1720, %v1888
        %v1967 = vadd.f32 %v1721, %v1891
        %v1968 = vadd.f32 %v1722, %v1896
        %v1969 = vadd.f32 %v1723, %v1899
        %v1970 = vadd.f32 %v1724, %v1904
        %v1971 = vadd.f32 %v1725, %v1907
        %v1972 = vadd.f32 %v1726, %v1912
        %v1973 = vadd.f32 %v1727, %v1915
        %v1974 = vadd.f32 %v1728, %v1920
        %v1975 = vadd.f32 %v1729, %v1923
        %v1976 = vadd.f32 %v1730, %v1928
        %v1977 = vadd.f32 %v1731, %v1931
        %v1978 = vadd.f32 %v1732, %v1936
        %v1979 = vadd.f32 %v1733, %v1939
        %v1980 = vadd.f32 %v1734, %v1944
        %v1981 = vadd.f32 %v1735, %v1947
        %1982 = vst [vmem:[#allocation2] sm:$0xff] %v1950
        %1983 = vst [vmem:[#allocation2 + $0x8] sm:$0xff] %v1951
        %1984 = vst [vmem:[#allocation2 + $0x10] sm:$0xff] %v1952
        %1985 = vst [vmem:[#allocation2 + $0x18] sm:$0xff] %v1953
        %1986 = vst [vmem:[#allocation2 + $0x20] sm:$0xff] %v1954
        %1987 = vst [vmem:[#allocation2 + $0x28] sm:$0xff] %v1955
        %1988 = vst [vmem:[#allocation2 + $0x30] sm:$0xff] %v1956
        %1989 = vst [vmem:[#allocation2 + $0x38] sm:$0xff] %v1957
        %1990 = vst [vmem:[#allocation2 + $0x40] sm:$0xff] %v1958
        %1991 = vst [vmem:[#allocation2 + $0x48] sm:$0xff] %v1959
        %1992 = vst [vmem:[#allocation2 + $0x50] sm:$0xff] %v1960
        %1993 = vst [vmem:[#allocation2 + $0x58] sm:$0xff] %v1961
        %1994 = vst [vmem:[#allocation2 + $0x60] sm:$0xff] %v1962
        %1995 = vst [vmem:[#allocation2 + $0x68] sm:$0xff] %v1963
        %1996 = vst [vmem:[#allocation2 + $0x70] sm:$0xff] %v1964
        %1997 = vst [vmem:[#allocation2 + $0x78] sm:$0xff] %v1965
        %1998 = vst [vmem:[#allocation2 + $0x80] sm:$0xff] %v1966
        %1999 = vst [vmem:[#allocation2 + $0x88] sm:$0xff] %v1967
        %2000 = vst [vmem:[#allocation2 + $0x90] sm:$0xff] %v1968
        %2001 = vst [vmem:[#allocation2 + $0x98] sm:$0xff] %v1969
        %2002 = vst [vmem:[#allocation2 + $0xa0] sm:$0xff] %v1970
        %2003 = vst [vmem:[#allocation2 + $0xa8] sm:$0xff] %v1971
        %2004 = vst [vmem:[#allocation2 + $0xb0] sm:$0xff] %v1972
        %2005 = vst [vmem:[#allocation2 + $0xb8] sm:$0xff] %v1973
        %2006 = vst [vmem:[#allocation2 + $0xc0] sm:$0xff] %v1974
        %2007 = vst [vmem:[#allocation2 + $0xc8] sm:$0xff] %v1975
        %2008 = vst [vmem:[#allocation2 + $0xd0] sm:$0xff] %v1976
        %2009 = vst [vmem:[#allocation2 + $0xd8] sm:$0xff] %v1977
        %2010 = vst [vmem:[#allocation2 + $0xe0] sm:$0xff] %v1978
        %2011 = vst [vmem:[#allocation2 + $0xe8] sm:$0xff] %v1979
        %2012 = vst [vmem:[#allocation2 + $0xf0] sm:$0xff] %v1980
        %2013 = vst [vmem:[#allocation2 + $0xf8] sm:$0xff] %v1981
        %v2014 = vld [vmem:[%s1297 + $0x2] sm:$0xff]
        %v2015 = vld [vmem:[%s1297 + $0xa] sm:$0xff]
        %v2016 = vld [vmem:[%s1297 + $0x1a] sm:$0xff]
        %v2017 = vld [vmem:[%s1297 + $0x22] sm:$0xff]
        %v2018 = vld [vmem:[%s1297 + $0x32] sm:$0xff]
        %v2019 = vld [vmem:[%s1297 + $0x3a] sm:$0xff]
        %v2020 = vld [vmem:[%s1297 + $0x4a] sm:$0xff]
        %v2021 = vld [vmem:[%s1297 + $0x52] sm:$0xff]
        %v2022 = vld [vmem:[%s1297 + $0x62] sm:$0xff]
        %v2023 = vld [vmem:[%s1297 + $0x6a] sm:$0xff]
        %v2024 = vld [vmem:[%s1297 + $0x7a] sm:$0xff]
        %v2025 = vld [vmem:[%s1297 + $0x82] sm:$0xff]
        %v2026 = vld [vmem:[%s1297 + $0x92] sm:$0xff]
        %v2027 = vld [vmem:[%s1297 + $0x9a] sm:$0xff]
        %v2028 = vld [vmem:[%s1297 + $0xaa] sm:$0xff]
        %v2029 = vld [vmem:[%s1297 + $0xb2] sm:$0xff]
        %v2030 = vld [vmem:[%s1297 + $0xc2] sm:$0xff]
        %v2031 = vld [vmem:[%s1297 + $0xca] sm:$0xff]
        %v2032 = vld [vmem:[%s1297 + $0xda] sm:$0xff]
        %v2033 = vld [vmem:[%s1297 + $0xe2] sm:$0xff]
        %v2034 = vld [vmem:[%s1297 + $0xf2] sm:$0xff]
        %v2035 = vld [vmem:[%s1297 + $0xfa] sm:$0xff]
        %v2036 = vld [vmem:[%s1297 + $0x10a] sm:$0xff]
        %v2037 = vld [vmem:[%s1297 + $0x112] sm:$0xff]
        %v2038 = vld [vmem:[%s1297 + $0x122] sm:$0xff]
        %v2039 = vld [vmem:[%s1297 + $0x12a] sm:$0xff]
        %v2040 = vld [vmem:[%s1297 + $0x13a] sm:$0xff]
        %v2041 = vld [vmem:[%s1297 + $0x142] sm:$0xff]
        %v2042 = vld [vmem:[%s1297 + $0x152] sm:$0xff]
        %v2043 = vld [vmem:[%s1297 + $0x15a] sm:$0xff]
        %v2044 = vld [vmem:[%s1297 + $0x16a] sm:$0xff]
        %v2045 = vld [vmem:[%s1297 + $0x172] sm:$0xff]
        %v2046 = vpack.c.bf16 %v2015, %v2014
        %v2047 = vpack.c.bf16 %v2017, %v2016
        %v2048 = vpack.c.bf16 %v2019, %v2018
        %v2049 = vpack.c.bf16 %v2021, %v2020
        %v2050 = vpack.c.bf16 %v2023, %v2022
        %v2051 = vpack.c.bf16 %v2025, %v2024
        %v2052 = vpack.c.bf16 %v2027, %v2026
        %v2053 = vpack.c.bf16 %v2029, %v2028
        %v2054 = vpack.c.bf16 %v2031, %v2030
        %v2055 = vpack.c.bf16 %v2033, %v2032
        %v2056 = vpack.c.bf16 %v2035, %v2034
        %v2057 = vpack.c.bf16 %v2037, %v2036
        %v2058 = vpack.c.bf16 %v2039, %v2038
        %v2059 = vpack.c.bf16 %v2041, %v2040
        %v2060 = vpack.c.bf16 %v2043, %v2042
        %v2061 = vpack.c.bf16 %v2045, %v2044
        %v2062 = vld [vmem:[#allocation2] sm:$0xff]
        %v2063 = vld [vmem:[#allocation2 + $0x8] sm:$0xff]
        %v2064 = vld [vmem:[#allocation2 + $0x10] sm:$0xff]
        %v2065 = vld [vmem:[#allocation2 + $0x18] sm:$0xff]
        %v2066 = vld [vmem:[#allocation2 + $0x20] sm:$0xff]
        %v2067 = vld [vmem:[#allocation2 + $0x28] sm:$0xff]
        %v2068 = vld [vmem:[#allocation2 + $0x30] sm:$0xff]
        %v2069 = vld [vmem:[#allocation2 + $0x38] sm:$0xff]
        %v2070 = vld [vmem:[#allocation2 + $0x40] sm:$0xff]
        %v2071 = vld [vmem:[#allocation2 + $0x48] sm:$0xff]
        %v2072 = vld [vmem:[#allocation2 + $0x50] sm:$0xff]
        %v2073 = vld [vmem:[#allocation2 + $0x58] sm:$0xff]
        %v2074 = vld [vmem:[#allocation2 + $0x60] sm:$0xff]
        %v2075 = vld [vmem:[#allocation2 + $0x68] sm:$0xff]
        %v2076 = vld [vmem:[#allocation2 + $0x70] sm:$0xff]
        %v2077 = vld [vmem:[#allocation2 + $0x78] sm:$0xff]
        %v2078 = vld [vmem:[#allocation2 + $0x80] sm:$0xff]
        %v2079 = vld [vmem:[#allocation2 + $0x88] sm:$0xff]
        %v2080 = vld [vmem:[#allocation2 + $0x90] sm:$0xff]
        %v2081 = vld [vmem:[#allocation2 + $0x98] sm:$0xff]
        %v2082 = vld [vmem:[#allocation2 + $0xa0] sm:$0xff]
        %v2083 = vld [vmem:[#allocation2 + $0xa8] sm:$0xff]
        %v2084 = vld [vmem:[#allocation2 + $0xb0] sm:$0xff]
        %v2085 = vld [vmem:[#allocation2 + $0xb8] sm:$0xff]
        %v2086 = vld [vmem:[#allocation2 + $0xc0] sm:$0xff]
        %v2087 = vld [vmem:[#allocation2 + $0xc8] sm:$0xff]
        %v2088 = vld [vmem:[#allocation2 + $0xd0] sm:$0xff]
        %v2089 = vld [vmem:[#allocation2 + $0xd8] sm:$0xff]
        %v2090 = vld [vmem:[#allocation2 + $0xe0] sm:$0xff]
        %v2091 = vld [vmem:[#allocation2 + $0xe8] sm:$0xff]
        %v2092 = vld [vmem:[#allocation2 + $0xf0] sm:$0xff]
        %v2093 = vld [vmem:[#allocation2 + $0xf8] sm:$0xff]
        %s2094 = scalar_lea.vmem %s1, 10
        %v2095 = vld [vmem:[%s2094] sm:$0x3]
        %v2097 = vsel %vm301, %v2046, 0
        %v2100 = vsel %vm301, %v2047, 0
        %v2103 = vsel %vm301, %v2048, 0
        %v2106 = vsel %vm301, %v2049, 0
        %v2109 = vsel %vm301, %v2050, 0
        %v2112 = vsel %vm301, %v2051, 0
        %v2115 = vsel %vm301, %v2052, 0
        %v2118 = vsel %vm301, %v2053, 0
        %v2121 = vsel %vm301, %v2054, 0
        %v2124 = vsel %vm301, %v2055, 0
        %v2127 = vsel %vm301, %v2056, 0
        %v2130 = vsel %vm301, %v2057, 0
        %v2133 = vsel %vm301, %v2058, 0
        %v2136 = vsel %vm301, %v2059, 0
        %v2139 = vsel %vm301, %v2060, 0
        %v2142 = vsel %vm301, %v2061, 0
        %v2145 = vsel %vm350, %v2095, 0
        %2147 = vmatprep.subr.bf16.mxu0 0
        %2148 = vmatpush1.bf16.msra.mxu0 %v2145
        %2149 = vmatprep.subr.bf16.mxu0 0
        %2150 = vmatpush1.bf16.msra.mxu0 0
        %2151 = vmatprep.subr.bf16.mxu0 0
        %2152 = vmatpush1.bf16.msra.mxu0 0
        %2153 = vmatprep.subr.bf16.mxu0 0
        %2154 = vmatpush1.bf16.msra.mxu0 0
        %2155 = vmatprep.subr.bf16.mxu0 0
        %2156 = vmatpush1.bf16.msra.mxu0 0
        %2157 = vmatprep.subr.bf16.mxu0 0
        %2158 = vmatpush1.bf16.msra.mxu0 0
        %2159 = vmatprep.subr.bf16.mxu0 0
        %2160 = vmatpush1.bf16.msra.mxu0 0
        %2161 = vmatprep.subr.bf16.mxu0 0
        %2162 = vmatpush1.bf16.msra.mxu0 0
        %2163 = vmatprep.subr.bf16.mxu0 0
        %2164 = vmatpush1.bf16.msra.mxu0 0
        %2165 = vmatprep.subr.bf16.mxu0 0
        %2166 = vmatpush1.bf16.msra.mxu0 0
        %2167 = vmatprep.subr.bf16.mxu0 0
        %2168 = vmatpush1.bf16.msra.mxu0 0
        %2169 = vmatprep.subr.bf16.mxu0 0
        %2170 = vmatpush1.bf16.msra.mxu0 0
        %2171 = vmatprep.subr.bf16.mxu0 0
        %2172 = vmatpush1.bf16.msra.mxu0 0
        %2173 = vmatprep.subr.bf16.mxu0 0
        %2174 = vmatpush1.bf16.msra.mxu0 0
        %2175 = vmatprep.subr.bf16.mxu0 0
        %2176 = vmatpush1.bf16.msra.mxu0 0
        %2177 = vmatprep.subr.bf16.mxu0 0
        %2178 = vmatpush1.bf16.msra.mxu0 0
        %2179 = vmatprep.mubr.bf16.mxu0 0
        %2180 = vmatmul.mubr.bf16.gmra.mrb[0].mxu0 %v2097
        %v2181 = vpop.f32.mrb[0].mxu0
        %v2182 = vadd.f32 0.0, %v2181
        %v2183 = vpop.f32.mrb[0].mxu0
        %v2184 = vpop.f32.mrb[0].mxu0
        %v2185 = vadd.f32 0.0, %v2184
        %v2186 = vpop.f32.mrb[0].mxu0
        %2187 = vmatprep.mubr.bf16.mxu0 0
        %2188 = vmatmul.mubr.bf16.gmra.mrb[0].mxu0 %v2100
        %v2189 = vpop.f32.mrb[0].mxu0
        %v2190 = vadd.f32 0.0, %v2189
        %v2191 = vpop.f32.mrb[0].mxu0
        %v2192 = vpop.f32.mrb[0].mxu0
        %v2193 = vadd.f32 0.0, %v2192
        %v2194 = vpop.f32.mrb[0].mxu0
        %2195 = vmatprep.mubr.bf16.mxu0 0
        %2196 = vmatmul.mubr.bf16.gmra.mrb[0].mxu0 %v2103
        %v2197 = vpop.f32.mrb[0].mxu0
        %v2198 = vadd.f32 0.0, %v2197
        %v2199 = vpop.f32.mrb[0].mxu0
        %v2200 = vpop.f32.mrb[0].mxu0
        %v2201 = vadd.f32 0.0, %v2200
        %v2202 = vpop.f32.mrb[0].mxu0
        %2203 = vmatprep.mubr.bf16.mxu0 0
        %2204 = vmatmul.mubr.bf16.gmra.mrb[0].mxu0 %v2106
        %v2205 = vpop.f32.mrb[0].mxu0
        %v2206 = vadd.f32 0.0, %v2205
        %v2207 = vpop.f32.mrb[0].mxu0
        %v2208 = vpop.f32.mrb[0].mxu0
        %v2209 = vadd.f32 0.0, %v2208
        %v2210 = vpop.f32.mrb[0].mxu0
        %2211 = vmatprep.mubr.bf16.mxu0 0
        %2212 = vmatmul.mubr.bf16.gmra.mrb[0].mxu0 %v2109
        %v2213 = vpop.f32.mrb[0].mxu0
        %v2214 = vadd.f32 0.0, %v2213
        %v2215 = vpop.f32.mrb[0].mxu0
        %v2216 = vpop.f32.mrb[0].mxu0
        %v2217 = vadd.f32 0.0, %v2216
        %v2218 = vpop.f32.mrb[0].mxu0
        %2219 = vmatprep.mubr.bf16.mxu0 0
        %2220 = vmatmul.mubr.bf16.gmra.mrb[0].mxu0 %v2112
        %v2221 = vpop.f32.mrb[0].mxu0
        %v2222 = vadd.f32 0.0, %v2221
        %v2223 = vpop.f32.mrb[0].mxu0
        %v2224 = vpop.f32.mrb[0].mxu0
        %v2225 = vadd.f32 0.0, %v2224
        %v2226 = vpop.f32.mrb[0].mxu0
        %2227 = vmatprep.mubr.bf16.mxu0 0
        %2228 = vmatmul.mubr.bf16.gmra.mrb[0].mxu0 %v2115
        %v2229 = vpop.f32.mrb[0].mxu0
        %v2230 = vadd.f32 0.0, %v2229
        %v2231 = vpop.f32.mrb[0].mxu0
        %v2232 = vpop.f32.mrb[0].mxu0
        %v2233 = vadd.f32 0.0, %v2232
        %v2234 = vpop.f32.mrb[0].mxu0
        %2235 = vmatprep.mubr.bf16.mxu0 0
        %2236 = vmatmul.mubr.bf16.gmra.mrb[0].mxu0 %v2118
        %v2237 = vpop.f32.mrb[0].mxu0
        %v2238 = vadd.f32 0.0, %v2237
        %v2239 = vpop.f32.mrb[0].mxu0
        %v2240 = vpop.f32.mrb[0].mxu0
        %v2241 = vadd.f32 0.0, %v2240
        %v2242 = vpop.f32.mrb[0].mxu0
        %2243 = vmatprep.mubr.bf16.mxu0 0
        %2244 = vmatmul.mubr.bf16.gmra.mrb[0].mxu0 %v2121
        %v2245 = vpop.f32.mrb[0].mxu0
        %v2246 = vadd.f32 0.0, %v2245
        %v2247 = vpop.f32.mrb[0].mxu0
        %v2248 = vpop.f32.mrb[0].mxu0
        %v2249 = vadd.f32 0.0, %v2248
        %v2250 = vpop.f32.mrb[0].mxu0
        %2251 = vmatprep.mubr.bf16.mxu0 0
        %2252 = vmatmul.mubr.bf16.gmra.mrb[0].mxu0 %v2124
        %v2253 = vpop.f32.mrb[0].mxu0
        %v2254 = vadd.f32 0.0, %v2253
        %v2255 = vpop.f32.mrb[0].mxu0
        %v2256 = vpop.f32.mrb[0].mxu0
        %v2257 = vadd.f32 0.0, %v2256
        %v2258 = vpop.f32.mrb[0].mxu0
        %2259 = vmatprep.mubr.bf16.mxu0 0
        %2260 = vmatmul.mubr.bf16.gmra.mrb[0].mxu0 %v2127
        %v2261 = vpop.f32.mrb[0].mxu0
        %v2262 = vadd.f32 0.0, %v2261
        %v2263 = vpop.f32.mrb[0].mxu0
        %v2264 = vpop.f32.mrb[0].mxu0
        %v2265 = vadd.f32 0.0, %v2264
        %v2266 = vpop.f32.mrb[0].mxu0
        %2267 = vmatprep.mubr.bf16.mxu0 0
        %2268 = vmatmul.mubr.bf16.gmra.mrb[0].mxu0 %v2130
        %v2269 = vpop.f32.mrb[0].mxu0
        %v2270 = vadd.f32 0.0, %v2269
        %v2271 = vpop.f32.mrb[0].mxu0
        %v2272 = vpop.f32.mrb[0].mxu0
        %v2273 = vadd.f32 0.0, %v2272
        %v2274 = vpop.f32.mrb[0].mxu0
        %2275 = vmatprep.mubr.bf16.mxu0 0
        %2276 = vmatmul.mubr.bf16.gmra.mrb[0].mxu0 %v2133
        %v2277 = vpop.f32.mrb[0].mxu0
        %v2278 = vadd.f32 0.0, %v2277
        %v2279 = vpop.f32.mrb[0].mxu0
        %v2280 = vpop.f32.mrb[0].mxu0
        %v2281 = vadd.f32 0.0, %v2280
        %v2282 = vpop.f32.mrb[0].mxu0
        %2283 = vmatprep.mubr.bf16.mxu0 0
        %2284 = vmatmul.mubr.bf16.gmra.mrb[0].mxu0 %v2136
        %v2285 = vpop.f32.mrb[0].mxu0
        %v2286 = vadd.f32 0.0, %v2285
        %v2287 = vpop.f32.mrb[0].mxu0
        %v2288 = vpop.f32.mrb[0].mxu0
        %v2289 = vadd.f32 0.0, %v2288
        %v2290 = vpop.f32.mrb[0].mxu0
        %2291 = vmatprep.mubr.bf16.mxu0 0
        %2292 = vmatmul.mubr.bf16.gmra.mrb[0].mxu0 %v2139
        %v2293 = vpop.f32.mrb[0].mxu0
        %v2294 = vadd.f32 0.0, %v2293
        %v2295 = vpop.f32.mrb[0].mxu0
        %v2296 = vpop.f32.mrb[0].mxu0
        %v2297 = vadd.f32 0.0, %v2296
        %v2298 = vpop.f32.mrb[0].mxu0
        %2299 = vmatprep.mubr.bf16.mxu0 0
        %2300 = vmatmul.mubr.bf16.gmra.mrb[0].mxu0 %v2142
        %v2301 = vpop.f32.mrb[0].mxu0
        %v2302 = vadd.f32 0.0, %v2301
        %v2303 = vpop.f32.mrb[0].mxu0
        %v2304 = vpop.f32.mrb[0].mxu0
        %v2305 = vadd.f32 0.0, %v2304
        %v2306 = vpop.f32.mrb[0].mxu0
        %2307 = vdwg.mxu0
        %v2308 = vadd.f32 %v2062, %v2182
        %v2309 = vadd.f32 %v2063, %v2185
        %v2310 = vadd.f32 %v2064, %v2190
        %v2311 = vadd.f32 %v2065, %v2193
        %v2312 = vadd.f32 %v2066, %v2198
        %v2313 = vadd.f32 %v2067, %v2201
        %v2314 = vadd.f32 %v2068, %v2206
        %v2315 = vadd.f32 %v2069, %v2209
        %v2316 = vadd.f32 %v2070, %v2214
        %v2317 = vadd.f32 %v2071, %v2217
        %v2318 = vadd.f32 %v2072, %v2222
        %v2319 = vadd.f32 %v2073, %v2225
        %v2320 = vadd.f32 %v2074, %v2230
        %v2321 = vadd.f32 %v2075, %v2233
        %v2322 = vadd.f32 %v2076, %v2238
        %v2323 = vadd.f32 %v2077, %v2241
        %v2324 = vadd.f32 %v2078, %v2246
        %v2325 = vadd.f32 %v2079, %v2249
        %v2326 = vadd.f32 %v2080, %v2254
        %v2327 = vadd.f32 %v2081, %v2257
        %v2328 = vadd.f32 %v2082, %v2262
        %v2329 = vadd.f32 %v2083, %v2265
        %v2330 = vadd.f32 %v2084, %v2270
        %v2331 = vadd.f32 %v2085, %v2273
        %v2332 = vadd.f32 %v2086, %v2278
        %v2333 = vadd.f32 %v2087, %v2281
        %v2334 = vadd.f32 %v2088, %v2286
        %v2335 = vadd.f32 %v2089, %v2289
        %v2336 = vadd.f32 %v2090, %v2294
        %v2337 = vadd.f32 %v2091, %v2297
        %v2338 = vadd.f32 %v2092, %v2302
        %v2339 = vadd.f32 %v2093, %v2305
        %2340 = vst [vmem:[#allocation2] sm:$0xff] %v2308
        %2341 = vst [vmem:[#allocation2 + $0x8] sm:$0xff] %v2309
        %2342 = vst [vmem:[#allocation2 + $0x10] sm:$0xff] %v2310
        %2343 = vst [vmem:[#allocation2 + $0x18] sm:$0xff] %v2311
        %2344 = vst [vmem:[#allocation2 + $0x20] sm:$0xff] %v2312
        %2345 = vst [vmem:[#allocation2 + $0x28] sm:$0xff] %v2313
        %2346 = vst [vmem:[#allocation2 + $0x30] sm:$0xff] %v2314
        %2347 = vst [vmem:[#allocation2 + $0x38] sm:$0xff] %v2315
        %2348 = vst [vmem:[#allocation2 + $0x40] sm:$0xff] %v2316
        %2349 = vst [vmem:[#allocation2 + $0x48] sm:$0xff] %v2317
        %2350 = vst [vmem:[#allocation2 + $0x50] sm:$0xff] %v2318
        %2351 = vst [vmem:[#allocation2 + $0x58] sm:$0xff] %v2319
        %2352 = vst [vmem:[#allocation2 + $0x60] sm:$0xff] %v2320
        %2353 = vst [vmem:[#allocation2 + $0x68] sm:$0xff] %v2321
        %2354 = vst [vmem:[#allocation2 + $0x70] sm:$0xff] %v2322
        %2355 = vst [vmem:[#allocation2 + $0x78] sm:$0xff] %v2323
        %2356 = vst [vmem:[#allocation2 + $0x80] sm:$0xff] %v2324
        %2357 = vst [vmem:[#allocation2 + $0x88] sm:$0xff] %v2325
        %2358 = vst [vmem:[#allocation2 + $0x90] sm:$0xff] %v2326
        %2359 = vst [vmem:[#allocation2 + $0x98] sm:$0xff] %v2327
        %2360 = vst [vmem:[#allocation2 + $0xa0] sm:$0xff] %v2328
        %2361 = vst [vmem:[#allocation2 + $0xa8] sm:$0xff] %v2329
        %2362 = vst [vmem:[#allocation2 + $0xb0] sm:$0xff] %v2330
        %2363 = vst [vmem:[#allocation2 + $0xb8] sm:$0xff] %v2331
        %2364 = vst [vmem:[#allocation2 + $0xc0] sm:$0xff] %v2332
        %2365 = vst [vmem:[#allocation2 + $0xc8] sm:$0xff] %v2333
        %2366 = vst [vmem:[#allocation2 + $0xd0] sm:$0xff] %v2334
        %2367 = vst [vmem:[#allocation2 + $0xd8] sm:$0xff] %v2335
        %2368 = vst [vmem:[#allocation2 + $0xe0] sm:$0xff] %v2336
        %2369 = vst [vmem:[#allocation2 + $0xe8] sm:$0xff] %v2337
        %2370 = vst [vmem:[#allocation2 + $0xf0] sm:$0xff] %v2338
        %2371 = vst [vmem:[#allocation2 + $0xf8] sm:$0xff] %v2339
        %s2372 = sadd.s32 %s185, 2
        %s2373 = smul.u32 %s2372, 24
        %s2374 = scalar_lea.vmem %s182, %s2373
        %v2375 = vld [vmem:[%s2374] sm:$0xff]
        %v2376 = vld [vmem:[%s2374 + $0x8] sm:$0xff]
        %v2377 = vld [vmem:[%s2374 + $0x18] sm:$0xff]
        %v2378 = vld [vmem:[%s2374 + $0x20] sm:$0xff]
        %v2379 = vld [vmem:[%s2374 + $0x30] sm:$0xff]
        %v2380 = vld [vmem:[%s2374 + $0x38] sm:$0xff]
        %v2381 = vld [vmem:[%s2374 + $0x48] sm:$0xff]
        %v2382 = vld [vmem:[%s2374 + $0x50] sm:$0xff]
        %v2383 = vld [vmem:[%s2374 + $0x60] sm:$0xff]
        %v2384 = vld [vmem:[%s2374 + $0x68] sm:$0xff]
        %v2385 = vld [vmem:[%s2374 + $0x78] sm:$0xff]
        %v2386 = vld [vmem:[%s2374 + $0x80] sm:$0xff]
        %v2387 = vld [vmem:[%s2374 + $0x90] sm:$0xff]
        %v2388 = vld [vmem:[%s2374 + $0x98] sm:$0xff]
        %v2389 = vld [vmem:[%s2374 + $0xa8] sm:$0xff]
        %v2390 = vld [vmem:[%s2374 + $0xb0] sm:$0xff]
        %v2391 = vld [vmem:[%s2374 + $0xc0] sm:$0xff]
        %v2392 = vld [vmem:[%s2374 + $0xc8] sm:$0xff]
        %v2393 = vld [vmem:[%s2374 + $0xd8] sm:$0xff]
        %v2394 = vld [vmem:[%s2374 + $0xe0] sm:$0xff]
        %v2395 = vld [vmem:[%s2374 + $0xf0] sm:$0xff]
        %v2396 = vld [vmem:[%s2374 + $0xf8] sm:$0xff]
        %v2397 = vld [vmem:[%s2374 + $0x108] sm:$0xff]
        %v2398 = vld [vmem:[%s2374 + $0x110] sm:$0xff]
        %v2399 = vld [vmem:[%s2374 + $0x120] sm:$0xff]
        %v2400 = vld [vmem:[%s2374 + $0x128] sm:$0xff]
        %v2401 = vld [vmem:[%s2374 + $0x138] sm:$0xff]
        %v2402 = vld [vmem:[%s2374 + $0x140] sm:$0xff]
        %v2403 = vld [vmem:[%s2374 + $0x150] sm:$0xff]
        %v2404 = vld [vmem:[%s2374 + $0x158] sm:$0xff]
        %v2405 = vld [vmem:[%s2374 + $0x168] sm:$0xff]
        %v2406 = vld [vmem:[%s2374 + $0x170] sm:$0xff]
        %v2407 = vpack.c.bf16 %v2376, %v2375
        %v2408 = vpack.c.bf16 %v2378, %v2377
        %v2409 = vpack.c.bf16 %v2380, %v2379
        %v2410 = vpack.c.bf16 %v2382, %v2381
        %v2411 = vpack.c.bf16 %v2384, %v2383
        %v2412 = vpack.c.bf16 %v2386, %v2385
        %v2413 = vpack.c.bf16 %v2388, %v2387
        %v2414 = vpack.c.bf16 %v2390, %v2389
        %v2415 = vpack.c.bf16 %v2392, %v2391
        %v2416 = vpack.c.bf16 %v2394, %v2393
        %v2417 = vpack.c.bf16 %v2396, %v2395
        %v2418 = vpack.c.bf16 %v2398, %v2397
        %v2419 = vpack.c.bf16 %v2400, %v2399
        %v2420 = vpack.c.bf16 %v2402, %v2401
        %v2421 = vpack.c.bf16 %v2404, %v2403
        %v2422 = vpack.c.bf16 %v2406, %v2405
        %v2423 = vld [vmem:[#allocation2] sm:$0xff]
        %v2424 = vld [vmem:[#allocation2 + $0x8] sm:$0xff]
        %v2425 = vld [vmem:[#allocation2 + $0x10] sm:$0xff]
        %v2426 = vld [vmem:[#allocation2 + $0x18] sm:$0xff]
        %v2427 = vld [vmem:[#allocation2 + $0x20] sm:$0xff]
        %v2428 = vld [vmem:[#allocation2 + $0x28] sm:$0xff]
        %v2429 = vld [vmem:[#allocation2 + $0x30] sm:$0xff]
        %v2430 = vld [vmem:[#allocation2 + $0x38] sm:$0xff]
        %v2431 = vld [vmem:[#allocation2 + $0x40] sm:$0xff]
        %v2432 = vld [vmem:[#allocation2 + $0x48] sm:$0xff]
        %v2433 = vld [vmem:[#allocation2 + $0x50] sm:$0xff]
        %v2434 = vld [vmem:[#allocation2 + $0x58] sm:$0xff]
        %v2435 = vld [vmem:[#allocation2 + $0x60] sm:$0xff]
        %v2436 = vld [vmem:[#allocation2 + $0x68] sm:$0xff]
        %v2437 = vld [vmem:[#allocation2 + $0x70] sm:$0xff]
        %v2438 = vld [vmem:[#allocation2 + $0x78] sm:$0xff]
        %v2439 = vld [vmem:[#allocation2 + $0x80] sm:$0xff]
        %v2440 = vld [vmem:[#allocation2 + $0x88] sm:$0xff]
        %v2441 = vld [vmem:[#allocation2 + $0x90] sm:$0xff]
        %v2442 = vld [vmem:[#allocation2 + $0x98] sm:$0xff]
        %v2443 = vld [vmem:[#allocation2 + $0xa0] sm:$0xff]
        %v2444 = vld [vmem:[#allocation2 + $0xa8] sm:$0xff]
        %v2445 = vld [vmem:[#allocation2 + $0xb0] sm:$0xff]
        %v2446 = vld [vmem:[#allocation2 + $0xb8] sm:$0xff]
        %v2447 = vld [vmem:[#allocation2 + $0xc0] sm:$0xff]
        %v2448 = vld [vmem:[#allocation2 + $0xc8] sm:$0xff]
        %v2449 = vld [vmem:[#allocation2 + $0xd0] sm:$0xff]
        %v2450 = vld [vmem:[#allocation2 + $0xd8] sm:$0xff]
        %v2451 = vld [vmem:[#allocation2 + $0xe0] sm:$0xff]
        %v2452 = vld [vmem:[#allocation2 + $0xe8] sm:$0xff]
        %v2453 = vld [vmem:[#allocation2 + $0xf0] sm:$0xff]
        %v2454 = vld [vmem:[#allocation2 + $0xf8] sm:$0xff]
        %s2455 = scalar_lea.vmem %s1, 12
        %v2456 = vld [vmem:[%s2455] sm:$0x3]
        %v2458 = vsel %vm301, %v2407, 0
        %v2461 = vsel %vm301, %v2408, 0
        %v2464 = vsel %vm301, %v2409, 0
        %v2467 = vsel %vm301, %v2410, 0
        %v2470 = vsel %vm301, %v2411, 0
        %v2473 = vsel %vm301, %v2412, 0
        %v2476 = vsel %vm301, %v2413, 0
        %v2479 = vsel %vm301, %v2414, 0
        %v2482 = vsel %vm301, %v2415, 0
        %v2485 = vsel %vm301, %v2416, 0
        %v2488 = vsel %vm301, %v2417, 0
        %v2491 = vsel %vm301, %v2418, 0
        %v2494 = vsel %vm301, %v2419, 0
        %v2497 = vsel %vm301, %v2420, 0
        %v2500 = vsel %vm301, %v2421, 0
        %v2503 = vsel %vm301, %v2422, 0
        %v2506 = vsel %vm350, %v2456, 0
        %2508 = vmatprep.subr.bf16.mxu0 0
        %2509 = vmatpush1.bf16.msra.mxu0 %v2506
        %2510 = vmatprep.subr.bf16.mxu0 0
        %2511 = vmatpush1.bf16.msra.mxu0 0
        %2512 = vmatprep.subr.bf16.mxu0 0
        %2513 = vmatpush1.bf16.msra.mxu0 0
        %2514 = vmatprep.subr.bf16.mxu0 0
        %2515 = vmatpush1.bf16.msra.mxu0 0
        %2516 = vmatprep.subr.bf16.mxu0 0
        %2517 = vmatpush1.bf16.msra.mxu0 0
        %2518 = vmatprep.subr.bf16.mxu0 0
        %2519 = vmatpush1.bf16.msra.mxu0 0
        %2520 = vmatprep.subr.bf16.mxu0 0
        %2521 = vmatpush1.bf16.msra.mxu0 0
        %2522 = vmatprep.subr.bf16.mxu0 0
        %2523 = vmatpush1.bf16.msra.mxu0 0
        %2524 = vmatprep.subr.bf16.mxu0 0
        %2525 = vmatpush1.bf16.msra.mxu0 0
        %2526 = vmatprep.subr.bf16.mxu0 0
        %2527 = vmatpush1.bf16.msra.mxu0 0
        %2528 = vmatprep.subr.bf16.mxu0 0
        %2529 = vmatpush1.bf16.msra.mxu0 0
        %2530 = vmatprep.subr.bf16.mxu0 0
        %2531 = vmatpush1.bf16.msra.mxu0 0
        %2532 = vmatprep.subr.bf16.mxu0 0
        %2533 = vmatpush1.bf16.msra.mxu0 0
        %2534 = vmatprep.subr.bf16.mxu0 0
        %2535 = vmatpush1.bf16.msra.mxu0 0
        %2536 = vmatprep.subr.bf16.mxu0 0
        %2537 = vmatpush1.bf16.msra.mxu0 0
        %2538 = vmatprep.subr.bf16.mxu0 0
        %2539 = vmatpush1.bf16.msra.mxu0 0
        %2540 = vmatprep.mubr.bf16.mxu0 0
        %2541 = vmatmul.mubr.bf16.gmra.mrb[0].mxu0 %v2458
        %v2542 = vpop.f32.mrb[0].mxu0
        %v2543 = vadd.f32 0.0, %v2542
        %v2544 = vpop.f32.mrb[0].mxu0
        %v2545 = vpop.f32.mrb[0].mxu0
        %v2546 = vadd.f32 0.0, %v2545
        %v2547 = vpop.f32.mrb[0].mxu0
        %2548 = vmatprep.mubr.bf16.mxu0 0
        %2549 = vmatmul.mubr.bf16.gmra.mrb[0].mxu0 %v2461
        %v2550 = vpop.f32.mrb[0].mxu0
        %v2551 = vadd.f32 0.0, %v2550
        %v2552 = vpop.f32.mrb[0].mxu0
        %v2553 = vpop.f32.mrb[0].mxu0
        %v2554 = vadd.f32 0.0, %v2553
        %v2555 = vpop.f32.mrb[0].mxu0
        %2556 = vmatprep.mubr.bf16.mxu0 0
        %2557 = vmatmul.mubr.bf16.gmra.mrb[0].mxu0 %v2464
        %v2558 = vpop.f32.mrb[0].mxu0
        %v2559 = vadd.f32 0.0, %v2558
        %v2560 = vpop.f32.mrb[0].mxu0
        %v2561 = vpop.f32.mrb[0].mxu0
        %v2562 = vadd.f32 0.0, %v2561
        %v2563 = vpop.f32.mrb[0].mxu0
        %2564 = vmatprep.mubr.bf16.mxu0 0
        %2565 = vmatmul.mubr.bf16.gmra.mrb[0].mxu0 %v2467
        %v2566 = vpop.f32.mrb[0].mxu0
        %v2567 = vadd.f32 0.0, %v2566
        %v2568 = vpop.f32.mrb[0].mxu0
        %v2569 = vpop.f32.mrb[0].mxu0
        %v2570 = vadd.f32 0.0, %v2569
        %v2571 = vpop.f32.mrb[0].mxu0
        %2572 = vmatprep.mubr.bf16.mxu0 0
        %2573 = vmatmul.mubr.bf16.gmra.mrb[0].mxu0 %v2470
        %v2574 = vpop.f32.mrb[0].mxu0
        %v2575 = vadd.f32 0.0, %v2574
        %v2576 = vpop.f32.mrb[0].mxu0
        %v2577 = vpop.f32.mrb[0].mxu0
        %v2578 = vadd.f32 0.0, %v2577
        %v2579 = vpop.f32.mrb[0].mxu0
        %2580 = vmatprep.mubr.bf16.mxu0 0
        %2581 = vmatmul.mubr.bf16.gmra.mrb[0].mxu0 %v2473
        %v2582 = vpop.f32.mrb[0].mxu0
        %v2583 = vadd.f32 0.0, %v2582
        %v2584 = vpop.f32.mrb[0].mxu0
        %v2585 = vpop.f32.mrb[0].mxu0
        %v2586 = vadd.f32 0.0, %v2585
        %v2587 = vpop.f32.mrb[0].mxu0
        %2588 = vmatprep.mubr.bf16.mxu0 0
        %2589 = vmatmul.mubr.bf16.gmra.mrb[0].mxu0 %v2476
        %v2590 = vpop.f32.mrb[0].mxu0
        %v2591 = vadd.f32 0.0, %v2590
        %v2592 = vpop.f32.mrb[0].mxu0
        %v2593 = vpop.f32.mrb[0].mxu0
        %v2594 = vadd.f32 0.0, %v2593
        %v2595 = vpop.f32.mrb[0].mxu0
        %2596 = vmatprep.mubr.bf16.mxu0 0
        %2597 = vmatmul.mubr.bf16.gmra.mrb[0].mxu0 %v2479
        %v2598 = vpop.f32.mrb[0].mxu0
        %v2599 = vadd.f32 0.0, %v2598
        %v2600 = vpop.f32.mrb[0].mxu0
        %v2601 = vpop.f32.mrb[0].mxu0
        %v2602 = vadd.f32 0.0, %v2601
        %v2603 = vpop.f32.mrb[0].mxu0
        %2604 = vmatprep.mubr.bf16.mxu0 0
        %2605 = vmatmul.mubr.bf16.gmra.mrb[0].mxu0 %v2482
        %v2606 = vpop.f32.mrb[0].mxu0
        %v2607 = vadd.f32 0.0, %v2606
        %v2608 = vpop.f32.mrb[0].mxu0
        %v2609 = vpop.f32.mrb[0].mxu0
        %v2610 = vadd.f32 0.0, %v2609
        %v2611 = vpop.f32.mrb[0].mxu0
        %2612 = vmatprep.mubr.bf16.mxu0 0
        %2613 = vmatmul.mubr.bf16.gmra.mrb[0].mxu0 %v2485
        %v2614 = vpop.f32.mrb[0].mxu0
        %v2615 = vadd.f32 0.0, %v2614
        %v2616 = vpop.f32.mrb[0].mxu0
        %v2617 = vpop.f32.mrb[0].mxu0
        %v2618 = vadd.f32 0.0, %v2617
        %v2619 = vpop.f32.mrb[0].mxu0
        %2620 = vmatprep.mubr.bf16.mxu0 0
        %2621 = vmatmul.mubr.bf16.gmra.mrb[0].mxu0 %v2488
        %v2622 = vpop.f32.mrb[0].mxu0
        %v2623 = vadd.f32 0.0, %v2622
        %v2624 = vpop.f32.mrb[0].mxu0
        %v2625 = vpop.f32.mrb[0].mxu0
        %v2626 = vadd.f32 0.0, %v2625
        %v2627 = vpop.f32.mrb[0].mxu0
        %2628 = vmatprep.mubr.bf16.mxu0 0
        %2629 = vmatmul.mubr.bf16.gmra.mrb[0].mxu0 %v2491
        %v2630 = vpop.f32.mrb[0].mxu0
        %v2631 = vadd.f32 0.0, %v2630
        %v2632 = vpop.f32.mrb[0].mxu0
        %v2633 = vpop.f32.mrb[0].mxu0
        %v2634 = vadd.f32 0.0, %v2633
        %v2635 = vpop.f32.mrb[0].mxu0
        %2636 = vmatprep.mubr.bf16.mxu0 0
        %2637 = vmatmul.mubr.bf16.gmra.mrb[0].mxu0 %v2494
        %v2638 = vpop.f32.mrb[0].mxu0
        %v2639 = vadd.f32 0.0, %v2638
        %v2640 = vpop.f32.mrb[0].mxu0
        %v2641 = vpop.f32.mrb[0].mxu0
        %v2642 = vadd.f32 0.0, %v2641
        %v2643 = vpop.f32.mrb[0].mxu0
        %2644 = vmatprep.mubr.bf16.mxu0 0
        %2645 = vmatmul.mubr.bf16.gmra.mrb[0].mxu0 %v2497
        %v2646 = vpop.f32.mrb[0].mxu0
        %v2647 = vadd.f32 0.0, %v2646
        %v2648 = vpop.f32.mrb[0].mxu0
        %v2649 = vpop.f32.mrb[0].mxu0
        %v2650 = vadd.f32 0.0, %v2649
        %v2651 = vpop.f32.mrb[0].mxu0
        %2652 = vmatprep.mubr.bf16.mxu0 0
        %2653 = vmatmul.mubr.bf16.gmra.mrb[0].mxu0 %v2500
        %v2654 = vpop.f32.mrb[0].mxu0
        %v2655 = vadd.f32 0.0, %v2654
        %v2656 = vpop.f32.mrb[0].mxu0
        %v2657 = vpop.f32.mrb[0].mxu0
        %v2658 = vadd.f32 0.0, %v2657
        %v2659 = vpop.f32.mrb[0].mxu0
        %2660 = vmatprep.mubr.bf16.mxu0 0
        %2661 = vmatmul.mubr.bf16.gmra.mrb[0].mxu0 %v2503
        %v2662 = vpop.f32.mrb[0].mxu0
        %v2663 = vadd.f32 0.0, %v2662
        %v2664 = vpop.f32.mrb[0].mxu0
        %v2665 = vpop.f32.mrb[0].mxu0
        %v2666 = vadd.f32 0.0, %v2665
        %v2667 = vpop.f32.mrb[0].mxu0
        %2668 = vdwg.mxu0
        %v2669 = vadd.f32 %v2423, %v2543
        %v2670 = vadd.f32 %v2424, %v2546
        %v2671 = vadd.f32 %v2425, %v2551
        %v2672 = vadd.f32 %v2426, %v2554
        %v2673 = vadd.f32 %v2427, %v2559
        %v2674 = vadd.f32 %v2428, %v2562
        %v2675 = vadd.f32 %v2429, %v2567
        %v2676 = vadd.f32 %v2430, %v2570
        %v2677 = vadd.f32 %v2431, %v2575
        %v2678 = vadd.f32 %v2432, %v2578
        %v2679 = vadd.f32 %v2433, %v2583
        %v2680 = vadd.f32 %v2434, %v2586
        %v2681 = vadd.f32 %v2435, %v2591
        %v2682 = vadd.f32 %v2436, %v2594
        %v2683 = vadd.f32 %v2437, %v2599
        %v2684 = vadd.f32 %v2438, %v2602
        %v2685 = vadd.f32 %v2439, %v2607
        %v2686 = vadd.f32 %v2440, %v2610
        %v2687 = vadd.f32 %v2441, %v2615
        %v2688 = vadd.f32 %v2442, %v2618
        %v2689 = vadd.f32 %v2443, %v2623
        %v2690 = vadd.f32 %v2444, %v2626
        %v2691 = vadd.f32 %v2445, %v2631
        %v2692 = vadd.f32 %v2446, %v2634
        %v2693 = vadd.f32 %v2447, %v2639
        %v2694 = vadd.f32 %v2448, %v2642
        %v2695 = vadd.f32 %v2449, %v2647
        %v2696 = vadd.f32 %v2450, %v2650
        %v2697 = vadd.f32 %v2451, %v2655
        %v2698 = vadd.f32 %v2452, %v2658
        %v2699 = vadd.f32 %v2453, %v2663
        %v2700 = vadd.f32 %v2454, %v2666
        %2701 = vst [vmem:[#allocation2] sm:$0xff] %v2669
        %2702 = vst [vmem:[#allocation2 + $0x8] sm:$0xff] %v2670
        %2703 = vst [vmem:[#allocation2 + $0x10] sm:$0xff] %v2671
        %2704 = vst [vmem:[#allocation2 + $0x18] sm:$0xff] %v2672
        %2705 = vst [vmem:[#allocation2 + $0x20] sm:$0xff] %v2673
        %2706 = vst [vmem:[#allocation2 + $0x28] sm:$0xff] %v2674
        %2707 = vst [vmem:[#allocation2 + $0x30] sm:$0xff] %v2675
        %2708 = vst [vmem:[#allocation2 + $0x38] sm:$0xff] %v2676
        %2709 = vst [vmem:[#allocation2 + $0x40] sm:$0xff] %v2677
        %2710 = vst [vmem:[#allocation2 + $0x48] sm:$0xff] %v2678
        %2711 = vst [vmem:[#allocation2 + $0x50] sm:$0xff] %v2679
        %2712 = vst [vmem:[#allocation2 + $0x58] sm:$0xff] %v2680
        %2713 = vst [vmem:[#allocation2 + $0x60] sm:$0xff] %v2681
        %2714 = vst [vmem:[#allocation2 + $0x68] sm:$0xff] %v2682
        %2715 = vst [vmem:[#allocation2 + $0x70] sm:$0xff] %v2683
        %2716 = vst [vmem:[#allocation2 + $0x78] sm:$0xff] %v2684
        %2717 = vst [vmem:[#allocation2 + $0x80] sm:$0xff] %v2685
        %2718 = vst [vmem:[#allocation2 + $0x88] sm:$0xff] %v2686
        %2719 = vst [vmem:[#allocation2 + $0x90] sm:$0xff] %v2687
        %2720 = vst [vmem:[#allocation2 + $0x98] sm:$0xff] %v2688
        %2721 = vst [vmem:[#allocation2 + $0xa0] sm:$0xff] %v2689
        %2722 = vst [vmem:[#allocation2 + $0xa8] sm:$0xff] %v2690
        %2723 = vst [vmem:[#allocation2 + $0xb0] sm:$0xff] %v2691
        %2724 = vst [vmem:[#allocation2 + $0xb8] sm:$0xff] %v2692
        %2725 = vst [vmem:[#allocation2 + $0xc0] sm:$0xff] %v2693
        %2726 = vst [vmem:[#allocation2 + $0xc8] sm:$0xff] %v2694
        %2727 = vst [vmem:[#allocation2 + $0xd0] sm:$0xff] %v2695
        %2728 = vst [vmem:[#allocation2 + $0xd8] sm:$0xff] %v2696
        %2729 = vst [vmem:[#allocation2 + $0xe0] sm:$0xff] %v2697
        %2730 = vst [vmem:[#allocation2 + $0xe8] sm:$0xff] %v2698
        %2731 = vst [vmem:[#allocation2 + $0xf0] sm:$0xff] %v2699
        %2732 = vst [vmem:[#allocation2 + $0xf8] sm:$0xff] %v2700
        %v2733 = vld [vmem:[%s2374 + $0x1] sm:$0xff]
        %v2734 = vld [vmem:[%s2374 + $0x9] sm:$0xff]
        %v2735 = vld [vmem:[%s2374 + $0x19] sm:$0xff]
        %v2736 = vld [vmem:[%s2374 + $0x21] sm:$0xff]
        %v2737 = vld [vmem:[%s2374 + $0x31] sm:$0xff]
        %v2738 = vld [vmem:[%s2374 + $0x39] sm:$0xff]
        %v2739 = vld [vmem:[%s2374 + $0x49] sm:$0xff]
        %v2740 = vld [vmem:[%s2374 + $0x51] sm:$0xff]
        %v2741 = vld [vmem:[%s2374 + $0x61] sm:$0xff]
        %v2742 = vld [vmem:[%s2374 + $0x69] sm:$0xff]
        %v2743 = vld [vmem:[%s2374 + $0x79] sm:$0xff]
        %v2744 = vld [vmem:[%s2374 + $0x81] sm:$0xff]
        %v2745 = vld [vmem:[%s2374 + $0x91] sm:$0xff]
        %v2746 = vld [vmem:[%s2374 + $0x99] sm:$0xff]
        %v2747 = vld [vmem:[%s2374 + $0xa9] sm:$0xff]
        %v2748 = vld [vmem:[%s2374 + $0xb1] sm:$0xff]
        %v2749 = vld [vmem:[%s2374 + $0xc1] sm:$0xff]
        %v2750 = vld [vmem:[%s2374 + $0xc9] sm:$0xff]
        %v2751 = vld [vmem:[%s2374 + $0xd9] sm:$0xff]
        %v2752 = vld [vmem:[%s2374 + $0xe1] sm:$0xff]
        %v2753 = vld [vmem:[%s2374 + $0xf1] sm:$0xff]
        %v2754 = vld [vmem:[%s2374 + $0xf9] sm:$0xff]
        %v2755 = vld [vmem:[%s2374 + $0x109] sm:$0xff]
        %v2756 = vld [vmem:[%s2374 + $0x111] sm:$0xff]
        %v2757 = vld [vmem:[%s2374 + $0x121] sm:$0xff]
        %v2758 = vld [vmem:[%s2374 + $0x129] sm:$0xff]
        %v2759 = vld [vmem:[%s2374 + $0x139] sm:$0xff]
        %v2760 = vld [vmem:[%s2374 + $0x141] sm:$0xff]
        %v2761 = vld [vmem:[%s2374 + $0x151] sm:$0xff]
        %v2762 = vld [vmem:[%s2374 + $0x159] sm:$0xff]
        %v2763 = vld [vmem:[%s2374 + $0x169] sm:$0xff]
        %v2764 = vld [vmem:[%s2374 + $0x171] sm:$0xff]
        %v2765 = vpack.c.bf16 %v2734, %v2733
        %v2766 = vpack.c.bf16 %v2736, %v2735
        %v2767 = vpack.c.bf16 %v2738, %v2737
        %v2768 = vpack.c.bf16 %v2740, %v2739
        %v2769 = vpack.c.bf16 %v2742, %v2741
        %v2770 = vpack.c.bf16 %v2744, %v2743
        %v2771 = vpack.c.bf16 %v2746, %v2745
        %v2772 = vpack.c.bf16 %v2748, %v2747
        %v2773 = vpack.c.bf16 %v2750, %v2749
        %v2774 = vpack.c.bf16 %v2752, %v2751
        %v2775 = vpack.c.bf16 %v2754, %v2753
        %v2776 = vpack.c.bf16 %v2756, %v2755
        %v2777 = vpack.c.bf16 %v2758, %v2757
        %v2778 = vpack.c.bf16 %v2760, %v2759
        %v2779 = vpack.c.bf16 %v2762, %v2761
        %v2780 = vpack.c.bf16 %v2764, %v2763
        %v2781 = vld [vmem:[#allocation2] sm:$0xff]
        %v2782 = vld [vmem:[#allocation2 + $0x8] sm:$0xff]
        %v2783 = vld [vmem:[#allocation2 + $0x10] sm:$0xff]
        %v2784 = vld [vmem:[#allocation2 + $0x18] sm:$0xff]
        %v2785 = vld [vmem:[#allocation2 + $0x20] sm:$0xff]
        %v2786 = vld [vmem:[#allocation2 + $0x28] sm:$0xff]
        %v2787 = vld [vmem:[#allocation2 + $0x30] sm:$0xff]
        %v2788 = vld [vmem:[#allocation2 + $0x38] sm:$0xff]
        %v2789 = vld [vmem:[#allocation2 + $0x40] sm:$0xff]
        %v2790 = vld [vmem:[#allocation2 + $0x48] sm:$0xff]
        %v2791 = vld [vmem:[#allocation2 + $0x50] sm:$0xff]
        %v2792 = vld [vmem:[#allocation2 + $0x58] sm:$0xff]
        %v2793 = vld [vmem:[#allocation2 + $0x60] sm:$0xff]
        %v2794 = vld [vmem:[#allocation2 + $0x68] sm:$0xff]
        %v2795 = vld [vmem:[#allocation2 + $0x70] sm:$0xff]
        %v2796 = vld [vmem:[#allocation2 + $0x78] sm:$0xff]
        %v2797 = vld [vmem:[#allocation2 + $0x80] sm:$0xff]
        %v2798 = vld [vmem:[#allocation2 + $0x88] sm:$0xff]
        %v2799 = vld [vmem:[#allocation2 + $0x90] sm:$0xff]
        %v2800 = vld [vmem:[#allocation2 + $0x98] sm:$0xff]
        %v2801 = vld [vmem:[#allocation2 + $0xa0] sm:$0xff]
        %v2802 = vld [vmem:[#allocation2 + $0xa8] sm:$0xff]
        %v2803 = vld [vmem:[#allocation2 + $0xb0] sm:$0xff]
        %v2804 = vld [vmem:[#allocation2 + $0xb8] sm:$0xff]
        %v2805 = vld [vmem:[#allocation2 + $0xc0] sm:$0xff]
        %v2806 = vld [vmem:[#allocation2 + $0xc8] sm:$0xff]
        %v2807 = vld [vmem:[#allocation2 + $0xd0] sm:$0xff]
        %v2808 = vld [vmem:[#allocation2 + $0xd8] sm:$0xff]
        %v2809 = vld [vmem:[#allocation2 + $0xe0] sm:$0xff]
        %v2810 = vld [vmem:[#allocation2 + $0xe8] sm:$0xff]
        %v2811 = vld [vmem:[#allocation2 + $0xf0] sm:$0xff]
        %v2812 = vld [vmem:[#allocation2 + $0xf8] sm:$0xff]
        %s2813 = scalar_lea.vmem %s1, 14
        %v2814 = vld [vmem:[%s2813] sm:$0x3]
        %v2816 = vsel %vm301, %v2765, 0
        %v2819 = vsel %vm301, %v2766, 0
        %v2822 = vsel %vm301, %v2767, 0
        %v2825 = vsel %vm301, %v2768, 0
        %v2828 = vsel %vm301, %v2769, 0
        %v2831 = vsel %vm301, %v2770, 0
        %v2834 = vsel %vm301, %v2771, 0
        %v2837 = vsel %vm301, %v2772, 0
        %v2840 = vsel %vm301, %v2773, 0
        %v2843 = vsel %vm301, %v2774, 0
        %v2846 = vsel %vm301, %v2775, 0
        %v2849 = vsel %vm301, %v2776, 0
        %v2852 = vsel %vm301, %v2777, 0
        %v2855 = vsel %vm301, %v2778, 0
        %v2858 = vsel %vm301, %v2779, 0
        %v2861 = vsel %vm301, %v2780, 0
        %v2864 = vsel %vm350, %v2814, 0
        %2866 = vmatprep.subr.bf16.mxu0 0
        %2867 = vmatpush1.bf16.msra.mxu0 %v2864
        %2868 = vmatprep.subr.bf16.mxu0 0
        %2869 = vmatpush1.bf16.msra.mxu0 0
        %2870 = vmatprep.subr.bf16.mxu0 0
        %2871 = vmatpush1.bf16.msra.mxu0 0
        %2872 = vmatprep.subr.bf16.mxu0 0
        %2873 = vmatpush1.bf16.msra.mxu0 0
        %2874 = vmatprep.subr.bf16.mxu0 0
        %2875 = vmatpush1.bf16.msra.mxu0 0
        %2876 = vmatprep.subr.bf16.mxu0 0
        %2877 = vmatpush1.bf16.msra.mxu0 0
        %2878 = vmatprep.subr.bf16.mxu0 0
        %2879 = vmatpush1.bf16.msra.mxu0 0
        %2880 = vmatprep.subr.bf16.mxu0 0
        %2881 = vmatpush1.bf16.msra.mxu0 0
        %2882 = vmatprep.subr.bf16.mxu0 0
        %2883 = vmatpush1.bf16.msra.mxu0 0
        %2884 = vmatprep.subr.bf16.mxu0 0
        %2885 = vmatpush1.bf16.msra.mxu0 0
        %2886 = vmatprep.subr.bf16.mxu0 0
        %2887 = vmatpush1.bf16.msra.mxu0 0
        %2888 = vmatprep.subr.bf16.mxu0 0
        %2889 = vmatpush1.bf16.msra.mxu0 0
        %2890 = vmatprep.subr.bf16.mxu0 0
        %2891 = vmatpush1.bf16.msra.mxu0 0
        %2892 = vmatprep.subr.bf16.mxu0 0
        %2893 = vmatpush1.bf16.msra.mxu0 0
        %2894 = vmatprep.subr.bf16.mxu0 0
        %2895 = vmatpush1.bf16.msra.mxu0 0
        %2896 = vmatprep.subr.bf16.mxu0 0
        %2897 = vmatpush1.bf16.msra.mxu0 0
        %2898 = vmatprep.mubr.bf16.mxu0 0
        %2899 = vmatmul.mubr.bf16.gmra.mrb[0].mxu0 %v2816
        %v2900 = vpop.f32.mrb[0].mxu0
        %v2901 = vadd.f32 0.0, %v2900
        %v2902 = vpop.f32.mrb[0].mxu0
        %v2903 = vpop.f32.mrb[0].mxu0
        %v2904 = vadd.f32 0.0, %v2903
        %v2905 = vpop.f32.mrb[0].mxu0
        %2906 = vmatprep.mubr.bf16.mxu0 0
        %2907 = vmatmul.mubr.bf16.gmra.mrb[0].mxu0 %v2819
        %v2908 = vpop.f32.mrb[0].mxu0
        %v2909 = vadd.f32 0.0, %v2908
        %v2910 = vpop.f32.mrb[0].mxu0
        %v2911 = vpop.f32.mrb[0].mxu0
        %v2912 = vadd.f32 0.0, %v2911
        %v2913 = vpop.f32.mrb[0].mxu0
        %2914 = vmatprep.mubr.bf16.mxu0 0
        %2915 = vmatmul.mubr.bf16.gmra.mrb[0].mxu0 %v2822
        %v2916 = vpop.f32.mrb[0].mxu0
        %v2917 = vadd.f32 0.0, %v2916
        %v2918 = vpop.f32.mrb[0].mxu0
        %v2919 = vpop.f32.mrb[0].mxu0
        %v2920 = vadd.f32 0.0, %v2919
        %v2921 = vpop.f32.mrb[0].mxu0
        %2922 = vmatprep.mubr.bf16.mxu0 0
        %2923 = vmatmul.mubr.bf16.gmra.mrb[0].mxu0 %v2825
        %v2924 = vpop.f32.mrb[0].mxu0
        %v2925 = vadd.f32 0.0, %v2924
        %v2926 = vpop.f32.mrb[0].mxu0
        %v2927 = vpop.f32.mrb[0].mxu0
        %v2928 = vadd.f32 0.0, %v2927
        %v2929 = vpop.f32.mrb[0].mxu0
        %2930 = vmatprep.mubr.bf16.mxu0 0
        %2931 = vmatmul.mubr.bf16.gmra.mrb[0].mxu0 %v2828
        %v2932 = vpop.f32.mrb[0].mxu0
        %v2933 = vadd.f32 0.0, %v2932
        %v2934 = vpop.f32.mrb[0].mxu0
        %v2935 = vpop.f32.mrb[0].mxu0
        %v2936 = vadd.f32 0.0, %v2935
        %v2937 = vpop.f32.mrb[0].mxu0
        %2938 = vmatprep.mubr.bf16.mxu0 0
        %2939 = vmatmul.mubr.bf16.gmra.mrb[0].mxu0 %v2831
        %v2940 = vpop.f32.mrb[0].mxu0
        %v2941 = vadd.f32 0.0, %v2940
        %v2942 = vpop.f32.mrb[0].mxu0
        %v2943 = vpop.f32.mrb[0].mxu0
        %v2944 = vadd.f32 0.0, %v2943
        %v2945 = vpop.f32.mrb[0].mxu0
        %2946 = vmatprep.mubr.bf16.mxu0 0
        %2947 = vmatmul.mubr.bf16.gmra.mrb[0].mxu0 %v2834
        %v2948 = vpop.f32.mrb[0].mxu0
        %v2949 = vadd.f32 0.0, %v2948
        %v2950 = vpop.f32.mrb[0].mxu0
        %v2951 = vpop.f32.mrb[0].mxu0
        %v2952 = vadd.f32 0.0, %v2951
        %v2953 = vpop.f32.mrb[0].mxu0
        %2954 = vmatprep.mubr.bf16.mxu0 0
        %2955 = vmatmul.mubr.bf16.gmra.mrb[0].mxu0 %v2837
        %v2956 = vpop.f32.mrb[0].mxu0
        %v2957 = vadd.f32 0.0, %v2956
        %v2958 = vpop.f32.mrb[0].mxu0
        %v2959 = vpop.f32.mrb[0].mxu0
        %v2960 = vadd.f32 0.0, %v2959
        %v2961 = vpop.f32.mrb[0].mxu0
        %2962 = vmatprep.mubr.bf16.mxu0 0
        %2963 = vmatmul.mubr.bf16.gmra.mrb[0].mxu0 %v2840
        %v2964 = vpop.f32.mrb[0].mxu0
        %v2965 = vadd.f32 0.0, %v2964
        %v2966 = vpop.f32.mrb[0].mxu0
        %v2967 = vpop.f32.mrb[0].mxu0
        %v2968 = vadd.f32 0.0, %v2967
        %v2969 = vpop.f32.mrb[0].mxu0
        %2970 = vmatprep.mubr.bf16.mxu0 0
        %2971 = vmatmul.mubr.bf16.gmra.mrb[0].mxu0 %v2843
        %v2972 = vpop.f32.mrb[0].mxu0
        %v2973 = vadd.f32 0.0, %v2972
        %v2974 = vpop.f32.mrb[0].mxu0
        %v2975 = vpop.f32.mrb[0].mxu0
        %v2976 = vadd.f32 0.0, %v2975
        %v2977 = vpop.f32.mrb[0].mxu0
        %2978 = vmatprep.mubr.bf16.mxu0 0
        %2979 = vmatmul.mubr.bf16.gmra.mrb[0].mxu0 %v2846
        %v2980 = vpop.f32.mrb[0].mxu0
        %v2981 = vadd.f32 0.0, %v2980
        %v2982 = vpop.f32.mrb[0].mxu0
        %v2983 = vpop.f32.mrb[0].mxu0
        %v2984 = vadd.f32 0.0, %v2983
        %v2985 = vpop.f32.mrb[0].mxu0
        %2986 = vmatprep.mubr.bf16.mxu0 0
        %2987 = vmatmul.mubr.bf16.gmra.mrb[0].mxu0 %v2849
        %v2988 = vpop.f32.mrb[0].mxu0
        %v2989 = vadd.f32 0.0, %v2988
        %v2990 = vpop.f32.mrb[0].mxu0
        %v2991 = vpop.f32.mrb[0].mxu0
        %v2992 = vadd.f32 0.0, %v2991
        %v2993 = vpop.f32.mrb[0].mxu0
        %2994 = vmatprep.mubr.bf16.mxu0 0
        %2995 = vmatmul.mubr.bf16.gmra.mrb[0].mxu0 %v2852
        %v2996 = vpop.f32.mrb[0].mxu0
        %v2997 = vadd.f32 0.0, %v2996
        %v2998 = vpop.f32.mrb[0].mxu0
        %v2999 = vpop.f32.mrb[0].mxu0
        %v3000 = vadd.f32 0.0, %v2999
        %v3001 = vpop.f32.mrb[0].mxu0
        %3002 = vmatprep.mubr.bf16.mxu0 0
        %3003 = vmatmul.mubr.bf16.gmra.mrb[0].mxu0 %v2855
        %v3004 = vpop.f32.mrb[0].mxu0
        %v3005 = vadd.f32 0.0, %v3004
        %v3006 = vpop.f32.mrb[0].mxu0
        %v3007 = vpop.f32.mrb[0].mxu0
        %v3008 = vadd.f32 0.0, %v3007
        %v3009 = vpop.f32.mrb[0].mxu0
        %3010 = vmatprep.mubr.bf16.mxu0 0
        %3011 = vmatmul.mubr.bf16.gmra.mrb[0].mxu0 %v2858
        %v3012 = vpop.f32.mrb[0].mxu0
        %v3013 = vadd.f32 0.0, %v3012
        %v3014 = vpop.f32.mrb[0].mxu0
        %v3015 = vpop.f32.mrb[0].mxu0
        %v3016 = vadd.f32 0.0, %v3015
        %v3017 = vpop.f32.mrb[0].mxu0
        %3018 = vmatprep.mubr.bf16.mxu0 0
        %3019 = vmatmul.mubr.bf16.gmra.mrb[0].mxu0 %v2861
        %v3020 = vpop.f32.mrb[0].mxu0
        %v3021 = vadd.f32 0.0, %v3020
        %v3022 = vpop.f32.mrb[0].mxu0
        %v3023 = vpop.f32.mrb[0].mxu0
        %v3024 = vadd.f32 0.0, %v3023
        %v3025 = vpop.f32.mrb[0].mxu0
        %3026 = vdwg.mxu0
        %v3027 = vadd.f32 %v2781, %v2901
        %v3028 = vadd.f32 %v2782, %v2904
        %v3029 = vadd.f32 %v2783, %v2909
        %v3030 = vadd.f32 %v2784, %v2912
        %v3031 = vadd.f32 %v2785, %v2917
        %v3032 = vadd.f32 %v2786, %v2920
        %v3033 = vadd.f32 %v2787, %v2925
        %v3034 = vadd.f32 %v2788, %v2928
        %v3035 = vadd.f32 %v2789, %v2933
        %v3036 = vadd.f32 %v2790, %v2936
        %v3037 = vadd.f32 %v2791, %v2941
        %v3038 = vadd.f32 %v2792, %v2944
        %v3039 = vadd.f32 %v2793, %v2949
        %v3040 = vadd.f32 %v2794, %v2952
        %v3041 = vadd.f32 %v2795, %v2957
        %v3042 = vadd.f32 %v2796, %v2960
        %v3043 = vadd.f32 %v2797, %v2965
        %v3044 = vadd.f32 %v2798, %v2968
        %v3045 = vadd.f32 %v2799, %v2973
        %v3046 = vadd.f32 %v2800, %v2976
        %v3047 = vadd.f32 %v2801, %v2981
        %v3048 = vadd.f32 %v2802, %v2984
        %v3049 = vadd.f32 %v2803, %v2989
        %v3050 = vadd.f32 %v2804, %v2992
        %v3051 = vadd.f32 %v2805, %v2997
        %v3052 = vadd.f32 %v2806, %v3000
        %v3053 = vadd.f32 %v2807, %v3005
        %v3054 = vadd.f32 %v2808, %v3008
        %v3055 = vadd.f32 %v2809, %v3013
        %v3056 = vadd.f32 %v2810, %v3016
        %v3057 = vadd.f32 %v2811, %v3021
        %v3058 = vadd.f32 %v2812, %v3024
        %3059 = vst [vmem:[#allocation2] sm:$0xff] %v3027
        %3060 = vst [vmem:[#allocation2 + $0x8] sm:$0xff] %v3028
        %3061 = vst [vmem:[#allocation2 + $0x10] sm:$0xff] %v3029
        %3062 = vst [vmem:[#allocation2 + $0x18] sm:$0xff] %v3030
        %3063 = vst [vmem:[#allocation2 + $0x20] sm:$0xff] %v3031
        %3064 = vst [vmem:[#allocation2 + $0x28] sm:$0xff] %v3032
        %3065 = vst [vmem:[#allocation2 + $0x30] sm:$0xff] %v3033
        %3066 = vst [vmem:[#allocation2 + $0x38] sm:$0xff] %v3034
        %3067 = vst [vmem:[#allocation2 + $0x40] sm:$0xff] %v3035
        %3068 = vst [vmem:[#allocation2 + $0x48] sm:$0xff] %v3036
        %3069 = vst [vmem:[#allocation2 + $0x50] sm:$0xff] %v3037
        %3070 = vst [vmem:[#allocation2 + $0x58] sm:$0xff] %v3038
        %3071 = vst [vmem:[#allocation2 + $0x60] sm:$0xff] %v3039
        %3072 = vst [vmem:[#allocation2 + $0x68] sm:$0xff] %v3040
        %3073 = vst [vmem:[#allocation2 + $0x70] sm:$0xff] %v3041
        %3074 = vst [vmem:[#allocation2 + $0x78] sm:$0xff] %v3042
        %3075 = vst [vmem:[#allocation2 + $0x80] sm:$0xff] %v3043
        %3076 = vst [vmem:[#allocation2 + $0x88] sm:$0xff] %v3044
        %3077 = vst [vmem:[#allocation2 + $0x90] sm:$0xff] %v3045
        %3078 = vst [vmem:[#allocation2 + $0x98] sm:$0xff] %v3046
        %3079 = vst [vmem:[#allocation2 + $0xa0] sm:$0xff] %v3047
        %3080 = vst [vmem:[#allocation2 + $0xa8] sm:$0xff] %v3048
        %3081 = vst [vmem:[#allocation2 + $0xb0] sm:$0xff] %v3049
        %3082 = vst [vmem:[#allocation2 + $0xb8] sm:$0xff] %v3050
        %3083 = vst [vmem:[#allocation2 + $0xc0] sm:$0xff] %v3051
        %3084 = vst [vmem:[#allocation2 + $0xc8] sm:$0xff] %v3052
        %3085 = vst [vmem:[#allocation2 + $0xd0] sm:$0xff] %v3053
        %3086 = vst [vmem:[#allocation2 + $0xd8] sm:$0xff] %v3054
        %3087 = vst [vmem:[#allocation2 + $0xe0] sm:$0xff] %v3055
        %3088 = vst [vmem:[#allocation2 + $0xe8] sm:$0xff] %v3056
        %3089 = vst [vmem:[#allocation2 + $0xf0] sm:$0xff] %v3057
        %3090 = vst [vmem:[#allocation2 + $0xf8] sm:$0xff] %v3058
        %v3091 = vld [vmem:[%s2374 + $0x2] sm:$0xff]
        %v3092 = vld [vmem:[%s2374 + $0xa] sm:$0xff]
        %v3093 = vld [vmem:[%s2374 + $0x1a] sm:$0xff]
        %v3094 = vld [vmem:[%s2374 + $0x22] sm:$0xff]
        %v3095 = vld [vmem:[%s2374 + $0x32] sm:$0xff]
        %v3096 = vld [vmem:[%s2374 + $0x3a] sm:$0xff]
        %v3097 = vld [vmem:[%s2374 + $0x4a] sm:$0xff]
        %v3098 = vld [vmem:[%s2374 + $0x52] sm:$0xff]
        %v3099 = vld [vmem:[%s2374 + $0x62] sm:$0xff]
        %v3100 = vld [vmem:[%s2374 + $0x6a] sm:$0xff]
        %v3101 = vld [vmem:[%s2374 + $0x7a] sm:$0xff]
        %v3102 = vld [vmem:[%s2374 + $0x82] sm:$0xff]
        %v3103 = vld [vmem:[%s2374 + $0x92] sm:$0xff]
        %v3104 = vld [vmem:[%s2374 + $0x9a] sm:$0xff]
        %v3105 = vld [vmem:[%s2374 + $0xaa] sm:$0xff]
        %v3106 = vld [vmem:[%s2374 + $0xb2] sm:$0xff]
        %v3107 = vld [vmem:[%s2374 + $0xc2] sm:$0xff]
        %v3108 = vld [vmem:[%s2374 + $0xca] sm:$0xff]
        %v3109 = vld [vmem:[%s2374 + $0xda] sm:$0xff]
        %v3110 = vld [vmem:[%s2374 + $0xe2] sm:$0xff]
        %v3111 = vld [vmem:[%s2374 + $0xf2] sm:$0xff]
        %v3112 = vld [vmem:[%s2374 + $0xfa] sm:$0xff]
        %v3113 = vld [vmem:[%s2374 + $0x10a] sm:$0xff]
        %v3114 = vld [vmem:[%s2374 + $0x112] sm:$0xff]
        %v3115 = vld [vmem:[%s2374 + $0x122] sm:$0xff]
        %v3116 = vld [vmem:[%s2374 + $0x12a] sm:$0xff]
        %v3117 = vld [vmem:[%s2374 + $0x13a] sm:$0xff]
        %v3118 = vld [vmem:[%s2374 + $0x142] sm:$0xff]
        %v3119 = vld [vmem:[%s2374 + $0x152] sm:$0xff]
        %v3120 = vld [vmem:[%s2374 + $0x15a] sm:$0xff]
        %v3121 = vld [vmem:[%s2374 + $0x16a] sm:$0xff]
        %v3122 = vld [vmem:[%s2374 + $0x172] sm:$0xff]
        %v3123 = vpack.c.bf16 %v3092, %v3091
        %v3124 = vpack.c.bf16 %v3094, %v3093
        %v3125 = vpack.c.bf16 %v3096, %v3095
        %v3126 = vpack.c.bf16 %v3098, %v3097
        %v3127 = vpack.c.bf16 %v3100, %v3099
        %v3128 = vpack.c.bf16 %v3102, %v3101
        %v3129 = vpack.c.bf16 %v3104, %v3103
        %v3130 = vpack.c.bf16 %v3106, %v3105
        %v3131 = vpack.c.bf16 %v3108, %v3107
        %v3132 = vpack.c.bf16 %v3110, %v3109
        %v3133 = vpack.c.bf16 %v3112, %v3111
        %v3134 = vpack.c.bf16 %v3114, %v3113
        %v3135 = vpack.c.bf16 %v3116, %v3115
        %v3136 = vpack.c.bf16 %v3118, %v3117
        %v3137 = vpack.c.bf16 %v3120, %v3119
        %v3138 = vpack.c.bf16 %v3122, %v3121
        %v3139 = vld [vmem:[#allocation2] sm:$0xff]
        %v3140 = vld [vmem:[#allocation2 + $0x8] sm:$0xff]
        %v3141 = vld [vmem:[#allocation2 + $0x10] sm:$0xff]
        %v3142 = vld [vmem:[#allocation2 + $0x18] sm:$0xff]
        %v3143 = vld [vmem:[#allocation2 + $0x20] sm:$0xff]
        %v3144 = vld [vmem:[#allocation2 + $0x28] sm:$0xff]
        %v3145 = vld [vmem:[#allocation2 + $0x30] sm:$0xff]
        %v3146 = vld [vmem:[#allocation2 + $0x38] sm:$0xff]
        %v3147 = vld [vmem:[#allocation2 + $0x40] sm:$0xff]
        %v3148 = vld [vmem:[#allocation2 + $0x48] sm:$0xff]
        %v3149 = vld [vmem:[#allocation2 + $0x50] sm:$0xff]
        %v3150 = vld [vmem:[#allocation2 + $0x58] sm:$0xff]
        %v3151 = vld [vmem:[#allocation2 + $0x60] sm:$0xff]
        %v3152 = vld [vmem:[#allocation2 + $0x68] sm:$0xff]
        %v3153 = vld [vmem:[#allocation2 + $0x70] sm:$0xff]
        %v3154 = vld [vmem:[#allocation2 + $0x78] sm:$0xff]
        %v3155 = vld [vmem:[#allocation2 + $0x80] sm:$0xff]
        %v3156 = vld [vmem:[#allocation2 + $0x88] sm:$0xff]
        %v3157 = vld [vmem:[#allocation2 + $0x90] sm:$0xff]
        %v3158 = vld [vmem:[#allocation2 + $0x98] sm:$0xff]
        %v3159 = vld [vmem:[#allocation2 + $0xa0] sm:$0xff]
        %v3160 = vld [vmem:[#allocation2 + $0xa8] sm:$0xff]
        %v3161 = vld [vmem:[#allocation2 + $0xb0] sm:$0xff]
        %v3162 = vld [vmem:[#allocation2 + $0xb8] sm:$0xff]
        %v3163 = vld [vmem:[#allocation2 + $0xc0] sm:$0xff]
        %v3164 = vld [vmem:[#allocation2 + $0xc8] sm:$0xff]
        %v3165 = vld [vmem:[#allocation2 + $0xd0] sm:$0xff]
        %v3166 = vld [vmem:[#allocation2 + $0xd8] sm:$0xff]
        %v3167 = vld [vmem:[#allocation2 + $0xe0] sm:$0xff]
        %v3168 = vld [vmem:[#allocation2 + $0xe8] sm:$0xff]
        %v3169 = vld [vmem:[#allocation2 + $0xf0] sm:$0xff]
        %v3170 = vld [vmem:[#allocation2 + $0xf8] sm:$0xff]
        %s3171 = scalar_lea.vmem %s1, 16
        %v3172 = vld [vmem:[%s3171] sm:$0x3]
        %v3174 = vsel %vm301, %v3123, 0
        %v3177 = vsel %vm301, %v3124, 0
        %v3180 = vsel %vm301, %v3125, 0
        %v3183 = vsel %vm301, %v3126, 0
        %v3186 = vsel %vm301, %v3127, 0
        %v3189 = vsel %vm301, %v3128, 0
        %v3192 = vsel %vm301, %v3129, 0
        %v3195 = vsel %vm301, %v3130, 0
        %v3198 = vsel %vm301, %v3131, 0
        %v3201 = vsel %vm301, %v3132, 0
        %v3204 = vsel %vm301, %v3133, 0
        %v3207 = vsel %vm301, %v3134, 0
        %v3210 = vsel %vm301, %v3135, 0
        %v3213 = vsel %vm301, %v3136, 0
        %v3216 = vsel %vm301, %v3137, 0
        %v3219 = vsel %vm301, %v3138, 0
        %v3222 = vsel %vm350, %v3172, 0
        %3224 = vmatprep.subr.bf16.mxu0 0
        %3225 = vmatpush1.bf16.msra.mxu0 %v3222
        %3226 = vmatprep.subr.bf16.mxu0 0
        %3227 = vmatpush1.bf16.msra.mxu0 0
        %3228 = vmatprep.subr.bf16.mxu0 0
        %3229 = vmatpush1.bf16.msra.mxu0 0
        %3230 = vmatprep.subr.bf16.mxu0 0
        %3231 = vmatpush1.bf16.msra.mxu0 0
        %3232 = vmatprep.subr.bf16.mxu0 0
        %3233 = vmatpush1.bf16.msra.mxu0 0
        %3234 = vmatprep.subr.bf16.mxu0 0
        %3235 = vmatpush1.bf16.msra.mxu0 0
        %3236 = vmatprep.subr.bf16.mxu0 0
        %3237 = vmatpush1.bf16.msra.mxu0 0
        %3238 = vmatprep.subr.bf16.mxu0 0
        %3239 = vmatpush1.bf16.msra.mxu0 0
        %3240 = vmatprep.subr.bf16.mxu0 0
        %3241 = vmatpush1.bf16.msra.mxu0 0
        %3242 = vmatprep.subr.bf16.mxu0 0
        %3243 = vmatpush1.bf16.msra.mxu0 0
        %3244 = vmatprep.subr.bf16.mxu0 0
        %3245 = vmatpush1.bf16.msra.mxu0 0
        %3246 = vmatprep.subr.bf16.mxu0 0
        %3247 = vmatpush1.bf16.msra.mxu0 0
        %3248 = vmatprep.subr.bf16.mxu0 0
        %3249 = vmatpush1.bf16.msra.mxu0 0
        %3250 = vmatprep.subr.bf16.mxu0 0
        %3251 = vmatpush1.bf16.msra.mxu0 0
        %3252 = vmatprep.subr.bf16.mxu0 0
        %3253 = vmatpush1.bf16.msra.mxu0 0
        %3254 = vmatprep.subr.bf16.mxu0 0
        %3255 = vmatpush1.bf16.msra.mxu0 0
        %3256 = vmatprep.mubr.bf16.mxu0 0
        %3257 = vmatmul.mubr.bf16.gmra.mrb[0].mxu0 %v3174
        %v3258 = vpop.f32.mrb[0].mxu0
        %v3259 = vadd.f32 0.0, %v3258
        %v3260 = vpop.f32.mrb[0].mxu0
        %v3261 = vpop.f32.mrb[0].mxu0
        %v3262 = vadd.f32 0.0, %v3261
        %v3263 = vpop.f32.mrb[0].mxu0
        %3264 = vmatprep.mubr.bf16.mxu0 0
        %3265 = vmatmul.mubr.bf16.gmra.mrb[0].mxu0 %v3177
        %v3266 = vpop.f32.mrb[0].mxu0
        %v3267 = vadd.f32 0.0, %v3266
        %v3268 = vpop.f32.mrb[0].mxu0
        %v3269 = vpop.f32.mrb[0].mxu0
        %v3270 = vadd.f32 0.0, %v3269
        %v3271 = vpop.f32.mrb[0].mxu0
        %3272 = vmatprep.mubr.bf16.mxu0 0
        %3273 = vmatmul.mubr.bf16.gmra.mrb[0].mxu0 %v3180
        %v3274 = vpop.f32.mrb[0].mxu0
        %v3275 = vadd.f32 0.0, %v3274
        %v3276 = vpop.f32.mrb[0].mxu0
        %v3277 = vpop.f32.mrb[0].mxu0
        %v3278 = vadd.f32 0.0, %v3277
        %v3279 = vpop.f32.mrb[0].mxu0
        %3280 = vmatprep.mubr.bf16.mxu0 0
        %3281 = vmatmul.mubr.bf16.gmra.mrb[0].mxu0 %v3183
        %v3282 = vpop.f32.mrb[0].mxu0
        %v3283 = vadd.f32 0.0, %v3282
        %v3284 = vpop.f32.mrb[0].mxu0
        %v3285 = vpop.f32.mrb[0].mxu0
        %v3286 = vadd.f32 0.0, %v3285
        %v3287 = vpop.f32.mrb[0].mxu0
        %3288 = vmatprep.mubr.bf16.mxu0 0
        %3289 = vmatmul.mubr.bf16.gmra.mrb[0].mxu0 %v3186
        %v3290 = vpop.f32.mrb[0].mxu0
        %v3291 = vadd.f32 0.0, %v3290
        %v3292 = vpop.f32.mrb[0].mxu0
        %v3293 = vpop.f32.mrb[0].mxu0
        %v3294 = vadd.f32 0.0, %v3293
        %v3295 = vpop.f32.mrb[0].mxu0
        %3296 = vmatprep.mubr.bf16.mxu0 0
        %3297 = vmatmul.mubr.bf16.gmra.mrb[0].mxu0 %v3189
        %v3298 = vpop.f32.mrb[0].mxu0
        %v3299 = vadd.f32 0.0, %v3298
        %v3300 = vpop.f32.mrb[0].mxu0
        %v3301 = vpop.f32.mrb[0].mxu0
        %v3302 = vadd.f32 0.0, %v3301
        %v3303 = vpop.f32.mrb[0].mxu0
        %3304 = vmatprep.mubr.bf16.mxu0 0
        %3305 = vmatmul.mubr.bf16.gmra.mrb[0].mxu0 %v3192
        %v3306 = vpop.f32.mrb[0].mxu0
        %v3307 = vadd.f32 0.0, %v3306
        %v3308 = vpop.f32.mrb[0].mxu0
        %v3309 = vpop.f32.mrb[0].mxu0
        %v3310 = vadd.f32 0.0, %v3309
        %v3311 = vpop.f32.mrb[0].mxu0
        %3312 = vmatprep.mubr.bf16.mxu0 0
        %3313 = vmatmul.mubr.bf16.gmra.mrb[0].mxu0 %v3195
        %v3314 = vpop.f32.mrb[0].mxu0
        %v3315 = vadd.f32 0.0, %v3314
        %v3316 = vpop.f32.mrb[0].mxu0
        %v3317 = vpop.f32.mrb[0].mxu0
        %v3318 = vadd.f32 0.0, %v3317
        %v3319 = vpop.f32.mrb[0].mxu0
        %3320 = vmatprep.mubr.bf16.mxu0 0
        %3321 = vmatmul.mubr.bf16.gmra.mrb[0].mxu0 %v3198
        %v3322 = vpop.f32.mrb[0].mxu0
        %v3323 = vadd.f32 0.0, %v3322
        %v3324 = vpop.f32.mrb[0].mxu0
        %v3325 = vpop.f32.mrb[0].mxu0
        %v3326 = vadd.f32 0.0, %v3325
        %v3327 = vpop.f32.mrb[0].mxu0
        %3328 = vmatprep.mubr.bf16.mxu0 0
        %3329 = vmatmul.mubr.bf16.gmra.mrb[0].mxu0 %v3201
        %v3330 = vpop.f32.mrb[0].mxu0
        %v3331 = vadd.f32 0.0, %v3330
        %v3332 = vpop.f32.mrb[0].mxu0
        %v3333 = vpop.f32.mrb[0].mxu0
        %v3334 = vadd.f32 0.0, %v3333
        %v3335 = vpop.f32.mrb[0].mxu0
        %3336 = vmatprep.mubr.bf16.mxu0 0
        %3337 = vmatmul.mubr.bf16.gmra.mrb[0].mxu0 %v3204
        %v3338 = vpop.f32.mrb[0].mxu0
        %v3339 = vadd.f32 0.0, %v3338
        %v3340 = vpop.f32.mrb[0].mxu0
        %v3341 = vpop.f32.mrb[0].mxu0
        %v3342 = vadd.f32 0.0, %v3341
        %v3343 = vpop.f32.mrb[0].mxu0
        %3344 = vmatprep.mubr.bf16.mxu0 0
        %3345 = vmatmul.mubr.bf16.gmra.mrb[0].mxu0 %v3207
        %v3346 = vpop.f32.mrb[0].mxu0
        %v3347 = vadd.f32 0.0, %v3346
        %v3348 = vpop.f32.mrb[0].mxu0
        %v3349 = vpop.f32.mrb[0].mxu0
        %v3350 = vadd.f32 0.0, %v3349
        %v3351 = vpop.f32.mrb[0].mxu0
        %3352 = vmatprep.mubr.bf16.mxu0 0
        %3353 = vmatmul.mubr.bf16.gmra.mrb[0].mxu0 %v3210
        %v3354 = vpop.f32.mrb[0].mxu0
        %v3355 = vadd.f32 0.0, %v3354
        %v3356 = vpop.f32.mrb[0].mxu0
        %v3357 = vpop.f32.mrb[0].mxu0
        %v3358 = vadd.f32 0.0, %v3357
        %v3359 = vpop.f32.mrb[0].mxu0
        %3360 = vmatprep.mubr.bf16.mxu0 0
        %3361 = vmatmul.mubr.bf16.gmra.mrb[0].mxu0 %v3213
        %v3362 = vpop.f32.mrb[0].mxu0
        %v3363 = vadd.f32 0.0, %v3362
        %v3364 = vpop.f32.mrb[0].mxu0
        %v3365 = vpop.f32.mrb[0].mxu0
        %v3366 = vadd.f32 0.0, %v3365
        %v3367 = vpop.f32.mrb[0].mxu0
        %3368 = vmatprep.mubr.bf16.mxu0 0
        %3369 = vmatmul.mubr.bf16.gmra.mrb[0].mxu0 %v3216
        %v3370 = vpop.f32.mrb[0].mxu0
        %v3371 = vadd.f32 0.0, %v3370
        %v3372 = vpop.f32.mrb[0].mxu0
        %v3373 = vpop.f32.mrb[0].mxu0
        %v3374 = vadd.f32 0.0, %v3373
        %v3375 = vpop.f32.mrb[0].mxu0
        %3376 = vmatprep.mubr.bf16.mxu0 0
        %3377 = vmatmul.mubr.bf16.gmra.mrb[0].mxu0 %v3219
        %v3378 = vpop.f32.mrb[0].mxu0
        %v3379 = vadd.f32 0.0, %v3378
        %v3380 = vpop.f32.mrb[0].mxu0
        %v3381 = vpop.f32.mrb[0].mxu0
        %v3382 = vadd.f32 0.0, %v3381
        %v3383 = vpop.f32.mrb[0].mxu0
        %3384 = vdwg.mxu0
        %v3385 = vadd.f32 %v3139, %v3259
        %v3386 = vadd.f32 %v3140, %v3262
        %v3387 = vadd.f32 %v3141, %v3267
        %v3388 = vadd.f32 %v3142, %v3270
        %v3389 = vadd.f32 %v3143, %v3275
        %v3390 = vadd.f32 %v3144, %v3278
        %v3391 = vadd.f32 %v3145, %v3283
        %v3392 = vadd.f32 %v3146, %v3286
        %v3393 = vadd.f32 %v3147, %v3291
        %v3394 = vadd.f32 %v3148, %v3294
        %v3395 = vadd.f32 %v3149, %v3299
        %v3396 = vadd.f32 %v3150, %v3302
        %v3397 = vadd.f32 %v3151, %v3307
        %v3398 = vadd.f32 %v3152, %v3310
        %v3399 = vadd.f32 %v3153, %v3315
        %v3400 = vadd.f32 %v3154, %v3318
        %v3401 = vadd.f32 %v3155, %v3323
        %v3402 = vadd.f32 %v3156, %v3326
        %v3403 = vadd.f32 %v3157, %v3331
        %v3404 = vadd.f32 %v3158, %v3334
        %v3405 = vadd.f32 %v3159, %v3339
        %v3406 = vadd.f32 %v3160, %v3342
        %v3407 = vadd.f32 %v3161, %v3347
        %v3408 = vadd.f32 %v3162, %v3350
        %v3409 = vadd.f32 %v3163, %v3355
        %v3410 = vadd.f32 %v3164, %v3358
        %v3411 = vadd.f32 %v3165, %v3363
        %v3412 = vadd.f32 %v3166, %v3366
        %v3413 = vadd.f32 %v3167, %v3371
        %v3414 = vadd.f32 %v3168, %v3374
        %v3415 = vadd.f32 %v3169, %v3379
        %v3416 = vadd.f32 %v3170, %v3382
        %3417 = vst [vmem:[#allocation2] sm:$0xff] %v3385
        %3418 = vst [vmem:[#allocation2 + $0x8] sm:$0xff] %v3386
        %3419 = vst [vmem:[#allocation2 + $0x10] sm:$0xff] %v3387
        %3420 = vst [vmem:[#allocation2 + $0x18] sm:$0xff] %v3388
        %3421 = vst [vmem:[#allocation2 + $0x20] sm:$0xff] %v3389
        %3422 = vst [vmem:[#allocation2 + $0x28] sm:$0xff] %v3390
        %3423 = vst [vmem:[#allocation2 + $0x30] sm:$0xff] %v3391
        %3424 = vst [vmem:[#allocation2 + $0x38] sm:$0xff] %v3392
        %3425 = vst [vmem:[#allocation2 + $0x40] sm:$0xff] %v3393
        %3426 = vst [vmem:[#allocation2 + $0x48] sm:$0xff] %v3394
        %3427 = vst [vmem:[#allocation2 + $0x50] sm:$0xff] %v3395
        %3428 = vst [vmem:[#allocation2 + $0x58] sm:$0xff] %v3396
        %3429 = vst [vmem:[#allocation2 + $0x60] sm:$0xff] %v3397
        %3430 = vst [vmem:[#allocation2 + $0x68] sm:$0xff] %v3398
        %3431 = vst [vmem:[#allocation2 + $0x70] sm:$0xff] %v3399
        %3432 = vst [vmem:[#allocation2 + $0x78] sm:$0xff] %v3400
        %3433 = vst [vmem:[#allocation2 + $0x80] sm:$0xff] %v3401
        %3434 = vst [vmem:[#allocation2 + $0x88] sm:$0xff] %v3402
        %3435 = vst [vmem:[#allocation2 + $0x90] sm:$0xff] %v3403
        %3436 = vst [vmem:[#allocation2 + $0x98] sm:$0xff] %v3404
        %3437 = vst [vmem:[#allocation2 + $0xa0] sm:$0xff] %v3405
        %3438 = vst [vmem:[#allocation2 + $0xa8] sm:$0xff] %v3406
        %3439 = vst [vmem:[#allocation2 + $0xb0] sm:$0xff] %v3407
        %3440 = vst [vmem:[#allocation2 + $0xb8] sm:$0xff] %v3408
        %3441 = vst [vmem:[#allocation2 + $0xc0] sm:$0xff] %v3409
        %3442 = vst [vmem:[#allocation2 + $0xc8] sm:$0xff] %v3410
        %3443 = vst [vmem:[#allocation2 + $0xd0] sm:$0xff] %v3411
        %3444 = vst [vmem:[#allocation2 + $0xd8] sm:$0xff] %v3412
        %3445 = vst [vmem:[#allocation2 + $0xe0] sm:$0xff] %v3413
        %3446 = vst [vmem:[#allocation2 + $0xe8] sm:$0xff] %v3414
        %3447 = vst [vmem:[#allocation2 + $0xf0] sm:$0xff] %v3415
        %3448 = vst [vmem:[#allocation2 + $0xf8] sm:$0xff] %v3416
        %v3449 = vld [vmem:[#allocation2] sm:$0xff]
        %v3450 = vld [vmem:[#allocation2 + $0x8] sm:$0xff]
        %v3451 = vld [vmem:[#allocation2 + $0x10] sm:$0xff]
        %v3452 = vld [vmem:[#allocation2 + $0x18] sm:$0xff]
        %v3453 = vld [vmem:[#allocation2 + $0x20] sm:$0xff]
        %v3454 = vld [vmem:[#allocation2 + $0x28] sm:$0xff]
        %v3455 = vld [vmem:[#allocation2 + $0x30] sm:$0xff]
        %v3456 = vld [vmem:[#allocation2 + $0x38] sm:$0xff]
        %v3457 = vld [vmem:[#allocation2 + $0x40] sm:$0xff]
        %v3458 = vld [vmem:[#allocation2 + $0x48] sm:$0xff]
        %v3459 = vld [vmem:[#allocation2 + $0x50] sm:$0xff]
        %v3460 = vld [vmem:[#allocation2 + $0x58] sm:$0xff]
        %v3461 = vld [vmem:[#allocation2 + $0x60] sm:$0xff]
        %v3462 = vld [vmem:[#allocation2 + $0x68] sm:$0xff]
        %v3463 = vld [vmem:[#allocation2 + $0x70] sm:$0xff]
        %v3464 = vld [vmem:[#allocation2 + $0x78] sm:$0xff]
        %v3465 = vld [vmem:[#allocation2 + $0x80] sm:$0xff]
        %v3466 = vld [vmem:[#allocation2 + $0x88] sm:$0xff]
        %v3467 = vld [vmem:[#allocation2 + $0x90] sm:$0xff]
        %v3468 = vld [vmem:[#allocation2 + $0x98] sm:$0xff]
        %v3469 = vld [vmem:[#allocation2 + $0xa0] sm:$0xff]
        %v3470 = vld [vmem:[#allocation2 + $0xa8] sm:$0xff]
        %v3471 = vld [vmem:[#allocation2 + $0xb0] sm:$0xff]
        %v3472 = vld [vmem:[#allocation2 + $0xb8] sm:$0xff]
        %v3473 = vld [vmem:[#allocation2 + $0xc0] sm:$0xff]
        %v3474 = vld [vmem:[#allocation2 + $0xc8] sm:$0xff]
        %v3475 = vld [vmem:[#allocation2 + $0xd0] sm:$0xff]
        %v3476 = vld [vmem:[#allocation2 + $0xd8] sm:$0xff]
        %v3477 = vld [vmem:[#allocation2 + $0xe0] sm:$0xff]
        %v3478 = vld [vmem:[#allocation2 + $0xe8] sm:$0xff]
        %v3479 = vld [vmem:[#allocation2 + $0xf0] sm:$0xff]
        %v3480 = vld [vmem:[#allocation2 + $0xf8] sm:$0xff]
        %v3481 = vld [vmem:[%s2] sm:$0x1]
        %v3483 = vlaneseq
        %v3484 = vshrl.u32 %v3483, 7
        %v3485 = vsub.s32 0, %v3484
        %v3486 = vrot.slane %v3481, %v3485
        %v3488 = vadd.f32 %v3449, %v3486
        %v3489 = vadd.f32 %v3450, %v3486
        %v3490 = vadd.f32 %v3451, %v3486
        %v3491 = vadd.f32 %v3452, %v3486
        %v3492 = vadd.f32 %v3453, %v3486
        %v3493 = vadd.f32 %v3454, %v3486
        %v3494 = vadd.f32 %v3455, %v3486
        %v3495 = vadd.f32 %v3456, %v3486
        %v3496 = vadd.f32 %v3457, %v3486
        %v3497 = vadd.f32 %v3458, %v3486
        %v3498 = vadd.f32 %v3459, %v3486
        %v3499 = vadd.f32 %v3460, %v3486
        %v3500 = vadd.f32 %v3461, %v3486
        %v3501 = vadd.f32 %v3462, %v3486
        %v3502 = vadd.f32 %v3463, %v3486
        %v3503 = vadd.f32 %v3464, %v3486
        %v3504 = vadd.f32 %v3465, %v3486
        %v3505 = vadd.f32 %v3466, %v3486
        %v3506 = vadd.f32 %v3467, %v3486
        %v3507 = vadd.f32 %v3468, %v3486
        %v3508 = vadd.f32 %v3469, %v3486
        %v3509 = vadd.f32 %v3470, %v3486
        %v3510 = vadd.f32 %v3471, %v3486
        %v3511 = vadd.f32 %v3472, %v3486
        %v3512 = vadd.f32 %v3473, %v3486
        %v3513 = vadd.f32 %v3474, %v3486
        %v3514 = vadd.f32 %v3475, %v3486
        %v3515 = vadd.f32 %v3476, %v3486
        %v3516 = vadd.f32 %v3477, %v3486
        %v3517 = vadd.f32 %v3478, %v3486
        %v3518 = vadd.f32 %v3479, %v3486
        %v3519 = vadd.f32 %v3480, %v3486
        %vm3520 = vcmp.gt.f32.partialorder %v3488, 0.0
        %vm3521 = vcmp.gt.f32.partialorder %v3489, 0.0
        %vm3522 = vcmp.gt.f32.partialorder %v3490, 0.0
        %vm3523 = vcmp.gt.f32.partialorder %v3491, 0.0
        %vm3524 = vcmp.gt.f32.partialorder %v3492, 0.0
        %vm3525 = vcmp.gt.f32.partialorder %v3493, 0.0
        %vm3526 = vcmp.gt.f32.partialorder %v3494, 0.0
        %vm3527 = vcmp.gt.f32.partialorder %v3495, 0.0
        %vm3528 = vcmp.gt.f32.partialorder %v3496, 0.0
        %vm3529 = vcmp.gt.f32.partialorder %v3497, 0.0
        %vm3530 = vcmp.gt.f32.partialorder %v3498, 0.0
        %vm3531 = vcmp.gt.f32.partialorder %v3499, 0.0
        %vm3532 = vcmp.gt.f32.partialorder %v3500, 0.0
        %vm3533 = vcmp.gt.f32.partialorder %v3501, 0.0
        %vm3534 = vcmp.gt.f32.partialorder %v3502, 0.0
        %vm3535 = vcmp.gt.f32.partialorder %v3503, 0.0
        %vm3536 = vcmp.gt.f32.partialorder %v3504, 0.0
        %vm3537 = vcmp.gt.f32.partialorder %v3505, 0.0
        %vm3538 = vcmp.gt.f32.partialorder %v3506, 0.0
        %vm3539 = vcmp.gt.f32.partialorder %v3507, 0.0
        %vm3540 = vcmp.gt.f32.partialorder %v3508, 0.0
        %vm3541 = vcmp.gt.f32.partialorder %v3509, 0.0
        %vm3542 = vcmp.gt.f32.partialorder %v3510, 0.0
        %vm3543 = vcmp.gt.f32.partialorder %v3511, 0.0
        %vm3544 = vcmp.gt.f32.partialorder %v3512, 0.0
        %vm3545 = vcmp.gt.f32.partialorder %v3513, 0.0
        %vm3546 = vcmp.gt.f32.partialorder %v3514, 0.0
        %vm3547 = vcmp.gt.f32.partialorder %v3515, 0.0
        %vm3548 = vcmp.gt.f32.partialorder %v3516, 0.0
        %vm3549 = vcmp.gt.f32.partialorder %v3517, 0.0
        %vm3550 = vcmp.gt.f32.partialorder %v3518, 0.0
        %vm3551 = vcmp.gt.f32.partialorder %v3519, 0.0
        %v3552 = vmul.f32 %v3488, 0.2
        %v3553 = vmul.f32 %v3489, 0.2
        %v3554 = vmul.f32 %v3490, 0.2
        %v3555 = vmul.f32 %v3491, 0.2
        %v3556 = vmul.f32 %v3492, 0.2
        %v3557 = vmul.f32 %v3493, 0.2
        %v3558 = vmul.f32 %v3494, 0.2
        %v3559 = vmul.f32 %v3495, 0.2
        %v3560 = vmul.f32 %v3496, 0.2
        %v3561 = vmul.f32 %v3497, 0.2
        %v3562 = vmul.f32 %v3498, 0.2
        %v3563 = vmul.f32 %v3499, 0.2
        %v3564 = vmul.f32 %v3500, 0.2
        %v3565 = vmul.f32 %v3501, 0.2
        %v3566 = vmul.f32 %v3502, 0.2
        %v3567 = vmul.f32 %v3503, 0.2
        %v3568 = vmul.f32 %v3504, 0.2
        %v3569 = vmul.f32 %v3505, 0.2
        %v3570 = vmul.f32 %v3506, 0.2
        %v3571 = vmul.f32 %v3507, 0.2
        %v3572 = vmul.f32 %v3508, 0.2
        %v3573 = vmul.f32 %v3509, 0.2
        %v3574 = vmul.f32 %v3510, 0.2
        %v3575 = vmul.f32 %v3511, 0.2
        %v3576 = vmul.f32 %v3512, 0.2
        %v3577 = vmul.f32 %v3513, 0.2
        %v3578 = vmul.f32 %v3514, 0.2
        %v3579 = vmul.f32 %v3515, 0.2
        %v3580 = vmul.f32 %v3516, 0.2
        %v3581 = vmul.f32 %v3517, 0.2
        %v3582 = vmul.f32 %v3518, 0.2
        %v3583 = vmul.f32 %v3519, 0.2
        %v3584 = vsel %vm3520, %v3488, %v3552
        %v3585 = vsel %vm3521, %v3489, %v3553
        %v3586 = vsel %vm3522, %v3490, %v3554
        %v3587 = vsel %vm3523, %v3491, %v3555
        %v3588 = vsel %vm3524, %v3492, %v3556
        %v3589 = vsel %vm3525, %v3493, %v3557
        %v3590 = vsel %vm3526, %v3494, %v3558
        %v3591 = vsel %vm3527, %v3495, %v3559
        %v3592 = vsel %vm3528, %v3496, %v3560
        %v3593 = vsel %vm3529, %v3497, %v3561
        %v3594 = vsel %vm3530, %v3498, %v3562
        %v3595 = vsel %vm3531, %v3499, %v3563
        %v3596 = vsel %vm3532, %v3500, %v3564
        %v3597 = vsel %vm3533, %v3501, %v3565
        %v3598 = vsel %vm3534, %v3502, %v3566
        %v3599 = vsel %vm3535, %v3503, %v3567
        %v3600 = vsel %vm3536, %v3504, %v3568
        %v3601 = vsel %vm3537, %v3505, %v3569
        %v3602 = vsel %vm3538, %v3506, %v3570
        %v3603 = vsel %vm3539, %v3507, %v3571
        %v3604 = vsel %vm3540, %v3508, %v3572
        %v3605 = vsel %vm3541, %v3509, %v3573
        %v3606 = vsel %vm3542, %v3510, %v3574
        %v3607 = vsel %vm3543, %v3511, %v3575
        %v3608 = vsel %vm3544, %v3512, %v3576
        %v3609 = vsel %vm3545, %v3513, %v3577
        %v3610 = vsel %vm3546, %v3514, %v3578
        %v3611 = vsel %vm3547, %v3515, %v3579
        %v3612 = vsel %vm3548, %v3516, %v3580
        %v3613 = vsel %vm3549, %v3517, %v3581
        %v3614 = vsel %vm3550, %v3518, %v3582
        %v3615 = vsel %vm3551, %v3519, %v3583
        %3616 = vst [vmem:[%s177] sm:$0xff] %v3584
        %3617 = vst [vmem:[%s177 + $0x8] sm:$0xff] %v3585
        %3618 = vst [vmem:[%s177 + $0x10] sm:$0xff] %v3586
        %3619 = vst [vmem:[%s177 + $0x18] sm:$0xff] %v3587
        %3620 = vst [vmem:[%s177 + $0x20] sm:$0xff] %v3588
        %3621 = vst [vmem:[%s177 + $0x28] sm:$0xff] %v3589
        %3622 = vst [vmem:[%s177 + $0x30] sm:$0xff] %v3590
        %3623 = vst [vmem:[%s177 + $0x38] sm:$0xff] %v3591
        %3624 = vst [vmem:[%s177 + $0x40] sm:$0xff] %v3592
        %3625 = vst [vmem:[%s177 + $0x48] sm:$0xff] %v3593
        %3626 = vst [vmem:[%s177 + $0x50] sm:$0xff] %v3594
        %3627 = vst [vmem:[%s177 + $0x58] sm:$0xff] %v3595
        %3628 = vst [vmem:[%s177 + $0x60] sm:$0xff] %v3596
        %3629 = vst [vmem:[%s177 + $0x68] sm:$0xff] %v3597
        %3630 = vst [vmem:[%s177 + $0x70] sm:$0xff] %v3598
        %3631 = vst [vmem:[%s177 + $0x78] sm:$0xff] %v3599
        %3632 = vst [vmem:[%s177 + $0x80] sm:$0xff] %v3600
        %3633 = vst [vmem:[%s177 + $0x88] sm:$0xff] %v3601
        %3634 = vst [vmem:[%s177 + $0x90] sm:$0xff] %v3602
        %3635 = vst [vmem:[%s177 + $0x98] sm:$0xff] %v3603
        %3636 = vst [vmem:[%s177 + $0xa0] sm:$0xff] %v3604
        %3637 = vst [vmem:[%s177 + $0xa8] sm:$0xff] %v3605
        %3638 = vst [vmem:[%s177 + $0xb0] sm:$0xff] %v3606
        %3639 = vst [vmem:[%s177 + $0xb8] sm:$0xff] %v3607
        %3640 = vst [vmem:[%s177 + $0xc0] sm:$0xff] %v3608
        %3641 = vst [vmem:[%s177 + $0xc8] sm:$0xff] %v3609
        %3642 = vst [vmem:[%s177 + $0xd0] sm:$0xff] %v3610
        %3643 = vst [vmem:[%s177 + $0xd8] sm:$0xff] %v3611
        %3644 = vst [vmem:[%s177 + $0xe0] sm:$0xff] %v3612
        %3645 = vst [vmem:[%s177 + $0xe8] sm:$0xff] %v3613
        %3646 = vst [vmem:[%s177 + $0xf0] sm:$0xff] %v3614
        %3647 = vst [vmem:[%s177 + $0xf8] sm:$0xff] %v3615
        %s3648 = sand.u32 %s107, 1
        %s3649 = scalar_lea.sflag [#allocation4], %s3648
        %s3650 = sand.u32 %s107, 1
        %s3651 = smul.addr %s3650, 256
        %s3652 = scalar_lea.vmem [#allocation3], %s3651
        // Predicated region
        $region33: #{tpu_custom_call.1} parent=31 // pred_check
          %p3653 = pneg %p117
        $region34: #{tpu_custom_call.1} parent=31 // pred_check_branch
          %3655 = sbr.rel (%p3653) target = $region36
        $region35: #{tpu_custom_call.1} parent=31 // pred_region
          %s3656 = smul.u32 16, %s22
          %s3658 = ssub.s32 4096, 4096
          %3659 = vsyncadd %s3649, %s3658
          %s3660 = smul.addr %s3656, 2
          %s3661 = smul.addr %s21, 32
          %s3662 = sadd.s32 %s3660, %s3661
          %s3663 = smul.addr %s3662, 128
          %s3664 = scalar_lea.hbm %s3, %s3663
          %s3665 = sshll.u32 %s3652, 4
          %s3666 = int_to_ptr.vmem [resolvable:$true] %s3665
          %3671 = dma.vmem_to_hbm [thread:$0]  %s3666, 4096, %s3664, %s3649, 128, 128, 8
        $region36: #{tpu_custom_call.1} parent=31 // pred_fallthru
          _
      $region32: #{tpu_custom_call.1} parent=5 // pred_fallthru
        _
      %p3672 = scmp.le.s32.totalorder 2, %s12
      // Predicated region
      $region37: #{tpu_custom_call.1} parent=5 // pred_check
        %p3673 = pneg %p3672
      $region38: #{tpu_custom_call.1} parent=5 // pred_check_branch
        %3675 = sbr.rel (%p3673) target = $region40
      $region39: #{tpu_custom_call.1} parent=5 // pred_region
        %s3676 = ssub.s32 %s12, 2
        // Predicated region
        $region41: #{tpu_custom_call.1} parent=39 // pred_check
          %p3677 = pneg %p123
        $region42: #{tpu_custom_call.1} parent=39 // pred_check_branch
          %3679 = sbr.rel (%p3677) target = $region44
        $region43: #{tpu_custom_call.1} parent=39 // pred_region
          %s3680 = sand.u32 %s108, 1
          %s3681 = scalar_lea.sflag [#allocation4], %s3680
          %s3682 = sand.u32 %s108, 1
          %s3683 = smul.addr %s3682, 256
          %s3684 = scalar_lea.vmem [#allocation3], %s3683
          %3685 = dma.done %s3681, 4096
        $region44: #{tpu_custom_call.1} parent=39 // pred_fallthru
          _
      $region40: #{tpu_custom_call.1} parent=5 // pred_fallthru
        _
    $region6: #{tpu_custom_call.1} parent=1 // loop_footer
      %s16 = sadd.s32 1, %s12
    $region7: #{tpu_custom_call.1} parent=1 // loop_footer_branch
      %11 = sbr.rel target = $region3
    $region8: #{tpu_custom_call.1} parent=1 // loop_exit
      _
    %3686 = vsyncpa [#allocation4], 1
    %s3687 = scalar_lea.sflag [#allocation4], 1
    %3688 = vsyncpa %s3687, 1

</llo_original>
